<compile_context>
chip_gen: v5e
topology: v5e:2x2
jax: 0.10.0
libtpu: 0.0.40
codegen_flags: <defaults>
</compile_context>

<pallas_src>
import functools

import jax
import jax.numpy as jnp
from jax.experimental import pallas as pl
from jax.experimental.pallas import tpu as pltpu


def _round_up(v, m):
    return ((v + m - 1) // m) * m


def _conv3x3_kernel(x_ref, w_ref, shift_ref, o_ref, *, stride, Ho, Wo, activation):
    """Fused 3x3 conv block: 9 shifted-window matmuls -> +shift -> activation.

    x_ref:     (S2, Hph, Wph, Cin)  bf16, S2 = stride**2 spatial phases of one image
    w_ref:     (9, Cin, tco)        bf16, BN scale folded in, tap-major
    shift_ref: (1, tco)             f32,  conv bias + BN shift folded
    o_ref:     (1, Ho*Wo, tco)      bf16 (intermediate) / f32 (final)
    """
    cin = x_ref.shape[-1]
    use_mxu = cin > 1
    acc = None
    for di in range(3):
        for dj in range(3):
            if stride == 1:
                ph, r0, c0 = 0, di, dj
            else:  # stride 2: phase (di%2, dj%2), within-phase offset (di//2, dj//2)
                ph, r0, c0 = (di % 2) * 2 + (dj % 2), di // 2, dj // 2
            t = di * 3 + dj
            xs = x_ref[ph, r0:r0 + Ho, c0:c0 + Wo, :]          # (Ho, Wo, Cin) bf16
            if use_mxu:
                p = jnp.dot(xs.reshape(Ho * Wo, cin), w_ref[t],
                            preferred_element_type=jnp.float32)  # (M, tco) f32
            else:
                # Cin == 1 (network input): VPU outer product, avoids a 1-deep
                # lane-padded MXU pass.
                p = xs.astype(jnp.float32) * w_ref[t].astype(jnp.float32)  # (Ho,Wo,tco)
            acc = p if acc is None else acc + p
    if not use_mxu:
        acc = acc.reshape(Ho * Wo, -1)
    y = acc + shift_ref[...]                                    # folded bias / BN shift
    if activation == "leaky_relu":
        y = jnp.where(y >= 0.0, y, 0.2 * y)
    else:  # sigmoid: exp on the EUP + approx reciprocal (free EUP slot), then clamp
        y = pl.reciprocal(1.0 + jnp.exp(-y), approx=True)
        y = jnp.clip(y, 0.0, 1.0)
    o_ref[0] = y.astype(o_ref.dtype)


def _conv_block(x_nhwc, w9, shift, *, stride, activation, out_dtype):
    """x_nhwc: (N,H,W,Cin) bf16; w9: (9,Cin,Coutp) bf16; shift: (1,Coutp) f32."""
    N, H, W, Cin = x_nhwc.shape
    Coutp = w9.shape[2]
    Ho = (H - 1) // stride + 1
    Wo = (W - 1) // stride + 1

    # PyTorch pad=1; for stride 2 also pad to even extent so the 4-phase
    # space-to-batch split has equal-sized phases (extra rows/cols never read).
    extra_h = (H + 2) % 2 if stride == 2 else 0
    extra_w = (W + 2) % 2 if stride == 2 else 0
    xp = jnp.pad(x_nhwc, ((0, 0), (1, 1 + extra_h), (1, 1 + extra_w), (0, 0)))

    if stride == 1:
        s2 = 1
        phases = xp                                              # (N, Hp, Wp, Cin)
    else:
        s2 = 4
        _, Hp, Wp, _ = xp.shape
        phases = jnp.stack(
            [xp[:, p::2, q::2, :] for p in range(2) for q in range(2)], axis=1
        ).reshape(N * 4, Hp // 2, Wp // 2, Cin)                  # (N*4, Hp/2, Wp/2, Cin)
    Hph, Wph = phases.shape[1], phases.shape[2]

    M = Ho * Wo
    tco = Coutp if Coutp <= 512 else 512                         # Coutp is a mult of 128
    grid = (N, Coutp // tco)

    # VMEM budget: double-buffered in/weight/shift/out blocks + headroom,
    # clamped to stay inside v7x's 64 MiB physical VMEM.
    out_bytes = jnp.dtype(out_dtype).itemsize
    blk_bytes = (s2 * Hph * Wph * Cin * 2 + 9 * Cin * tco * 2
                 + tco * 4 + M * tco * out_bytes)
    vmem_limit = int(min(max(2 * blk_bytes + (8 << 20), 32 << 20), 56 << 20))

    kernel = functools.partial(_conv3x3_kernel, stride=stride, Ho=Ho, Wo=Wo,
                               activation=activation)
    out = pl.pallas_call(
        kernel,
        out_shape=jax.ShapeDtypeStruct((N, M, Coutp), out_dtype),
        grid_spec=pltpu.PrefetchScalarGridSpec(
            num_scalar_prefetch=0,
            grid=grid,
            in_specs=[
                pl.BlockSpec((s2, Hph, Wph, Cin), lambda n, co: (n, 0, 0, 0)),
                pl.BlockSpec((9, Cin, tco), lambda n, co: (0, 0, co)),
                pl.BlockSpec((1, tco), lambda n, co: (0, co)),
            ],
            out_specs=pl.BlockSpec((1, M, tco), lambda n, co: (n, 0, co)),
        ),
        compiler_params=pltpu.CompilerParams(
            dimension_semantics=("parallel", "parallel"),
            vmem_limit_bytes=vmem_limit,
        ),
    )(phases, w9, shift)
    return out.reshape(N, Ho, Wo, Coutp)


def _fold_block_params(blk, cin_padded, eps=1e-5):
    """Fold conv bias + eval-mode BatchNorm into (w9, shift); pad channels to 128."""
    w = blk["w"].astype(jnp.float32)                             # (Cout, Cin, 3, 3)
    b = blk["b"].astype(jnp.float32)
    cout, cin = w.shape[0], w.shape[1]
    if blk["bn"] is not None:
        gamma, beta, mean, var = blk["bn"]
        inv = gamma / jnp.sqrt(var + eps)
        w = w * inv[:, None, None, None]                         # scale folded into W
        shift = (b - mean) * inv + beta
    else:
        shift = b
    coutp = _round_up(cout, 128)
    # (Cout, Cin, 3, 3) -> (3, 3, Cin, Cout) -> (9, Cin, Cout); tap-major.
    w9 = jnp.transpose(w, (2, 3, 1, 0)).reshape(9, cin, cout)
    w9 = jnp.pad(w9, ((0, 0), (0, cin_padded - cin), (0, coutp - cout)))
    shift = jnp.pad(shift, (0, coutp - cout)).reshape(1, coutp)
    return w9.astype(jnp.bfloat16), shift.astype(jnp.float32)


def init_discriminator_params(key, in_channels=1, filters=(64, 128, 256, 512)):
    """Deterministic synthetic parameters matching nn.Conv2d / nn.BatchNorm2d shapes."""

    def conv_params(k, cin, cout):
        kw, kb = jax.random.split(k)
        bound = 1.0 / float(9 * cin) ** 0.5
        w = jax.random.uniform(kw, (cout, cin, 3, 3), jnp.float32, -bound, bound)
        b = jax.random.uniform(kb, (cout,), jnp.float32, -bound, bound)
        return w, b

    def bn_params(k, c):
        k1, k2, k3, k4 = jax.random.split(k, 4)
        gamma = 1.0 + 0.1 * jax.random.normal(k1, (c,), jnp.float32)
        beta = 0.1 * jax.random.normal(k2, (c,), jnp.float32)
        mean = 0.1 * jax.random.normal(k3, (c,), jnp.float32)
        var = 1.0 + 0.1 * jax.random.uniform(k4, (c,), jnp.float32)
        return (gamma, beta, mean, var)

    blocks = []
    old = in_channels
    for idx, nf in enumerate(filters):
        key, k1, k2, k3, k4 = jax.random.split(key, 5)
        w, b = conv_params(k1, old, nf)
        blocks.append(dict(w=w, b=b, bn=bn_params(k2, nf) if idx > 0 else None,
                           stride=1, act="leaky_relu"))
        w, b = conv_params(k3, nf, nf)
        blocks.append(dict(w=w, b=b, bn=bn_params(k4, nf),
                           stride=2, act="leaky_relu"))
        old = nf
    key, kf = jax.random.split(key)
    w, b = conv_params(kf, old, 1)
    blocks.append(dict(w=w, b=b, bn=None, stride=1, act="sigmoid"))
    return dict(blocks=blocks)


def discriminator_forward(params, x_nchw):
    x = jnp.transpose(x_nchw, (0, 2, 3, 1)).astype(jnp.bfloat16)   # NCHW -> NHWC, bf16
    blocks = params["blocks"]
    for li, blk in enumerate(blocks):
        w9, shift = _fold_block_params(blk, cin_padded=x.shape[-1])
        is_last = li == len(blocks) - 1
        x = _conv_block(x, w9, shift, stride=blk["stride"], activation=blk["act"],
                        out_dtype=jnp.float32 if is_last else jnp.bfloat16)
    # Final layer's padded channels hold sigmoid(0); keep only the real channel.
    y = x[..., :1]
    return jnp.transpose(y, (0, 3, 1, 2))                          # NHWC -> NCHW


if __name__ == "__main__":
    key = jax.random.PRNGKey(0)
    kp, kx = jax.random.split(key)
    # Small, module-consistent config: in_channels=1, 4 filter stages, 16x16 input.
    params = init_discriminator_params(kp, in_channels=1, filters=(8, 16, 32, 64))
    x = jax.random.normal(kx, (2, 1, 16, 16), jnp.float32)

    y = discriminator_forward(params, x)
    jax.block_until_ready(y)

    # 16 -> (s2)x4 -> 1 spatial, 1 output channel, sigmoid-activated.
    assert y.shape == (2, 1, 1, 1), y.shape
    assert bool(jnp.all((y >= 0.0) & (y <= 1.0)))
    print("KERNEL_OK")
</pallas_src>

<mosaic_0001>
module attributes {stable_mosaic.version = 11 : i64} {
  func.func @_conv3x3_kernel(%arg0: i32, %arg1: i32, %arg2: memref<1x18x18x1xbf16, #tpu.memory_space<vmem>>, %arg3: memref<9x1x128xbf16, #tpu.memory_space<vmem>>, %arg4: memref<1x128xf32, #tpu.memory_space<vmem>>, %arg5: memref<1x256x128xbf16, #tpu.memory_space<vmem>>) attributes {dimension_semantics = [#tpu.dimension_semantics<parallel>, #tpu.dimension_semantics<parallel>], iteration_bounds = array<i64: 2, 1>, scalar_prefetch = 0 : i64, scratch_operands = 0 : i64, tpu.core_type = #tpu.core_type<tc>, window_params = [{transform_indices = @transform_0, window_bounds = array<i64: 1, 18, 18, 1>}, {transform_indices = @transform_1, window_bounds = array<i64: 9, 1, 128>}, {transform_indices = @transform_2, window_bounds = array<i64: 1, 128>}, {transform_indices = @transform_3, window_bounds = array<i64: 1, 256, 128>}]} {
    %c0 = arith.constant 0 : index
    %c0_0 = arith.constant 0 : index
    %c0_1 = arith.constant 0 : index
    %c0_2 = arith.constant 0 : index
    %0 = vector.load %arg2[%c0, %c0_0, %c0_1, %c0_2] : memref<1x18x18x1xbf16, #tpu.memory_space<vmem>>, vector<1x16x16x1xbf16>
    %1 = vector.shape_cast %0 : vector<1x16x16x1xbf16> to vector<16x16x1xbf16>
    %2 = arith.extf %1 : vector<16x16x1xbf16> to vector<16x16x1xf32>
    %c0_3 = arith.constant 0 : index
    %c0_4 = arith.constant 0 : index
    %c0_5 = arith.constant 0 : index
    %3 = vector.load %arg3[%c0_3, %c0_4, %c0_5] : memref<9x1x128xbf16, #tpu.memory_space<vmem>>, vector<1x1x128xbf16>
    %4 = vector.shape_cast %3 : vector<1x1x128xbf16> to vector<1x128xbf16>
    %5 = arith.extf %4 : vector<1x128xbf16> to vector<1x128xf32>
    %6 = vector.shape_cast %5 : vector<1x128xf32> to vector<1x1x128xf32>
    %7 = vector.broadcast %2 : vector<16x16x1xf32> to vector<16x16x128xf32>
    %8 = vector.broadcast %6 : vector<1x1x128xf32> to vector<16x16x128xf32>
    %9 = arith.mulf %7, %8 : vector<16x16x128xf32>
    %c0_6 = arith.constant 0 : index
    %c0_7 = arith.constant 0 : index
    %c1 = arith.constant 1 : index
    %c0_8 = arith.constant 0 : index
    %10 = vector.load %arg2[%c0_6, %c0_7, %c1, %c0_8] : memref<1x18x18x1xbf16, #tpu.memory_space<vmem>>, vector<1x16x16x1xbf16>
    %11 = vector.shape_cast %10 : vector<1x16x16x1xbf16> to vector<16x16x1xbf16>
    %12 = arith.extf %11 : vector<16x16x1xbf16> to vector<16x16x1xf32>
    %c1_9 = arith.constant 1 : index
    %c0_10 = arith.constant 0 : index
    %c0_11 = arith.constant 0 : index
    %13 = vector.load %arg3[%c1_9, %c0_10, %c0_11] : memref<9x1x128xbf16, #tpu.memory_space<vmem>>, vector<1x1x128xbf16>
    %14 = vector.shape_cast %13 : vector<1x1x128xbf16> to vector<1x128xbf16>
    %15 = arith.extf %14 : vector<1x128xbf16> to vector<1x128xf32>
    %16 = vector.shape_cast %15 : vector<1x128xf32> to vector<1x1x128xf32>
    %17 = vector.broadcast %12 : vector<16x16x1xf32> to vector<16x16x128xf32>
    %18 = vector.broadcast %16 : vector<1x1x128xf32> to vector<16x16x128xf32>
    %19 = arith.mulf %17, %18 : vector<16x16x128xf32>
    %20 = arith.addf %9, %19 : vector<16x16x128xf32>
    %c0_12 = arith.constant 0 : index
    %c0_13 = arith.constant 0 : index
    %c2 = arith.constant 2 : index
    %c0_14 = arith.constant 0 : index
    %21 = vector.load %arg2[%c0_12, %c0_13, %c2, %c0_14] : memref<1x18x18x1xbf16, #tpu.memory_space<vmem>>, vector<1x16x16x1xbf16>
    %22 = vector.shape_cast %21 : vector<1x16x16x1xbf16> to vector<16x16x1xbf16>
    %23 = arith.extf %22 : vector<16x16x1xbf16> to vector<16x16x1xf32>
    %c2_15 = arith.constant 2 : index
    %c0_16 = arith.constant 0 : index
    %c0_17 = arith.constant 0 : index
    %24 = vector.load %arg3[%c2_15, %c0_16, %c0_17] : memref<9x1x128xbf16, #tpu.memory_space<vmem>>, vector<1x1x128xbf16>
    %25 = vector.shape_cast %24 : vector<1x1x128xbf16> to vector<1x128xbf16>
    %26 = arith.extf %25 : vector<1x128xbf16> to vector<1x128xf32>
    %27 = vector.shape_cast %26 : vector<1x128xf32> to vector<1x1x128xf32>
    %28 = vector.broadcast %23 : vector<16x16x1xf32> to vector<16x16x128xf32>
    %29 = vector.broadcast %27 : vector<1x1x128xf32> to vector<16x16x128xf32>
    %30 = arith.mulf %28, %29 : vector<16x16x128xf32>
    %31 = arith.addf %20, %30 : vector<16x16x128xf32>
    %c0_18 = arith.constant 0 : index
    %c1_19 = arith.constant 1 : index
    %c0_20 = arith.constant 0 : index
    %c0_21 = arith.constant 0 : index
    %32 = vector.load %arg2[%c0_18, %c1_19, %c0_20, %c0_21] : memref<1x18x18x1xbf16, #tpu.memory_space<vmem>>, vector<1x16x16x1xbf16>
    %33 = vector.shape_cast %32 : vector<1x16x16x1xbf16> to vector<16x16x1xbf16>
    %34 = arith.extf %33 : vector<16x16x1xbf16> to vector<16x16x1xf32>
    %c3 = arith.constant 3 : index
    %c0_22 = arith.constant 0 : index
    %c0_23 = arith.constant 0 : index
    %35 = vector.load %arg3[%c3, %c0_22, %c0_23] : memref<9x1x128xbf16, #tpu.memory_space<vmem>>, vector<1x1x128xbf16>
    %36 = vector.shape_cast %35 : vector<1x1x128xbf16> to vector<1x128xbf16>
    %37 = arith.extf %36 : vector<1x128xbf16> to vector<1x128xf32>
    %38 = vector.shape_cast %37 : vector<1x128xf32> to vector<1x1x128xf32>
    %39 = vector.broadcast %34 : vector<16x16x1xf32> to vector<16x16x128xf32>
    %40 = vector.broadcast %38 : vector<1x1x128xf32> to vector<16x16x128xf32>
    %41 = arith.mulf %39, %40 : vector<16x16x128xf32>
    %42 = arith.addf %31, %41 : vector<16x16x128xf32>
    %c0_24 = arith.constant 0 : index
    %c1_25 = arith.constant 1 : index
    %c1_26 = arith.constant 1 : index
    %c0_27 = arith.constant 0 : index
    %43 = vector.load %arg2[%c0_24, %c1_25, %c1_26, %c0_27] : memref<1x18x18x1xbf16, #tpu.memory_space<vmem>>, vector<1x16x16x1xbf16>
    %44 = vector.shape_cast %43 : vector<1x16x16x1xbf16> to vector<16x16x1xbf16>
    %45 = arith.extf %44 : vector<16x16x1xbf16> to vector<16x16x1xf32>
    %c4 = arith.constant 4 : index
    %c0_28 = arith.constant 0 : index
    %c0_29 = arith.constant 0 : index
    %46 = vector.load %arg3[%c4, %c0_28, %c0_29] : memref<9x1x128xbf16, #tpu.memory_space<vmem>>, vector<1x1x128xbf16>
    %47 = vector.shape_cast %46 : vector<1x1x128xbf16> to vector<1x128xbf16>
    %48 = arith.extf %47 : vector<1x128xbf16> to vector<1x128xf32>
    %49 = vector.shape_cast %48 : vector<1x128xf32> to vector<1x1x128xf32>
    %50 = vector.broadcast %45 : vector<16x16x1xf32> to vector<16x16x128xf32>
    %51 = vector.broadcast %49 : vector<1x1x128xf32> to vector<16x16x128xf32>
    %52 = arith.mulf %50, %51 : vector<16x16x128xf32>
    %53 = arith.addf %42, %52 : vector<16x16x128xf32>
    %c0_30 = arith.constant 0 : index
    %c1_31 = arith.constant 1 : index
    %c2_32 = arith.constant 2 : index
    %c0_33 = arith.constant 0 : index
    %54 = vector.load %arg2[%c0_30, %c1_31, %c2_32, %c0_33] : memref<1x18x18x1xbf16, #tpu.memory_space<vmem>>, vector<1x16x16x1xbf16>
    %55 = vector.shape_cast %54 : vector<1x16x16x1xbf16> to vector<16x16x1xbf16>
    %56 = arith.extf %55 : vector<16x16x1xbf16> to vector<16x16x1xf32>
    %c5 = arith.constant 5 : index
    %c0_34 = arith.constant 0 : index
    %c0_35 = arith.constant 0 : index
    %57 = vector.load %arg3[%c5, %c0_34, %c0_35] : memref<9x1x128xbf16, #tpu.memory_space<vmem>>, vector<1x1x128xbf16>
    %58 = vector.shape_cast %57 : vector<1x1x128xbf16> to vector<1x128xbf16>
    %59 = arith.extf %58 : vector<1x128xbf16> to vector<1x128xf32>
    %60 = vector.shape_cast %59 : vector<1x128xf32> to vector<1x1x128xf32>
    %61 = vector.broadcast %56 : vector<16x16x1xf32> to vector<16x16x128xf32>
    %62 = vector.broadcast %60 : vector<1x1x128xf32> to vector<16x16x128xf32>
    %63 = arith.mulf %61, %62 : vector<16x16x128xf32>
    %64 = arith.addf %53, %63 : vector<16x16x128xf32>
    %c0_36 = arith.constant 0 : index
    %c2_37 = arith.constant 2 : index
    %c0_38 = arith.constant 0 : index
    %c0_39 = arith.constant 0 : index
    %65 = vector.load %arg2[%c0_36, %c2_37, %c0_38, %c0_39] : memref<1x18x18x1xbf16, #tpu.memory_space<vmem>>, vector<1x16x16x1xbf16>
    %66 = vector.shape_cast %65 : vector<1x16x16x1xbf16> to vector<16x16x1xbf16>
    %67 = arith.extf %66 : vector<16x16x1xbf16> to vector<16x16x1xf32>
    %c6 = arith.constant 6 : index
    %c0_40 = arith.constant 0 : index
    %c0_41 = arith.constant 0 : index
    %68 = vector.load %arg3[%c6, %c0_40, %c0_41] : memref<9x1x128xbf16, #tpu.memory_space<vmem>>, vector<1x1x128xbf16>
    %69 = vector.shape_cast %68 : vector<1x1x128xbf16> to vector<1x128xbf16>
    %70 = arith.extf %69 : vector<1x128xbf16> to vector<1x128xf32>
    %71 = vector.shape_cast %70 : vector<1x128xf32> to vector<1x1x128xf32>
    %72 = vector.broadcast %67 : vector<16x16x1xf32> to vector<16x16x128xf32>
    %73 = vector.broadcast %71 : vector<1x1x128xf32> to vector<16x16x128xf32>
    %74 = arith.mulf %72, %73 : vector<16x16x128xf32>
    %75 = arith.addf %64, %74 : vector<16x16x128xf32>
    %c0_42 = arith.constant 0 : index
    %c2_43 = arith.constant 2 : index
    %c1_44 = arith.constant 1 : index
    %c0_45 = arith.constant 0 : index
    %76 = vector.load %arg2[%c0_42, %c2_43, %c1_44, %c0_45] : memref<1x18x18x1xbf16, #tpu.memory_space<vmem>>, vector<1x16x16x1xbf16>
    %77 = vector.shape_cast %76 : vector<1x16x16x1xbf16> to vector<16x16x1xbf16>
    %78 = arith.extf %77 : vector<16x16x1xbf16> to vector<16x16x1xf32>
    %c7 = arith.constant 7 : index
    %c0_46 = arith.constant 0 : index
    %c0_47 = arith.constant 0 : index
    %79 = vector.load %arg3[%c7, %c0_46, %c0_47] : memref<9x1x128xbf16, #tpu.memory_space<vmem>>, vector<1x1x128xbf16>
    %80 = vector.shape_cast %79 : vector<1x1x128xbf16> to vector<1x128xbf16>
    %81 = arith.extf %80 : vector<1x128xbf16> to vector<1x128xf32>
    %82 = vector.shape_cast %81 : vector<1x128xf32> to vector<1x1x128xf32>
    %83 = vector.broadcast %78 : vector<16x16x1xf32> to vector<16x16x128xf32>
    %84 = vector.broadcast %82 : vector<1x1x128xf32> to vector<16x16x128xf32>
    %85 = arith.mulf %83, %84 : vector<16x16x128xf32>
    %86 = arith.addf %75, %85 : vector<16x16x128xf32>
    %c0_48 = arith.constant 0 : index
    %c2_49 = arith.constant 2 : index
    %c2_50 = arith.constant 2 : index
    %c0_51 = arith.constant 0 : index
    %87 = vector.load %arg2[%c0_48, %c2_49, %c2_50, %c0_51] : memref<1x18x18x1xbf16, #tpu.memory_space<vmem>>, vector<1x16x16x1xbf16>
    %88 = vector.shape_cast %87 : vector<1x16x16x1xbf16> to vector<16x16x1xbf16>
    %89 = arith.extf %88 : vector<16x16x1xbf16> to vector<16x16x1xf32>
    %c8 = arith.constant 8 : index
    %c0_52 = arith.constant 0 : index
    %c0_53 = arith.constant 0 : index
    %90 = vector.load %arg3[%c8, %c0_52, %c0_53] : memref<9x1x128xbf16, #tpu.memory_space<vmem>>, vector<1x1x128xbf16>
    %91 = vector.shape_cast %90 : vector<1x1x128xbf16> to vector<1x128xbf16>
    %92 = arith.extf %91 : vector<1x128xbf16> to vector<1x128xf32>
    %93 = vector.shape_cast %92 : vector<1x128xf32> to vector<1x1x128xf32>
    %94 = vector.broadcast %89 : vector<16x16x1xf32> to vector<16x16x128xf32>
    %95 = vector.broadcast %93 : vector<1x1x128xf32> to vector<16x16x128xf32>
    %96 = arith.mulf %94, %95 : vector<16x16x128xf32>
    %97 = arith.addf %86, %96 : vector<16x16x128xf32>
    %98 = vector.shape_cast %97 : vector<16x16x128xf32> to vector<256x128xf32>
    %c0_54 = arith.constant 0 : index
    %c0_55 = arith.constant 0 : index
    %99 = vector.load %arg4[%c0_54, %c0_55] : memref<1x128xf32, #tpu.memory_space<vmem>>, vector<1x128xf32>
    %100 = vector.broadcast %99 : vector<1x128xf32> to vector<256x128xf32>
    %101 = arith.addf %98, %100 : vector<256x128xf32>
    %cst = arith.constant 0.000000e+00 : f32
    %102 = vector.broadcast %cst : f32 to vector<256x128xf32>
    %103 = arith.cmpf oge, %101, %102 : vector<256x128xf32>
    %cst_56 = arith.constant 2.000000e-01 : f32
    %104 = vector.broadcast %cst_56 : f32 to vector<256x128xf32>
    %105 = arith.mulf %104, %101 : vector<256x128xf32>
    %106 = arith.select %103, %101, %105 : vector<256x128xi1>, vector<256x128xf32>
    %107 = arith.truncf %106 : vector<256x128xf32> to vector<256x128xbf16>
    %c0_57 = arith.constant 0 : index
    %c0_58 = arith.constant 0 : index
    %c0_59 = arith.constant 0 : index
    %108 = vector.load %arg5[%c0_57, %c0_58, %c0_59] : memref<1x256x128xbf16, #tpu.memory_space<vmem>>, vector<1x256x128xbf16>
    %109 = vector.shape_cast %108 : vector<1x256x128xbf16> to vector<256x128xbf16>
    %110 = vector.shape_cast %107 : vector<256x128xbf16> to vector<1x256x128xbf16>
    tpu.vector_store %arg5[%c0_57, %c0_58, %c0_59], %110 {strides = array<i32>} : memref<1x256x128xbf16, #tpu.memory_space<vmem>>, vector<1x256x128xbf16>,
    return
  }
  func.func @transform_0(%arg0: i32, %arg1: i32) -> (i32, i32, i32, i32) {
    %c0_i32 = arith.constant 0 : i32
    %c0_i32_0 = arith.constant 0 : i32
    %c0_i32_1 = arith.constant 0 : i32
    %c0_i32_2 = arith.constant 0 : i32
    return %arg0, %c0_i32, %c0_i32_0, %c0_i32_1 : i32, i32, i32, i32
  }
  func.func @transform_1(%arg0: i32, %arg1: i32) -> (i32, i32, i32) {
    %c0_i32 = arith.constant 0 : i32
    %c0_i32_0 = arith.constant 0 : i32
    %c0_i32_1 = arith.constant 0 : i32
    return %c0_i32, %c0_i32_0, %arg1 : i32, i32, i32
  }
  func.func @transform_2(%arg0: i32, %arg1: i32) -> (i32, i32) {
    %c0_i32 = arith.constant 0 : i32
    %c0_i32_0 = arith.constant 0 : i32
    return %c0_i32, %arg1 : i32, i32
  }
  func.func @transform_3(%arg0: i32, %arg1: i32) -> (i32, i32, i32) {
    %c0_i32 = arith.constant 0 : i32
    %c0_i32_0 = arith.constant 0 : i32
    return %arg0, %c0_i32, %arg1 : i32, i32, i32
  }
}

</mosaic_0001>

<llo_original>
// kernel: tpu_custom_call.1
$region0: #{tpu_custom_call.1}
  #allocation0 [shape = 'u32[]', space=smem, size = 0x4, offset = 0x4, fixed_abs, tag = 'smem constant byte address 0x4 - core index']
  #allocation1 [shape = 'u32[72,128]{1,0:T(1,128)}', space=vmem, size = 0x9000, scoped, tag = 'internal scratch']
  %s0 = inlined_call_operand.vmem [shape: bf16[2,18,18,1], index: 0, kind: input, shape index: {}]
  %s1 = inlined_call_operand.vmem [shape: bf16[9,1,128], index: 1, kind: input, shape index: {}]
  %s2 = inlined_call_operand.vmem [shape: f32[1,128], index: 2, kind: input, shape index: {}]
  %s3 = inlined_call_operand.hbm [shape: bf16[2,256,128], index: 3, kind: output, shape index: {}]
  %s4 = sld [smem:[#allocation0]]
  $region45: #{tpu_custom_call.1} parent=0
    _
  %s6 = ssub.s32 1, %s4
  %s7 = scalar_select 0, %s6, %s4
  $region1: #{tpu_custom_call.1} parent=0
    #allocation2 [shape = 'u8[131072]{0}', space=vmem, size = 0x20000, scoped, tag = 'output window, operand 0']
    #allocation3 [shape = 's32[2]{0}', space=sflag, size = 0x8, scoped, tag = 'scoped memory for tpu_custom_call.1']
    %8 = vsyncpa [#allocation3], 0
    %s9 = scalar_lea.sflag [#allocation3], 1
    %10 = vsyncpa %s9, 0
    loop: start=0, step=1, limit=4
    $region2: #{tpu_custom_call.1} parent=1 // loop_pre_header
      _
    $region3: #{tpu_custom_call.1} parent=1 // loop_header
      %s12 = sphi 0, %s16
      %p13 = scmp.ge.s32.totalorder %s12, 4
      %s19 = sphi 0, %s31
      %s20 = sphi 0, %s27
      %s21 = sphi 0, %s19
      %s22 = sphi 0, %s20
      %s23 = sphi 0, %s21
      %s24 = sphi 0, %s22
      %s34 = sphi 0, %s36
      %s37 = sphi 0, %s34
      %s38 = sphi 0, %s37
      %s54 = sphi 0, %s38
      %s60 = sphi 0, %s62
      %s63 = sphi 0, %s60
      %s64 = sphi 0, %s63
      %s80 = sphi 0, %s64
      %s86 = sphi 0, %s88
      %s89 = sphi 0, %s86
      %s90 = sphi 0, %s89
      %s106 = sphi 0, %s90
      %s114 = sphi 0, %s116
      %s117 = sphi 0, %s114
      %s118 = sphi 0, %s117
      %s134 = sphi 0, %s118
    $region4: #{tpu_custom_call.1} parent=1 // loop_header_branch
      %15 = sbr.rel (%p13) target = $region8
    $region5: #{tpu_custom_call.1} parent=1 // loop_body
      %s17 = ssub.s32 %s12, 1
      %s18 = ssub.s32 %s12, 2
      %s25 = sadd.s32 1, %s20
      %p26 = scmp.ge.s32.totalorder %s25, 1
      %s27 = scalar_select %p26, 0, %s25
      %s28 = sadd.s32 1, %s19
      %s29 = scalar_select %p26, %s28, %s19
      %p30 = scmp.ge.s32.totalorder %s29, 2
      %s31 = scalar_select %p30, 0, %s29
      %s32 = ssub.s32 %s19, %s31
      %p33 = scmp.eq.s32.totalorder %s32, 0
      %s35 = sadd.s32 %s34, 1
      %s36 = scalar_select %p33, %s34, %s35
      %p39 = pneg %p33
      %p40 = scmp.eq.s32.totalorder %s12, 1
      %p41 = por %p39, %p40
      %p42 = scmp.ne.s32.totalorder %s34, %s37
      %p43 = scmp.eq.s32.totalorder %s12, 0
      %p44 = por %p42, %p43
      %p45 = scmp.ne.s32.totalorder %s34, %s37
      %p46 = scmp.eq.s32.totalorder %s17, 1
      %p47 = por %p45, %p46
      %p48 = scmp.ne.s32.totalorder %s37, %s38
      %p49 = scmp.eq.s32.totalorder %s17, 0
      %p50 = por %p48, %p49
      %p51 = scmp.ne.s32.totalorder %s37, %s38
      %p52 = scmp.eq.s32.totalorder %s18, 1
      %p53 = por %p51, %p52
      %p55 = scmp.ne.s32.totalorder %s38, %s54
      %p56 = scmp.eq.s32.totalorder %s18, 0
      %p57 = por %p55, %p56
      %s58 = ssub.s32 %s20, %s27
      %p59 = scmp.eq.s32.totalorder %s58, 0
      %s61 = sadd.s32 %s60, 1
      %s62 = scalar_select %p59, %s60, %s61
      %p65 = pneg %p59
      %p66 = scmp.eq.s32.totalorder %s12, 1
      %p67 = por %p65, %p66
      %p68 = scmp.ne.s32.totalorder %s60, %s63
      %p69 = scmp.eq.s32.totalorder %s12, 0
      %p70 = por %p68, %p69
      %p71 = scmp.ne.s32.totalorder %s60, %s63
      %p72 = scmp.eq.s32.totalorder %s17, 1
      %p73 = por %p71, %p72
      %p74 = scmp.ne.s32.totalorder %s63, %s64
      %p75 = scmp.eq.s32.totalorder %s17, 0
      %p76 = por %p74, %p75
      %p77 = scmp.ne.s32.totalorder %s63, %s64
      %p78 = scmp.eq.s32.totalorder %s18, 1
      %p79 = por %p77, %p78
      %p81 = scmp.ne.s32.totalorder %s64, %s80
      %p82 = scmp.eq.s32.totalorder %s18, 0
      %p83 = por %p81, %p82
      %s84 = ssub.s32 %s20, %s27
      %p85 = scmp.eq.s32.totalorder %s84, 0
      %s87 = sadd.s32 %s86, 1
      %s88 = scalar_select %p85, %s86, %s87
      %p91 = pneg %p85
      %p92 = scmp.eq.s32.totalorder %s12, 1
      %p93 = por %p91, %p92
      %p94 = scmp.ne.s32.totalorder %s86, %s89
      %p95 = scmp.eq.s32.totalorder %s12, 0
      %p96 = por %p94, %p95
      %p97 = scmp.ne.s32.totalorder %s86, %s89
      %p98 = scmp.eq.s32.totalorder %s17, 1
      %p99 = por %p97, %p98
      %p100 = scmp.ne.s32.totalorder %s89, %s90
      %p101 = scmp.eq.s32.totalorder %s17, 0
      %p102 = por %p100, %p101
      %p103 = scmp.ne.s32.totalorder %s89, %s90
      %p104 = scmp.eq.s32.totalorder %s18, 1
      %p105 = por %p103, %p104
      %p107 = scmp.ne.s32.totalorder %s90, %s106
      %p108 = scmp.eq.s32.totalorder %s18, 0
      %p109 = por %p107, %p108
      %s110 = ssub.s32 %s19, %s31
      %s111 = ssub.s32 %s20, %s27
      %s112 = sor.u32 %s110, %s111
      %p113 = scmp.eq.s32.totalorder %s112, 0
      %s115 = sadd.s32 %s114, 1
      %s116 = scalar_select %p113, %s114, %s115
      %p119 = pneg %p113
      %p120 = scmp.eq.s32.totalorder %s12, 1
      %p121 = por %p119, %p120
      %p122 = scmp.ne.s32.totalorder %s114, %s117
      %p123 = scmp.eq.s32.totalorder %s12, 0
      %p124 = por %p122, %p123
      %p125 = scmp.ne.s32.totalorder %s114, %s117
      %p126 = scmp.eq.s32.totalorder %s17, 1
      %p127 = por %p125, %p126
      %p128 = scmp.ne.s32.totalorder %s117, %s118
      %p129 = scmp.eq.s32.totalorder %s17, 0
      %p130 = por %p128, %p129
      %p131 = scmp.ne.s32.totalorder %s117, %s118
      %p132 = scmp.eq.s32.totalorder %s18, 1
      %p133 = por %p131, %p132
      %p135 = scmp.ne.s32.totalorder %s118, %s134
      %p136 = scmp.eq.s32.totalorder %s18, 0
      %p137 = por %p135, %p136
      %p138 = scmp.le.s32.totalorder 1, %s12
      %p139 = scmp.lt.s32.totalorder %s12, 3
      %p140 = pnand %p138, %p139
      %p141 = pneg %p140
      // Predicated region
      $region9: #{tpu_custom_call.1} parent=5 // pred_check
        _
      $region10: #{tpu_custom_call.1} parent=5 // pred_check_branch
        %143 = sbr.rel (%p140) target = $region12
      $region11: #{tpu_custom_call.1} parent=5 // pred_region
        %s144 = ssub.s32 %s12, 1
        // Predicated region
        $region13: #{tpu_custom_call.1} parent=11 // pred_check
          %p145 = pneg %p76
        $region14: #{tpu_custom_call.1} parent=11 // pred_check_branch
          %147 = sbr.rel (%p145) target = $region16
        $region15: #{tpu_custom_call.1} parent=11 // pred_region
          %p148 = scmp.lt.s32.totalorder %s22, 0
          %s149 = scalar_select %p148, %s22, 0
          %s150 = scalar_lea.vmem %s1, %s149
        $region16: #{tpu_custom_call.1} parent=11 // pred_fallthru
          _
        // Predicated region
        $region17: #{tpu_custom_call.1} parent=11 // pred_check
          %p151 = pneg %p102
        $region18: #{tpu_custom_call.1} parent=11 // pred_check_branch
          %153 = sbr.rel (%p151) target = $region20
        $region19: #{tpu_custom_call.1} parent=11 // pred_region
          %p154 = scmp.lt.s32.totalorder %s22, 0
          %s155 = scalar_select %p154, %s22, 0
          %s156 = scalar_lea.vmem %s2, %s155
        $region20: #{tpu_custom_call.1} parent=11 // pred_fallthru
          _
      $region12: #{tpu_custom_call.1} parent=5 // pred_fallthru
        _
      %p157 = scmp.lt.s32.totalorder %s12, 2
      // Predicated region
      $region21: #{tpu_custom_call.1} parent=5 // pred_check
        %p158 = pneg %p157
      $region22: #{tpu_custom_call.1} parent=5 // pred_check_branch
        %160 = sbr.rel (%p158) target = $region24
      $region23: #{tpu_custom_call.1} parent=5 // pred_region
        // Predicated region
        $region25: #{tpu_custom_call.1} parent=23 // pred_check
          %p161 = pneg %p44
        $region26: #{tpu_custom_call.1} parent=23 // pred_check_branch
          %163 = sbr.rel (%p161) target = $region28
        $region27: #{tpu_custom_call.1} parent=23 // pred_region
          %p164 = scmp.lt.s32.totalorder %s19, 1
          %s165 = scalar_select %p164, %s19, 1
          %s166 = smul.addr %s165, 54
          %s167 = smul.addr %s166, 4
          %s168 = scalar_lea.vmem %s0, %s167
        $region28: #{tpu_custom_call.1} parent=23 // pred_fallthru
          _
      $region24: #{tpu_custom_call.1} parent=5 // pred_fallthru
        _
      %p169 = scmp.le.s32.totalorder 1, %s12
      %p170 = scmp.lt.s32.totalorder %s12, 3
      %p171 = pnand %p169, %p170
      %p172 = pneg %p171
      // Predicated region
      $region29: #{tpu_custom_call.1} parent=5 // pred_check
        _
      $region30: #{tpu_custom_call.1} parent=5 // pred_check_branch
        %174 = sbr.rel (%p171) target = $region32
      $region31: #{tpu_custom_call.1} parent=5 // pred_region
        %s175 = ssub.s32 %s12, 1
        %p176 = scmp.lt.s32.totalorder %s21, 1
        %s177 = scalar_select %p176, %s21, 1
        %s178 = smul.addr %s177, 54
        %s179 = smul.addr %s178, 4
        %s180 = scalar_lea.vmem %s0, %s179
        %p181 = pneg %p50
        %p182 = pneg %p47
        %p183 = scmp.lt.s32.totalorder %s22, 0
        %s184 = scalar_select %p183, %s22, 0
        %s185 = scalar_lea.vmem %s1, %s184
        %p186 = pneg %p76
        %p187 = pneg %p73
        %p188 = scmp.lt.s32.totalorder %s22, 0
        %s189 = scalar_select %p188, %s22, 0
        %s190 = scalar_lea.vmem %s2, %s189
        %p191 = pneg %p102
        %p192 = pneg %p99
        %p193 = pneg %p130
        %p194 = pneg %p127
        %s195 = sand.u32 %s117, 1
        %s196 = scalar_lea.sflag [#allocation3], %s195
        %s197 = sand.u32 %s117, 1
        %s198 = smul.addr %s197, 128
        %s199 = scalar_lea.vmem [#allocation2], %s198
        %p200 = scmp.lt.s32.totalorder %s21, 1
        %s201 = scalar_select %p200, %s21, 1
        %s202 = smul.addr %s201, 54
        %s203 = smul.addr %s202, 4
        %s204 = scalar_lea.vmem %s0, %s203
        %p205 = scmp.lt.s32.totalorder %s22, 0
        %s206 = scalar_select %p205, %s22, 0
        %s207 = scalar_lea.vmem %s1, %s206
        %p208 = scmp.lt.s32.totalorder %s22, 0
        %s209 = scalar_select %p208, %s22, 0
        %s210 = scalar_lea.vmem %s2, %s209
        %v211 = vld [vmem:[%s204] sm:$0xf]
        %v212 = vld [vmem:[%s204 + $0x4] sm:$0xf]
        %v213 = vld [vmem:[%s204 + $0xc] sm:$0xf]
        %v214 = vld [vmem:[%s204 + $0x10] sm:$0xf]
        %v215 = vld [vmem:[%s204 + $0x18] sm:$0xf]
        %v216 = vld [vmem:[%s204 + $0x1c] sm:$0xf]
        %v217 = vld [vmem:[%s204 + $0x24] sm:$0xf]
        %v218 = vld [vmem:[%s204 + $0x28] sm:$0xf]
        %v219 = vld [vmem:[%s204 + $0x30] sm:$0xf]
        %v220 = vld [vmem:[%s204 + $0x34] sm:$0xf]
        %v221 = vld [vmem:[%s204 + $0x3c] sm:$0xf]
        %v222 = vld [vmem:[%s204 + $0x40] sm:$0xf]
        %v223 = vld [vmem:[%s204 + $0x48] sm:$0xf]
        %v224 = vld [vmem:[%s204 + $0x4c] sm:$0xf]
        %v225 = vld [vmem:[%s204 + $0x54] sm:$0xf]
        %v226 = vld [vmem:[%s204 + $0x58] sm:$0xf]
        %v227 = vld [vmem:[%s204 + $0x60] sm:$0xf]
        %v228 = vld [vmem:[%s204 + $0x64] sm:$0xf]
        %v229 = vld [vmem:[%s204 + $0x6c] sm:$0xf]
        %v230 = vld [vmem:[%s204 + $0x70] sm:$0xf]
        %v231 = vld [vmem:[%s204 + $0x78] sm:$0xf]
        %v232 = vld [vmem:[%s204 + $0x7c] sm:$0xf]
        %v233 = vld [vmem:[%s204 + $0x84] sm:$0xf]
        %v234 = vld [vmem:[%s204 + $0x88] sm:$0xf]
        %v235 = vld [vmem:[%s204 + $0x90] sm:$0xf]
        %v236 = vld [vmem:[%s204 + $0x94] sm:$0xf]
        %v237 = vld [vmem:[%s204 + $0x9c] sm:$0xf]
        %v238 = vld [vmem:[%s204 + $0xa0] sm:$0xf]
        %v239 = vld [vmem:[%s204 + $0xa8] sm:$0xf]
        %v240 = vld [vmem:[%s204 + $0xac] sm:$0xf]
        %v241 = vld [vmem:[%s204 + $0xb4] sm:$0xf]
        %v242 = vld [vmem:[%s204 + $0xb8] sm:$0xf]
        %v243 = vunpack.c.l.bf16 %v211
        %v244 = vunpack.c.l.bf16 %v212
        %v245 = vunpack.c.l.bf16 %v213
        %v246 = vunpack.c.l.bf16 %v214
        %v247 = vunpack.c.l.bf16 %v215
        %v248 = vunpack.c.l.bf16 %v216
        %v249 = vunpack.c.l.bf16 %v217
        %v250 = vunpack.c.l.bf16 %v218
        %v251 = vunpack.c.l.bf16 %v219
        %v252 = vunpack.c.l.bf16 %v220
        %v253 = vunpack.c.l.bf16 %v221
        %v254 = vunpack.c.l.bf16 %v222
        %v255 = vunpack.c.l.bf16 %v223
        %v256 = vunpack.c.l.bf16 %v224
        %v257 = vunpack.c.l.bf16 %v225
        %v258 = vunpack.c.l.bf16 %v226
        %v259 = vunpack.c.l.bf16 %v227
        %v260 = vunpack.c.l.bf16 %v228
        %v261 = vunpack.c.l.bf16 %v229
        %v262 = vunpack.c.l.bf16 %v230
        %v263 = vunpack.c.l.bf16 %v231
        %v264 = vunpack.c.l.bf16 %v232
        %v265 = vunpack.c.l.bf16 %v233
        %v266 = vunpack.c.l.bf16 %v234
        %v267 = vunpack.c.l.bf16 %v235
        %v268 = vunpack.c.l.bf16 %v236
        %v269 = vunpack.c.l.bf16 %v237
        %v270 = vunpack.c.l.bf16 %v238
        %v271 = vunpack.c.l.bf16 %v239
        %v272 = vunpack.c.l.bf16 %v240
        %v273 = vunpack.c.l.bf16 %v241
        %v274 = vunpack.c.l.bf16 %v242
        %v275 = vld [vmem:[%s207] sm:$0x1]
        %v276 = vunpack.c.l.bf16 %v275
        %278 = vset.pattern.permute.xlu0 0
        %279 = vperm.xlu0 %278, %v243
        %v280 = vpop.permute.xlu0 %279
        %283 = vset.pattern.permute.xlu0 0
        %284 = vperm.xlu0 %283, %v244
        %v285 = vpop.permute.xlu0 %284
        %288 = vset.pattern.permute.xlu0 0
        %289 = vperm.xlu0 %288, %v245
        %v290 = vpop.permute.xlu0 %289
        %293 = vset.pattern.permute.xlu0 0
        %294 = vperm.xlu0 %293, %v246
        %v295 = vpop.permute.xlu0 %294
        %298 = vset.pattern.permute.xlu0 0
        %299 = vperm.xlu0 %298, %v247
        %v300 = vpop.permute.xlu0 %299
        %303 = vset.pattern.permute.xlu0 0
        %304 = vperm.xlu0 %303, %v248
        %v305 = vpop.permute.xlu0 %304
        %308 = vset.pattern.permute.xlu0 0
        %309 = vperm.xlu0 %308, %v249
        %v310 = vpop.permute.xlu0 %309
        %313 = vset.pattern.permute.xlu0 0
        %314 = vperm.xlu0 %313, %v250
        %v315 = vpop.permute.xlu0 %314
        %318 = vset.pattern.permute.xlu0 0
        %319 = vperm.xlu0 %318, %v251
        %v320 = vpop.permute.xlu0 %319
        %323 = vset.pattern.permute.xlu0 0
        %324 = vperm.xlu0 %323, %v252
        %v325 = vpop.permute.xlu0 %324
        %328 = vset.pattern.permute.xlu0 0
        %329 = vperm.xlu0 %328, %v253
        %v330 = vpop.permute.xlu0 %329
        %333 = vset.pattern.permute.xlu0 0
        %334 = vperm.xlu0 %333, %v254
        %v335 = vpop.permute.xlu0 %334
        %338 = vset.pattern.permute.xlu0 0
        %339 = vperm.xlu0 %338, %v255
        %v340 = vpop.permute.xlu0 %339
        %343 = vset.pattern.permute.xlu0 0
        %344 = vperm.xlu0 %343, %v256
        %v345 = vpop.permute.xlu0 %344
        %348 = vset.pattern.permute.xlu0 0
        %349 = vperm.xlu0 %348, %v257
        %v350 = vpop.permute.xlu0 %349
        %353 = vset.pattern.permute.xlu0 0
        %354 = vperm.xlu0 %353, %v258
        %v355 = vpop.permute.xlu0 %354
        %358 = vset.pattern.permute.xlu0 0
        %359 = vperm.xlu0 %358, %v259
        %v360 = vpop.permute.xlu0 %359
        %363 = vset.pattern.permute.xlu0 0
        %364 = vperm.xlu0 %363, %v260
        %v365 = vpop.permute.xlu0 %364
        %368 = vset.pattern.permute.xlu0 0
        %369 = vperm.xlu0 %368, %v261
        %v370 = vpop.permute.xlu0 %369
        %373 = vset.pattern.permute.xlu0 0
        %374 = vperm.xlu0 %373, %v262
        %v375 = vpop.permute.xlu0 %374
        %378 = vset.pattern.permute.xlu0 0
        %379 = vperm.xlu0 %378, %v263
        %v380 = vpop.permute.xlu0 %379
        %383 = vset.pattern.permute.xlu0 0
        %384 = vperm.xlu0 %383, %v264
        %v385 = vpop.permute.xlu0 %384
        %388 = vset.pattern.permute.xlu0 0
        %389 = vperm.xlu0 %388, %v265
        %v390 = vpop.permute.xlu0 %389
        %393 = vset.pattern.permute.xlu0 0
        %394 = vperm.xlu0 %393, %v266
        %v395 = vpop.permute.xlu0 %394
        %398 = vset.pattern.permute.xlu0 0
        %399 = vperm.xlu0 %398, %v267
        %v400 = vpop.permute.xlu0 %399
        %403 = vset.pattern.permute.xlu0 0
        %404 = vperm.xlu0 %403, %v268
        %v405 = vpop.permute.xlu0 %404
        %408 = vset.pattern.permute.xlu0 0
        %409 = vperm.xlu0 %408, %v269
        %v410 = vpop.permute.xlu0 %409
        %413 = vset.pattern.permute.xlu0 0
        %414 = vperm.xlu0 %413, %v270
        %v415 = vpop.permute.xlu0 %414
        %418 = vset.pattern.permute.xlu0 0
        %419 = vperm.xlu0 %418, %v271
        %v420 = vpop.permute.xlu0 %419
        %423 = vset.pattern.permute.xlu0 0
        %424 = vperm.xlu0 %423, %v272
        %v425 = vpop.permute.xlu0 %424
        %428 = vset.pattern.permute.xlu0 0
        %429 = vperm.xlu0 %428, %v273
        %v430 = vpop.permute.xlu0 %429
        %433 = vset.pattern.permute.xlu0 0
        %434 = vperm.xlu0 %433, %v274
        %v435 = vpop.permute.xlu0 %434
        %v437 = vperm.slane %v276, 0
        %v438 = vmul.f32 %v280, %v437
        %v439 = vmul.f32 %v285, %v437
        %v440 = vmul.f32 %v290, %v437
        %v441 = vmul.f32 %v295, %v437
        %v442 = vmul.f32 %v300, %v437
        %v443 = vmul.f32 %v305, %v437
        %v444 = vmul.f32 %v310, %v437
        %v445 = vmul.f32 %v315, %v437
        %v446 = vmul.f32 %v320, %v437
        %v447 = vmul.f32 %v325, %v437
        %v448 = vmul.f32 %v330, %v437
        %v449 = vmul.f32 %v335, %v437
        %v450 = vmul.f32 %v340, %v437
        %v451 = vmul.f32 %v345, %v437
        %v452 = vmul.f32 %v350, %v437
        %v453 = vmul.f32 %v355, %v437
        %v454 = vmul.f32 %v360, %v437
        %v455 = vmul.f32 %v365, %v437
        %v456 = vmul.f32 %v370, %v437
        %v457 = vmul.f32 %v375, %v437
        %v458 = vmul.f32 %v380, %v437
        %v459 = vmul.f32 %v385, %v437
        %v460 = vmul.f32 %v390, %v437
        %v461 = vmul.f32 %v395, %v437
        %v462 = vmul.f32 %v400, %v437
        %v463 = vmul.f32 %v405, %v437
        %v464 = vmul.f32 %v410, %v437
        %v465 = vmul.f32 %v415, %v437
        %v466 = vmul.f32 %v420, %v437
        %v467 = vmul.f32 %v425, %v437
        %v468 = vmul.f32 %v430, %v437
        %v469 = vmul.f32 %v435, %v437
        %v470 = vld [vmem:[%s204] sm:$0xf]
        %v471 = vld [vmem:[%s204 + $0x4] sm:$0xf]
        %v472 = vld [vmem:[%s204 + $0x8] sm:$0x1]
        %v473 = vld [vmem:[%s204 + $0xc] sm:$0xf]
        %v474 = vld [vmem:[%s204 + $0x10] sm:$0xf]
        %v475 = vld [vmem:[%s204 + $0x14] sm:$0x1]
        %v476 = vld [vmem:[%s204 + $0x18] sm:$0xf]
        %v477 = vld [vmem:[%s204 + $0x1c] sm:$0xf]
        %v478 = vld [vmem:[%s204 + $0x20] sm:$0x1]
        %v479 = vld [vmem:[%s204 + $0x24] sm:$0xf]
        %v480 = vld [vmem:[%s204 + $0x28] sm:$0xf]
        %v481 = vld [vmem:[%s204 + $0x2c] sm:$0x1]
        %v482 = vld [vmem:[%s204 + $0x30] sm:$0xf]
        %v483 = vld [vmem:[%s204 + $0x34] sm:$0xf]
        %v484 = vld [vmem:[%s204 + $0x38] sm:$0x1]
        %v485 = vld [vmem:[%s204 + $0x3c] sm:$0xf]
        %v486 = vld [vmem:[%s204 + $0x40] sm:$0xf]
        %v487 = vld [vmem:[%s204 + $0x44] sm:$0x1]
        %v488 = vld [vmem:[%s204 + $0x48] sm:$0xf]
        %v489 = vld [vmem:[%s204 + $0x4c] sm:$0xf]
        %v490 = vld [vmem:[%s204 + $0x50] sm:$0x1]
        %v491 = vld [vmem:[%s204 + $0x54] sm:$0xf]
        %v492 = vld [vmem:[%s204 + $0x58] sm:$0xf]
        %v493 = vld [vmem:[%s204 + $0x5c] sm:$0x1]
        %v494 = vld [vmem:[%s204 + $0x60] sm:$0xf]
        %v495 = vld [vmem:[%s204 + $0x64] sm:$0xf]
        %v496 = vld [vmem:[%s204 + $0x68] sm:$0x1]
        %v497 = vld [vmem:[%s204 + $0x6c] sm:$0xf]
        %v498 = vld [vmem:[%s204 + $0x70] sm:$0xf]
        %v499 = vld [vmem:[%s204 + $0x74] sm:$0x1]
        %v500 = vld [vmem:[%s204 + $0x78] sm:$0xf]
        %v501 = vld [vmem:[%s204 + $0x7c] sm:$0xf]
        %v502 = vld [vmem:[%s204 + $0x80] sm:$0x1]
        %v503 = vld [vmem:[%s204 + $0x84] sm:$0xf]
        %v504 = vld [vmem:[%s204 + $0x88] sm:$0xf]
        %v505 = vld [vmem:[%s204 + $0x8c] sm:$0x1]
        %v506 = vld [vmem:[%s204 + $0x90] sm:$0xf]
        %v507 = vld [vmem:[%s204 + $0x94] sm:$0xf]
        %v508 = vld [vmem:[%s204 + $0x98] sm:$0x1]
        %v509 = vld [vmem:[%s204 + $0x9c] sm:$0xf]
        %v510 = vld [vmem:[%s204 + $0xa0] sm:$0xf]
        %v511 = vld [vmem:[%s204 + $0xa4] sm:$0x1]
        %v512 = vld [vmem:[%s204 + $0xa8] sm:$0xf]
        %v513 = vld [vmem:[%s204 + $0xac] sm:$0xf]
        %v514 = vld [vmem:[%s204 + $0xb0] sm:$0x1]
        %v515 = vld [vmem:[%s204 + $0xb4] sm:$0xf]
        %v516 = vld [vmem:[%s204 + $0xb8] sm:$0xf]
        %v517 = vld [vmem:[%s204 + $0xbc] sm:$0x1]
        %v518 = vunpack.c.l.bf16 %v470
        %v519 = vunpack.c.l.bf16 %v471
        %v520 = vunpack.c.l.bf16 %v472
        %v521 = vunpack.c.l.bf16 %v473
        %v522 = vunpack.c.l.bf16 %v474
        %v523 = vunpack.c.l.bf16 %v475
        %v524 = vunpack.c.l.bf16 %v476
        %v525 = vunpack.c.l.bf16 %v477
        %v526 = vunpack.c.l.bf16 %v478
        %v527 = vunpack.c.l.bf16 %v479
        %v528 = vunpack.c.l.bf16 %v480
        %v529 = vunpack.c.l.bf16 %v481
        %v530 = vunpack.c.l.bf16 %v482
        %v531 = vunpack.c.l.bf16 %v483
        %v532 = vunpack.c.l.bf16 %v484
        %v533 = vunpack.c.l.bf16 %v485
        %v534 = vunpack.c.l.bf16 %v486
        %v535 = vunpack.c.l.bf16 %v487
        %v536 = vunpack.c.l.bf16 %v488
        %v537 = vunpack.c.l.bf16 %v489
        %v538 = vunpack.c.l.bf16 %v490
        %v539 = vunpack.c.l.bf16 %v491
        %v540 = vunpack.c.l.bf16 %v492
        %v541 = vunpack.c.l.bf16 %v493
        %v542 = vunpack.c.l.bf16 %v494
        %v543 = vunpack.c.l.bf16 %v495
        %v544 = vunpack.c.l.bf16 %v496
        %v545 = vunpack.c.l.bf16 %v497
        %v546 = vunpack.c.l.bf16 %v498
        %v547 = vunpack.c.l.bf16 %v499
        %v548 = vunpack.c.l.bf16 %v500
        %v549 = vunpack.c.l.bf16 %v501
        %v550 = vunpack.c.l.bf16 %v502
        %v551 = vunpack.c.l.bf16 %v503
        %v552 = vunpack.c.l.bf16 %v504
        %v553 = vunpack.c.l.bf16 %v505
        %v554 = vunpack.c.l.bf16 %v506
        %v555 = vunpack.c.l.bf16 %v507
        %v556 = vunpack.c.l.bf16 %v508
        %v557 = vunpack.c.l.bf16 %v509
        %v558 = vunpack.c.l.bf16 %v510
        %v559 = vunpack.c.l.bf16 %v511
        %v560 = vunpack.c.l.bf16 %v512
        %v561 = vunpack.c.l.bf16 %v513
        %v562 = vunpack.c.l.bf16 %v514
        %v563 = vunpack.c.l.bf16 %v515
        %v564 = vunpack.c.l.bf16 %v516
        %v565 = vunpack.c.l.bf16 %v517
        %s566 = scalar_lea.vmem %s207, 1
        %v567 = vld [vmem:[%s566] sm:$0x1]
        %v568 = vunpack.c.l.bf16 %v567
        %570 = vset.pattern.permute.xlu0 0
        %571 = vperm.xlu0 %570, %v518
        %v572 = vpop.permute.xlu0 %571
        %575 = vset.pattern.permute.xlu0 0
        %576 = vperm.xlu0 %575, %v519
        %v577 = vpop.permute.xlu0 %576
        %580 = vset.pattern.permute.xlu0 0
        %581 = vperm.xlu0 %580, %v520
        %v582 = vpop.permute.xlu0 %581
        %585 = vset.pattern.permute.xlu0 0
        %586 = vperm.xlu0 %585, %v521
        %v587 = vpop.permute.xlu0 %586
        %590 = vset.pattern.permute.xlu0 0
        %591 = vperm.xlu0 %590, %v522
        %v592 = vpop.permute.xlu0 %591
        %595 = vset.pattern.permute.xlu0 0
        %596 = vperm.xlu0 %595, %v523
        %v597 = vpop.permute.xlu0 %596
        %600 = vset.pattern.permute.xlu0 0
        %601 = vperm.xlu0 %600, %v524
        %v602 = vpop.permute.xlu0 %601
        %605 = vset.pattern.permute.xlu0 0
        %606 = vperm.xlu0 %605, %v525
        %v607 = vpop.permute.xlu0 %606
        %610 = vset.pattern.permute.xlu0 0
        %611 = vperm.xlu0 %610, %v526
        %v612 = vpop.permute.xlu0 %611
        %615 = vset.pattern.permute.xlu0 0
        %616 = vperm.xlu0 %615, %v527
        %v617 = vpop.permute.xlu0 %616
        %620 = vset.pattern.permute.xlu0 0
        %621 = vperm.xlu0 %620, %v528
        %v622 = vpop.permute.xlu0 %621
        %625 = vset.pattern.permute.xlu0 0
        %626 = vperm.xlu0 %625, %v529
        %v627 = vpop.permute.xlu0 %626
        %630 = vset.pattern.permute.xlu0 0
        %631 = vperm.xlu0 %630, %v530
        %v632 = vpop.permute.xlu0 %631
        %635 = vset.pattern.permute.xlu0 0
        %636 = vperm.xlu0 %635, %v531
        %v637 = vpop.permute.xlu0 %636
        %640 = vset.pattern.permute.xlu0 0
        %641 = vperm.xlu0 %640, %v532
        %v642 = vpop.permute.xlu0 %641
        %645 = vset.pattern.permute.xlu0 0
        %646 = vperm.xlu0 %645, %v533
        %v647 = vpop.permute.xlu0 %646
        %650 = vset.pattern.permute.xlu0 0
        %651 = vperm.xlu0 %650, %v534
        %v652 = vpop.permute.xlu0 %651
        %655 = vset.pattern.permute.xlu0 0
        %656 = vperm.xlu0 %655, %v535
        %v657 = vpop.permute.xlu0 %656
        %660 = vset.pattern.permute.xlu0 0
        %661 = vperm.xlu0 %660, %v536
        %v662 = vpop.permute.xlu0 %661
        %665 = vset.pattern.permute.xlu0 0
        %666 = vperm.xlu0 %665, %v537
        %v667 = vpop.permute.xlu0 %666
        %670 = vset.pattern.permute.xlu0 0
        %671 = vperm.xlu0 %670, %v538
        %v672 = vpop.permute.xlu0 %671
        %675 = vset.pattern.permute.xlu0 0
        %676 = vperm.xlu0 %675, %v539
        %v677 = vpop.permute.xlu0 %676
        %680 = vset.pattern.permute.xlu0 0
        %681 = vperm.xlu0 %680, %v540
        %v682 = vpop.permute.xlu0 %681
        %685 = vset.pattern.permute.xlu0 0
        %686 = vperm.xlu0 %685, %v541
        %v687 = vpop.permute.xlu0 %686
        %690 = vset.pattern.permute.xlu0 0
        %691 = vperm.xlu0 %690, %v542
        %v692 = vpop.permute.xlu0 %691
        %695 = vset.pattern.permute.xlu0 0
        %696 = vperm.xlu0 %695, %v543
        %v697 = vpop.permute.xlu0 %696
        %700 = vset.pattern.permute.xlu0 0
        %701 = vperm.xlu0 %700, %v544
        %v702 = vpop.permute.xlu0 %701
        %705 = vset.pattern.permute.xlu0 0
        %706 = vperm.xlu0 %705, %v545
        %v707 = vpop.permute.xlu0 %706
        %710 = vset.pattern.permute.xlu0 0
        %711 = vperm.xlu0 %710, %v546
        %v712 = vpop.permute.xlu0 %711
        %715 = vset.pattern.permute.xlu0 0
        %716 = vperm.xlu0 %715, %v547
        %v717 = vpop.permute.xlu0 %716
        %720 = vset.pattern.permute.xlu0 0
        %721 = vperm.xlu0 %720, %v548
        %v722 = vpop.permute.xlu0 %721
        %725 = vset.pattern.permute.xlu0 0
        %726 = vperm.xlu0 %725, %v549
        %v727 = vpop.permute.xlu0 %726
        %730 = vset.pattern.permute.xlu0 0
        %731 = vperm.xlu0 %730, %v550
        %v732 = vpop.permute.xlu0 %731
        %735 = vset.pattern.permute.xlu0 0
        %736 = vperm.xlu0 %735, %v551
        %v737 = vpop.permute.xlu0 %736
        %740 = vset.pattern.permute.xlu0 0
        %741 = vperm.xlu0 %740, %v552
        %v742 = vpop.permute.xlu0 %741
        %745 = vset.pattern.permute.xlu0 0
        %746 = vperm.xlu0 %745, %v553
        %v747 = vpop.permute.xlu0 %746
        %750 = vset.pattern.permute.xlu0 0
        %751 = vperm.xlu0 %750, %v554
        %v752 = vpop.permute.xlu0 %751
        %755 = vset.pattern.permute.xlu0 0
        %756 = vperm.xlu0 %755, %v555
        %v757 = vpop.permute.xlu0 %756
        %760 = vset.pattern.permute.xlu0 0
        %761 = vperm.xlu0 %760, %v556
        %v762 = vpop.permute.xlu0 %761
        %765 = vset.pattern.permute.xlu0 0
        %766 = vperm.xlu0 %765, %v557
        %v767 = vpop.permute.xlu0 %766
        %770 = vset.pattern.permute.xlu0 0
        %771 = vperm.xlu0 %770, %v558
        %v772 = vpop.permute.xlu0 %771
        %775 = vset.pattern.permute.xlu0 0
        %776 = vperm.xlu0 %775, %v559
        %v777 = vpop.permute.xlu0 %776
        %780 = vset.pattern.permute.xlu0 0
        %781 = vperm.xlu0 %780, %v560
        %v782 = vpop.permute.xlu0 %781
        %785 = vset.pattern.permute.xlu0 0
        %786 = vperm.xlu0 %785, %v561
        %v787 = vpop.permute.xlu0 %786
        %790 = vset.pattern.permute.xlu0 0
        %791 = vperm.xlu0 %790, %v562
        %v792 = vpop.permute.xlu0 %791
        %795 = vset.pattern.permute.xlu0 0
        %796 = vperm.xlu0 %795, %v563
        %v797 = vpop.permute.xlu0 %796
        %800 = vset.pattern.permute.xlu0 0
        %801 = vperm.xlu0 %800, %v564
        %v802 = vpop.permute.xlu0 %801
        %805 = vset.pattern.permute.xlu0 0
        %806 = vperm.xlu0 %805, %v565
        %v807 = vpop.permute.xlu0 %806
        %v809 = vperm.slane %v568, 0
        %v810 = vmul.f32 %v572, %v809
        %v811 = vmul.f32 %v577, %v809
        %v812 = vmul.f32 %v582, %v809
        %v813 = vmul.f32 %v587, %v809
        %v814 = vmul.f32 %v592, %v809
        %v815 = vmul.f32 %v597, %v809
        %v816 = vmul.f32 %v602, %v809
        %v817 = vmul.f32 %v607, %v809
        %v818 = vmul.f32 %v612, %v809
        %v819 = vmul.f32 %v617, %v809
        %v820 = vmul.f32 %v622, %v809
        %v821 = vmul.f32 %v627, %v809
        %v822 = vmul.f32 %v632, %v809
        %v823 = vmul.f32 %v637, %v809
        %v824 = vmul.f32 %v642, %v809
        %v825 = vmul.f32 %v647, %v809
        %v826 = vmul.f32 %v652, %v809
        %v827 = vmul.f32 %v657, %v809
        %v828 = vmul.f32 %v662, %v809
        %v829 = vmul.f32 %v667, %v809
        %v830 = vmul.f32 %v672, %v809
        %v831 = vmul.f32 %v677, %v809
        %v832 = vmul.f32 %v682, %v809
        %v833 = vmul.f32 %v687, %v809
        %v834 = vmul.f32 %v692, %v809
        %v835 = vmul.f32 %v697, %v809
        %v836 = vmul.f32 %v702, %v809
        %v837 = vmul.f32 %v707, %v809
        %v838 = vmul.f32 %v712, %v809
        %v839 = vmul.f32 %v717, %v809
        %v840 = vmul.f32 %v722, %v809
        %v841 = vmul.f32 %v727, %v809
        %v842 = vmul.f32 %v732, %v809
        %v843 = vmul.f32 %v737, %v809
        %v844 = vmul.f32 %v742, %v809
        %v845 = vmul.f32 %v747, %v809
        %v846 = vmul.f32 %v752, %v809
        %v847 = vmul.f32 %v757, %v809
        %v848 = vmul.f32 %v762, %v809
        %v849 = vmul.f32 %v767, %v809
        %v850 = vmul.f32 %v772, %v809
        %v851 = vmul.f32 %v777, %v809
        %v852 = vmul.f32 %v782, %v809
        %v853 = vmul.f32 %v787, %v809
        %v854 = vmul.f32 %v792, %v809
        %v855 = vmul.f32 %v797, %v809
        %v856 = vmul.f32 %v802, %v809
        %v857 = vmul.f32 %v807, %v809
        %vm906 = vcmask 1046528
        %v907 = vrot.slane %v810, 1
        %v908 = vrot.slane %v811, 1
        %v909 = vsel %vm906, %v907, %v908
        %v910 = vrot.slane %v812, 1
        %v911 = vsel %vm906, %v908, %v910
        %v912 = vrot.slane %v813, 1
        %v913 = vrot.slane %v814, 1
        %v914 = vsel %vm906, %v912, %v913
        %v915 = vrot.slane %v815, 1
        %v916 = vsel %vm906, %v913, %v915
        %v917 = vrot.slane %v816, 1
        %v918 = vrot.slane %v817, 1
        %v919 = vsel %vm906, %v917, %v918
        %v920 = vrot.slane %v818, 1
        %v921 = vsel %vm906, %v918, %v920
        %v922 = vrot.slane %v819, 1
        %v923 = vrot.slane %v820, 1
        %v924 = vsel %vm906, %v922, %v923
        %v925 = vrot.slane %v821, 1
        %v926 = vsel %vm906, %v923, %v925
        %v927 = vrot.slane %v822, 1
        %v928 = vrot.slane %v823, 1
        %v929 = vsel %vm906, %v927, %v928
        %v930 = vrot.slane %v824, 1
        %v931 = vsel %vm906, %v928, %v930
        %v932 = vrot.slane %v825, 1
        %v933 = vrot.slane %v826, 1
        %v934 = vsel %vm906, %v932, %v933
        %v935 = vrot.slane %v827, 1
        %v936 = vsel %vm906, %v933, %v935
        %v937 = vrot.slane %v828, 1
        %v938 = vrot.slane %v829, 1
        %v939 = vsel %vm906, %v937, %v938
        %v940 = vrot.slane %v830, 1
        %v941 = vsel %vm906, %v938, %v940
        %v942 = vrot.slane %v831, 1
        %v943 = vrot.slane %v832, 1
        %v944 = vsel %vm906, %v942, %v943
        %v945 = vrot.slane %v833, 1
        %v946 = vsel %vm906, %v943, %v945
        %v947 = vrot.slane %v834, 1
        %v948 = vrot.slane %v835, 1
        %v949 = vsel %vm906, %v947, %v948
        %v950 = vrot.slane %v836, 1
        %v951 = vsel %vm906, %v948, %v950
        %v952 = vrot.slane %v837, 1
        %v953 = vrot.slane %v838, 1
        %v954 = vsel %vm906, %v952, %v953
        %v955 = vrot.slane %v839, 1
        %v956 = vsel %vm906, %v953, %v955
        %v957 = vrot.slane %v840, 1
        %v958 = vrot.slane %v841, 1
        %v959 = vsel %vm906, %v957, %v958
        %v960 = vrot.slane %v842, 1
        %v961 = vsel %vm906, %v958, %v960
        %v962 = vrot.slane %v843, 1
        %v963 = vrot.slane %v844, 1
        %v964 = vsel %vm906, %v962, %v963
        %v965 = vrot.slane %v845, 1
        %v966 = vsel %vm906, %v963, %v965
        %v967 = vrot.slane %v846, 1
        %v968 = vrot.slane %v847, 1
        %v969 = vsel %vm906, %v967, %v968
        %v970 = vrot.slane %v848, 1
        %v971 = vsel %vm906, %v968, %v970
        %v972 = vrot.slane %v849, 1
        %v973 = vrot.slane %v850, 1
        %v974 = vsel %vm906, %v972, %v973
        %v975 = vrot.slane %v851, 1
        %v976 = vsel %vm906, %v973, %v975
        %v977 = vrot.slane %v852, 1
        %v978 = vrot.slane %v853, 1
        %v979 = vsel %vm906, %v977, %v978
        %v980 = vrot.slane %v854, 1
        %v981 = vsel %vm906, %v978, %v980
        %v982 = vrot.slane %v855, 1
        %v983 = vrot.slane %v856, 1
        %v984 = vsel %vm906, %v982, %v983
        %v985 = vrot.slane %v857, 1
        %v986 = vsel %vm906, %v983, %v985
        %v1019 = vadd.f32 %v438, %v909
        %v1020 = vadd.f32 %v439, %v911
        %v1021 = vadd.f32 %v440, %v914
        %v1022 = vadd.f32 %v441, %v916
        %v1023 = vadd.f32 %v442, %v919
        %v1024 = vadd.f32 %v443, %v921
        %v1025 = vadd.f32 %v444, %v924
        %v1026 = vadd.f32 %v445, %v926
        %v1027 = vadd.f32 %v446, %v929
        %v1028 = vadd.f32 %v447, %v931
        %v1029 = vadd.f32 %v448, %v934
        %v1030 = vadd.f32 %v449, %v936
        %v1031 = vadd.f32 %v450, %v939
        %v1032 = vadd.f32 %v451, %v941
        %v1033 = vadd.f32 %v452, %v944
        %v1034 = vadd.f32 %v453, %v946
        %v1035 = vadd.f32 %v454, %v949
        %v1036 = vadd.f32 %v455, %v951
        %v1037 = vadd.f32 %v456, %v954
        %v1038 = vadd.f32 %v457, %v956
        %v1039 = vadd.f32 %v458, %v959
        %v1040 = vadd.f32 %v459, %v961
        %v1041 = vadd.f32 %v460, %v964
        %v1042 = vadd.f32 %v461, %v966
        %v1043 = vadd.f32 %v462, %v969
        %v1044 = vadd.f32 %v463, %v971
        %v1045 = vadd.f32 %v464, %v974
        %v1046 = vadd.f32 %v465, %v976
        %v1047 = vadd.f32 %v466, %v979
        %v1048 = vadd.f32 %v467, %v981
        %v1049 = vadd.f32 %v468, %v984
        %v1050 = vadd.f32 %v469, %v986
        %v1051 = vld [vmem:[%s204] sm:$0xe]
        %v1052 = vld [vmem:[%s204 + $0xc] sm:$0xe]
        %v1053 = vld [vmem:[%s204 + $0x18] sm:$0xe]
        %v1054 = vld [vmem:[%s204 + $0x24] sm:$0xe]
        %v1055 = vld [vmem:[%s204 + $0x30] sm:$0xe]
        %v1056 = vld [vmem:[%s204 + $0x3c] sm:$0xe]
        %v1057 = vld [vmem:[%s204 + $0x48] sm:$0xe]
        %v1058 = vld [vmem:[%s204 + $0x54] sm:$0xe]
        %v1059 = vld [vmem:[%s204 + $0x60] sm:$0xe]
        %v1060 = vld [vmem:[%s204 + $0x6c] sm:$0xe]
        %v1061 = vld [vmem:[%s204 + $0x78] sm:$0xe]
        %v1062 = vld [vmem:[%s204 + $0x84] sm:$0xe]
        %v1063 = vld [vmem:[%s204 + $0x90] sm:$0xe]
        %v1064 = vld [vmem:[%s204 + $0x9c] sm:$0xe]
        %v1065 = vld [vmem:[%s204 + $0xa8] sm:$0xe]
        %v1066 = vld [vmem:[%s204 + $0xb4] sm:$0xe]
        %v1067 = vunpack.c.l.bf16 %v1051
        %v1068 = vunpack.c.l.bf16 %v1052
        %v1069 = vunpack.c.l.bf16 %v1053
        %v1070 = vunpack.c.l.bf16 %v1054
        %v1071 = vunpack.c.l.bf16 %v1055
        %v1072 = vunpack.c.l.bf16 %v1056
        %v1073 = vunpack.c.l.bf16 %v1057
        %v1074 = vunpack.c.l.bf16 %v1058
        %v1075 = vunpack.c.l.bf16 %v1059
        %v1076 = vunpack.c.l.bf16 %v1060
        %v1077 = vunpack.c.l.bf16 %v1061
        %v1078 = vunpack.c.l.bf16 %v1062
        %v1079 = vunpack.c.l.bf16 %v1063
        %v1080 = vunpack.c.l.bf16 %v1064
        %v1081 = vunpack.c.l.bf16 %v1065
        %v1082 = vunpack.c.l.bf16 %v1066
        %s1083 = scalar_lea.vmem %s207, 2
        %v1084 = vld [vmem:[%s1083] sm:$0x1]
        %v1085 = vunpack.c.l.bf16 %v1084
        %1087 = vset.pattern.permute.xlu0 0
        %1088 = vperm.xlu0 %1087, %v1067
        %v1089 = vpop.permute.xlu0 %1088
        %1092 = vset.pattern.permute.xlu0 0
        %1093 = vperm.xlu0 %1092, %v1068
        %v1094 = vpop.permute.xlu0 %1093
        %1097 = vset.pattern.permute.xlu0 0
        %1098 = vperm.xlu0 %1097, %v1069
        %v1099 = vpop.permute.xlu0 %1098
        %1102 = vset.pattern.permute.xlu0 0
        %1103 = vperm.xlu0 %1102, %v1070
        %v1104 = vpop.permute.xlu0 %1103
        %1107 = vset.pattern.permute.xlu0 0
        %1108 = vperm.xlu0 %1107, %v1071
        %v1109 = vpop.permute.xlu0 %1108
        %1112 = vset.pattern.permute.xlu0 0
        %1113 = vperm.xlu0 %1112, %v1072
        %v1114 = vpop.permute.xlu0 %1113
        %1117 = vset.pattern.permute.xlu0 0
        %1118 = vperm.xlu0 %1117, %v1073
        %v1119 = vpop.permute.xlu0 %1118
        %1122 = vset.pattern.permute.xlu0 0
        %1123 = vperm.xlu0 %1122, %v1074
        %v1124 = vpop.permute.xlu0 %1123
        %1127 = vset.pattern.permute.xlu0 0
        %1128 = vperm.xlu0 %1127, %v1075
        %v1129 = vpop.permute.xlu0 %1128
        %1132 = vset.pattern.permute.xlu0 0
        %1133 = vperm.xlu0 %1132, %v1076
        %v1134 = vpop.permute.xlu0 %1133
        %1137 = vset.pattern.permute.xlu0 0
        %1138 = vperm.xlu0 %1137, %v1077
        %v1139 = vpop.permute.xlu0 %1138
        %1142 = vset.pattern.permute.xlu0 0
        %1143 = vperm.xlu0 %1142, %v1078
        %v1144 = vpop.permute.xlu0 %1143
        %1147 = vset.pattern.permute.xlu0 0
        %1148 = vperm.xlu0 %1147, %v1079
        %v1149 = vpop.permute.xlu0 %1148
        %1152 = vset.pattern.permute.xlu0 0
        %1153 = vperm.xlu0 %1152, %v1080
        %v1154 = vpop.permute.xlu0 %1153
        %1157 = vset.pattern.permute.xlu0 0
        %1158 = vperm.xlu0 %1157, %v1081
        %v1159 = vpop.permute.xlu0 %1158
        %1162 = vset.pattern.permute.xlu0 0
        %1163 = vperm.xlu0 %1162, %v1082
        %v1164 = vpop.permute.xlu0 %1163
        %v1166 = vperm.slane %v1085, 0
        %v1167 = vmul.f32 %v1089, %v1166
        %v1168 = vmul.f32 %v577, %v1166
        %v1169 = vmul.f32 %v582, %v1166
        %v1170 = vmul.f32 %v1094, %v1166
        %v1171 = vmul.f32 %v592, %v1166
        %v1172 = vmul.f32 %v597, %v1166
        %v1173 = vmul.f32 %v1099, %v1166
        %v1174 = vmul.f32 %v607, %v1166
        %v1175 = vmul.f32 %v612, %v1166
        %v1176 = vmul.f32 %v1104, %v1166
        %v1177 = vmul.f32 %v622, %v1166
        %v1178 = vmul.f32 %v627, %v1166
        %v1179 = vmul.f32 %v1109, %v1166
        %v1180 = vmul.f32 %v637, %v1166
        %v1181 = vmul.f32 %v642, %v1166
        %v1182 = vmul.f32 %v1114, %v1166
        %v1183 = vmul.f32 %v652, %v1166
        %v1184 = vmul.f32 %v657, %v1166
        %v1185 = vmul.f32 %v1119, %v1166
        %v1186 = vmul.f32 %v667, %v1166
        %v1187 = vmul.f32 %v672, %v1166
        %v1188 = vmul.f32 %v1124, %v1166
        %v1189 = vmul.f32 %v682, %v1166
        %v1190 = vmul.f32 %v687, %v1166
        %v1191 = vmul.f32 %v1129, %v1166
        %v1192 = vmul.f32 %v697, %v1166
        %v1193 = vmul.f32 %v702, %v1166
        %v1194 = vmul.f32 %v1134, %v1166
        %v1195 = vmul.f32 %v712, %v1166
        %v1196 = vmul.f32 %v717, %v1166
        %v1197 = vmul.f32 %v1139, %v1166
        %v1198 = vmul.f32 %v727, %v1166
        %v1199 = vmul.f32 %v732, %v1166
        %v1200 = vmul.f32 %v1144, %v1166
        %v1201 = vmul.f32 %v742, %v1166
        %v1202 = vmul.f32 %v747, %v1166
        %v1203 = vmul.f32 %v1149, %v1166
        %v1204 = vmul.f32 %v757, %v1166
        %v1205 = vmul.f32 %v762, %v1166
        %v1206 = vmul.f32 %v1154, %v1166
        %v1207 = vmul.f32 %v772, %v1166
        %v1208 = vmul.f32 %v777, %v1166
        %v1209 = vmul.f32 %v1159, %v1166
        %v1210 = vmul.f32 %v787, %v1166
        %v1211 = vmul.f32 %v792, %v1166
        %v1212 = vmul.f32 %v1164, %v1166
        %v1213 = vmul.f32 %v802, %v1166
        %v1214 = vmul.f32 %v807, %v1166
        %vm1263 = vcmask 1045504
        %v1264 = vrot.slane %v1167, 2
        %v1265 = vrot.slane %v1168, 2
        %v1266 = vsel %vm1263, %v1264, %v1265
        %v1267 = vrot.slane %v1169, 2
        %v1268 = vsel %vm1263, %v1265, %v1267
        %v1269 = vrot.slane %v1170, 2
        %v1270 = vrot.slane %v1171, 2
        %v1271 = vsel %vm1263, %v1269, %v1270
        %v1272 = vrot.slane %v1172, 2
        %v1273 = vsel %vm1263, %v1270, %v1272
        %v1274 = vrot.slane %v1173, 2
        %v1275 = vrot.slane %v1174, 2
        %v1276 = vsel %vm1263, %v1274, %v1275
        %v1277 = vrot.slane %v1175, 2
        %v1278 = vsel %vm1263, %v1275, %v1277
        %v1279 = vrot.slane %v1176, 2
        %v1280 = vrot.slane %v1177, 2
        %v1281 = vsel %vm1263, %v1279, %v1280
        %v1282 = vrot.slane %v1178, 2
        %v1283 = vsel %vm1263, %v1280, %v1282
        %v1284 = vrot.slane %v1179, 2
        %v1285 = vrot.slane %v1180, 2
        %v1286 = vsel %vm1263, %v1284, %v1285
        %v1287 = vrot.slane %v1181, 2
        %v1288 = vsel %vm1263, %v1285, %v1287
        %v1289 = vrot.slane %v1182, 2
        %v1290 = vrot.slane %v1183, 2
        %v1291 = vsel %vm1263, %v1289, %v1290
        %v1292 = vrot.slane %v1184, 2
        %v1293 = vsel %vm1263, %v1290, %v1292
        %v1294 = vrot.slane %v1185, 2
        %v1295 = vrot.slane %v1186, 2
        %v1296 = vsel %vm1263, %v1294, %v1295
        %v1297 = vrot.slane %v1187, 2
        %v1298 = vsel %vm1263, %v1295, %v1297
        %v1299 = vrot.slane %v1188, 2
        %v1300 = vrot.slane %v1189, 2
        %v1301 = vsel %vm1263, %v1299, %v1300
        %v1302 = vrot.slane %v1190, 2
        %v1303 = vsel %vm1263, %v1300, %v1302
        %v1304 = vrot.slane %v1191, 2
        %v1305 = vrot.slane %v1192, 2
        %v1306 = vsel %vm1263, %v1304, %v1305
        %v1307 = vrot.slane %v1193, 2
        %v1308 = vsel %vm1263, %v1305, %v1307
        %v1309 = vrot.slane %v1194, 2
        %v1310 = vrot.slane %v1195, 2
        %v1311 = vsel %vm1263, %v1309, %v1310
        %v1312 = vrot.slane %v1196, 2
        %v1313 = vsel %vm1263, %v1310, %v1312
        %v1314 = vrot.slane %v1197, 2
        %v1315 = vrot.slane %v1198, 2
        %v1316 = vsel %vm1263, %v1314, %v1315
        %v1317 = vrot.slane %v1199, 2
        %v1318 = vsel %vm1263, %v1315, %v1317
        %v1319 = vrot.slane %v1200, 2
        %v1320 = vrot.slane %v1201, 2
        %v1321 = vsel %vm1263, %v1319, %v1320
        %v1322 = vrot.slane %v1202, 2
        %v1323 = vsel %vm1263, %v1320, %v1322
        %v1324 = vrot.slane %v1203, 2
        %v1325 = vrot.slane %v1204, 2
        %v1326 = vsel %vm1263, %v1324, %v1325
        %v1327 = vrot.slane %v1205, 2
        %v1328 = vsel %vm1263, %v1325, %v1327
        %v1329 = vrot.slane %v1206, 2
        %v1330 = vrot.slane %v1207, 2
        %v1331 = vsel %vm1263, %v1329, %v1330
        %v1332 = vrot.slane %v1208, 2
        %v1333 = vsel %vm1263, %v1330, %v1332
        %v1334 = vrot.slane %v1209, 2
        %v1335 = vrot.slane %v1210, 2
        %v1336 = vsel %vm1263, %v1334, %v1335
        %v1337 = vrot.slane %v1211, 2
        %v1338 = vsel %vm1263, %v1335, %v1337
        %v1339 = vrot.slane %v1212, 2
        %v1340 = vrot.slane %v1213, 2
        %v1341 = vsel %vm1263, %v1339, %v1340
        %v1342 = vrot.slane %v1214, 2
        %v1343 = vsel %vm1263, %v1340, %v1342
        %v1376 = vadd.f32 %v1019, %v1266
        %v1377 = vadd.f32 %v1020, %v1268
        %v1378 = vadd.f32 %v1021, %v1271
        %v1379 = vadd.f32 %v1022, %v1273
        %v1380 = vadd.f32 %v1023, %v1276
        %v1381 = vadd.f32 %v1024, %v1278
        %v1382 = vadd.f32 %v1025, %v1281
        %v1383 = vadd.f32 %v1026, %v1283
        %v1384 = vadd.f32 %v1027, %v1286
        %v1385 = vadd.f32 %v1028, %v1288
        %v1386 = vadd.f32 %v1029, %v1291
        %v1387 = vadd.f32 %v1030, %v1293
        %v1388 = vadd.f32 %v1031, %v1296
        %v1389 = vadd.f32 %v1032, %v1298
        %v1390 = vadd.f32 %v1033, %v1301
        %v1391 = vadd.f32 %v1034, %v1303
        %v1392 = vadd.f32 %v1035, %v1306
        %v1393 = vadd.f32 %v1036, %v1308
        %v1394 = vadd.f32 %v1037, %v1311
        %v1395 = vadd.f32 %v1038, %v1313
        %v1396 = vadd.f32 %v1039, %v1316
        %v1397 = vadd.f32 %v1040, %v1318
        %v1398 = vadd.f32 %v1041, %v1321
        %v1399 = vadd.f32 %v1042, %v1323
        %v1400 = vadd.f32 %v1043, %v1326
        %v1401 = vadd.f32 %v1044, %v1328
        %v1402 = vadd.f32 %v1045, %v1331
        %v1403 = vadd.f32 %v1046, %v1333
        %v1404 = vadd.f32 %v1047, %v1336
        %v1405 = vadd.f32 %v1048, %v1338
        %v1406 = vadd.f32 %v1049, %v1341
        %v1407 = vadd.f32 %v1050, %v1343
        %s1408 = scalar_lea.vmem %s204, 12
        %v1409 = vld [vmem:[%s1408] sm:$0xf]
        %v1410 = vld [vmem:[%s1408 + $0x4] sm:$0xf]
        %v1411 = vld [vmem:[%s1408 + $0xc] sm:$0xf]
        %v1412 = vld [vmem:[%s1408 + $0x10] sm:$0xf]
        %v1413 = vld [vmem:[%s1408 + $0x18] sm:$0xf]
        %v1414 = vld [vmem:[%s1408 + $0x1c] sm:$0xf]
        %v1415 = vld [vmem:[%s1408 + $0x24] sm:$0xf]
        %v1416 = vld [vmem:[%s1408 + $0x28] sm:$0xf]
        %v1417 = vld [vmem:[%s1408 + $0x30] sm:$0xf]
        %v1418 = vld [vmem:[%s1408 + $0x34] sm:$0xf]
        %v1419 = vld [vmem:[%s1408 + $0x3c] sm:$0xf]
        %v1420 = vld [vmem:[%s1408 + $0x40] sm:$0xf]
        %v1421 = vld [vmem:[%s1408 + $0x48] sm:$0xf]
        %v1422 = vld [vmem:[%s1408 + $0x4c] sm:$0xf]
        %v1423 = vld [vmem:[%s1408 + $0x54] sm:$0xf]
        %v1424 = vld [vmem:[%s1408 + $0x58] sm:$0xf]
        %v1425 = vld [vmem:[%s1408 + $0x60] sm:$0xf]
        %v1426 = vld [vmem:[%s1408 + $0x64] sm:$0xf]
        %v1427 = vld [vmem:[%s1408 + $0x6c] sm:$0xf]
        %v1428 = vld [vmem:[%s1408 + $0x70] sm:$0xf]
        %v1429 = vld [vmem:[%s1408 + $0x78] sm:$0xf]
        %v1430 = vld [vmem:[%s1408 + $0x7c] sm:$0xf]
        %v1431 = vld [vmem:[%s1408 + $0x84] sm:$0xf]
        %v1432 = vld [vmem:[%s1408 + $0x88] sm:$0xf]
        %v1433 = vld [vmem:[%s1408 + $0x90] sm:$0xf]
        %v1434 = vld [vmem:[%s1408 + $0x94] sm:$0xf]
        %v1435 = vld [vmem:[%s1408 + $0x9c] sm:$0xf]
        %v1436 = vld [vmem:[%s1408 + $0xa0] sm:$0xf]
        %v1437 = vld [vmem:[%s1408 + $0xa8] sm:$0xf]
        %v1438 = vld [vmem:[%s1408 + $0xac] sm:$0xf]
        %v1439 = vld [vmem:[%s1408 + $0xb4] sm:$0xf]
        %v1440 = vld [vmem:[%s1408 + $0xb8] sm:$0xf]
        %v1441 = vunpack.c.l.bf16 %v1409
        %v1442 = vunpack.c.l.bf16 %v1410
        %v1443 = vunpack.c.l.bf16 %v1411
        %v1444 = vunpack.c.l.bf16 %v1412
        %v1445 = vunpack.c.l.bf16 %v1413
        %v1446 = vunpack.c.l.bf16 %v1414
        %v1447 = vunpack.c.l.bf16 %v1415
        %v1448 = vunpack.c.l.bf16 %v1416
        %v1449 = vunpack.c.l.bf16 %v1417
        %v1450 = vunpack.c.l.bf16 %v1418
        %v1451 = vunpack.c.l.bf16 %v1419
        %v1452 = vunpack.c.l.bf16 %v1420
        %v1453 = vunpack.c.l.bf16 %v1421
        %v1454 = vunpack.c.l.bf16 %v1422
        %v1455 = vunpack.c.l.bf16 %v1423
        %v1456 = vunpack.c.l.bf16 %v1424
        %v1457 = vunpack.c.l.bf16 %v1425
        %v1458 = vunpack.c.l.bf16 %v1426
        %v1459 = vunpack.c.l.bf16 %v1427
        %v1460 = vunpack.c.l.bf16 %v1428
        %v1461 = vunpack.c.l.bf16 %v1429
        %v1462 = vunpack.c.l.bf16 %v1430
        %v1463 = vunpack.c.l.bf16 %v1431
        %v1464 = vunpack.c.l.bf16 %v1432
        %v1465 = vunpack.c.l.bf16 %v1433
        %v1466 = vunpack.c.l.bf16 %v1434
        %v1467 = vunpack.c.l.bf16 %v1435
        %v1468 = vunpack.c.l.bf16 %v1436
        %v1469 = vunpack.c.l.bf16 %v1437
        %v1470 = vunpack.c.l.bf16 %v1438
        %v1471 = vunpack.c.l.bf16 %v1439
        %v1472 = vunpack.c.l.bf16 %v1440
        %s1473 = scalar_lea.vmem %s207, 3
        %v1474 = vld [vmem:[%s1473] sm:$0x1]
        %v1475 = vunpack.c.l.bf16 %v1474
        %1477 = vset.pattern.permute.xlu0 0
        %1478 = vperm.xlu0 %1477, %v1441
        %v1479 = vpop.permute.xlu0 %1478
        %1482 = vset.pattern.permute.xlu0 0
        %1483 = vperm.xlu0 %1482, %v1442
        %v1484 = vpop.permute.xlu0 %1483
        %1487 = vset.pattern.permute.xlu0 0
        %1488 = vperm.xlu0 %1487, %v1443
        %v1489 = vpop.permute.xlu0 %1488
        %1492 = vset.pattern.permute.xlu0 0
        %1493 = vperm.xlu0 %1492, %v1444
        %v1494 = vpop.permute.xlu0 %1493
        %1497 = vset.pattern.permute.xlu0 0
        %1498 = vperm.xlu0 %1497, %v1445
        %v1499 = vpop.permute.xlu0 %1498
        %1502 = vset.pattern.permute.xlu0 0
        %1503 = vperm.xlu0 %1502, %v1446
        %v1504 = vpop.permute.xlu0 %1503
        %1507 = vset.pattern.permute.xlu0 0
        %1508 = vperm.xlu0 %1507, %v1447
        %v1509 = vpop.permute.xlu0 %1508
        %1512 = vset.pattern.permute.xlu0 0
        %1513 = vperm.xlu0 %1512, %v1448
        %v1514 = vpop.permute.xlu0 %1513
        %1517 = vset.pattern.permute.xlu0 0
        %1518 = vperm.xlu0 %1517, %v1449
        %v1519 = vpop.permute.xlu0 %1518
        %1522 = vset.pattern.permute.xlu0 0
        %1523 = vperm.xlu0 %1522, %v1450
        %v1524 = vpop.permute.xlu0 %1523
        %1527 = vset.pattern.permute.xlu0 0
        %1528 = vperm.xlu0 %1527, %v1451
        %v1529 = vpop.permute.xlu0 %1528
        %1532 = vset.pattern.permute.xlu0 0
        %1533 = vperm.xlu0 %1532, %v1452
        %v1534 = vpop.permute.xlu0 %1533
        %1537 = vset.pattern.permute.xlu0 0
        %1538 = vperm.xlu0 %1537, %v1453
        %v1539 = vpop.permute.xlu0 %1538
        %1542 = vset.pattern.permute.xlu0 0
        %1543 = vperm.xlu0 %1542, %v1454
        %v1544 = vpop.permute.xlu0 %1543
        %1547 = vset.pattern.permute.xlu0 0
        %1548 = vperm.xlu0 %1547, %v1455
        %v1549 = vpop.permute.xlu0 %1548
        %1552 = vset.pattern.permute.xlu0 0
        %1553 = vperm.xlu0 %1552, %v1456
        %v1554 = vpop.permute.xlu0 %1553
        %1557 = vset.pattern.permute.xlu0 0
        %1558 = vperm.xlu0 %1557, %v1457
        %v1559 = vpop.permute.xlu0 %1558
        %1562 = vset.pattern.permute.xlu0 0
        %1563 = vperm.xlu0 %1562, %v1458
        %v1564 = vpop.permute.xlu0 %1563
        %1567 = vset.pattern.permute.xlu0 0
        %1568 = vperm.xlu0 %1567, %v1459
        %v1569 = vpop.permute.xlu0 %1568
        %1572 = vset.pattern.permute.xlu0 0
        %1573 = vperm.xlu0 %1572, %v1460
        %v1574 = vpop.permute.xlu0 %1573
        %1577 = vset.pattern.permute.xlu0 0
        %1578 = vperm.xlu0 %1577, %v1461
        %v1579 = vpop.permute.xlu0 %1578
        %1582 = vset.pattern.permute.xlu0 0
        %1583 = vperm.xlu0 %1582, %v1462
        %v1584 = vpop.permute.xlu0 %1583
        %1587 = vset.pattern.permute.xlu0 0
        %1588 = vperm.xlu0 %1587, %v1463
        %v1589 = vpop.permute.xlu0 %1588
        %1592 = vset.pattern.permute.xlu0 0
        %1593 = vperm.xlu0 %1592, %v1464
        %v1594 = vpop.permute.xlu0 %1593
        %1597 = vset.pattern.permute.xlu0 0
        %1598 = vperm.xlu0 %1597, %v1465
        %v1599 = vpop.permute.xlu0 %1598
        %1602 = vset.pattern.permute.xlu0 0
        %1603 = vperm.xlu0 %1602, %v1466
        %v1604 = vpop.permute.xlu0 %1603
        %1607 = vset.pattern.permute.xlu0 0
        %1608 = vperm.xlu0 %1607, %v1467
        %v1609 = vpop.permute.xlu0 %1608
        %1612 = vset.pattern.permute.xlu0 0
        %1613 = vperm.xlu0 %1612, %v1468
        %v1614 = vpop.permute.xlu0 %1613
        %1617 = vset.pattern.permute.xlu0 0
        %1618 = vperm.xlu0 %1617, %v1469
        %v1619 = vpop.permute.xlu0 %1618
        %1622 = vset.pattern.permute.xlu0 0
        %1623 = vperm.xlu0 %1622, %v1470
        %v1624 = vpop.permute.xlu0 %1623
        %1627 = vset.pattern.permute.xlu0 0
        %1628 = vperm.xlu0 %1627, %v1471
        %v1629 = vpop.permute.xlu0 %1628
        %1632 = vset.pattern.permute.xlu0 0
        %1633 = vperm.xlu0 %1632, %v1472
        %v1634 = vpop.permute.xlu0 %1633
        %v1636 = vperm.slane %v1475, 0
        %v1637 = vmul.f32 %v1479, %v1636
        %v1638 = vmul.f32 %v1484, %v1636
        %v1639 = vmul.f32 %v1489, %v1636
        %v1640 = vmul.f32 %v1494, %v1636
        %v1641 = vmul.f32 %v1499, %v1636
        %v1642 = vmul.f32 %v1504, %v1636
        %v1643 = vmul.f32 %v1509, %v1636
        %v1644 = vmul.f32 %v1514, %v1636
        %v1645 = vmul.f32 %v1519, %v1636
        %v1646 = vmul.f32 %v1524, %v1636
        %v1647 = vmul.f32 %v1529, %v1636
        %v1648 = vmul.f32 %v1534, %v1636
        %v1649 = vmul.f32 %v1539, %v1636
        %v1650 = vmul.f32 %v1544, %v1636
        %v1651 = vmul.f32 %v1549, %v1636
        %v1652 = vmul.f32 %v1554, %v1636
        %v1653 = vmul.f32 %v1559, %v1636
        %v1654 = vmul.f32 %v1564, %v1636
        %v1655 = vmul.f32 %v1569, %v1636
        %v1656 = vmul.f32 %v1574, %v1636
        %v1657 = vmul.f32 %v1579, %v1636
        %v1658 = vmul.f32 %v1584, %v1636
        %v1659 = vmul.f32 %v1589, %v1636
        %v1660 = vmul.f32 %v1594, %v1636
        %v1661 = vmul.f32 %v1599, %v1636
        %v1662 = vmul.f32 %v1604, %v1636
        %v1663 = vmul.f32 %v1609, %v1636
        %v1664 = vmul.f32 %v1614, %v1636
        %v1665 = vmul.f32 %v1619, %v1636
        %v1666 = vmul.f32 %v1624, %v1636
        %v1667 = vmul.f32 %v1629, %v1636
        %v1668 = vmul.f32 %v1634, %v1636
        %v1669 = vadd.f32 %v1376, %v1637
        %v1670 = vadd.f32 %v1377, %v1638
        %v1671 = vadd.f32 %v1378, %v1639
        %v1672 = vadd.f32 %v1379, %v1640
        %v1673 = vadd.f32 %v1380, %v1641
        %v1674 = vadd.f32 %v1381, %v1642
        %v1675 = vadd.f32 %v1382, %v1643
        %v1676 = vadd.f32 %v1383, %v1644
        %v1677 = vadd.f32 %v1384, %v1645
        %v1678 = vadd.f32 %v1385, %v1646
        %v1679 = vadd.f32 %v1386, %v1647
        %v1680 = vadd.f32 %v1387, %v1648
        %v1681 = vadd.f32 %v1388, %v1649
        %v1682 = vadd.f32 %v1389, %v1650
        %v1683 = vadd.f32 %v1390, %v1651
        %v1684 = vadd.f32 %v1391, %v1652
        %v1685 = vadd.f32 %v1392, %v1653
        %v1686 = vadd.f32 %v1393, %v1654
        %v1687 = vadd.f32 %v1394, %v1655
        %v1688 = vadd.f32 %v1395, %v1656
        %v1689 = vadd.f32 %v1396, %v1657
        %v1690 = vadd.f32 %v1397, %v1658
        %v1691 = vadd.f32 %v1398, %v1659
        %v1692 = vadd.f32 %v1399, %v1660
        %v1693 = vadd.f32 %v1400, %v1661
        %v1694 = vadd.f32 %v1401, %v1662
        %v1695 = vadd.f32 %v1402, %v1663
        %v1696 = vadd.f32 %v1403, %v1664
        %v1697 = vadd.f32 %v1404, %v1665
        %v1698 = vadd.f32 %v1405, %v1666
        %v1699 = vadd.f32 %v1406, %v1667
        %v1700 = vadd.f32 %v1407, %v1668
        %v1701 = vld [vmem:[%s1408] sm:$0xf]
        %v1702 = vld [vmem:[%s1408 + $0x4] sm:$0xf]
        %v1703 = vld [vmem:[%s1408 + $0x8] sm:$0x1]
        %v1704 = vld [vmem:[%s1408 + $0xc] sm:$0xf]
        %v1705 = vld [vmem:[%s1408 + $0x10] sm:$0xf]
        %v1706 = vld [vmem:[%s1408 + $0x14] sm:$0x1]
        %v1707 = vld [vmem:[%s1408 + $0x18] sm:$0xf]
        %v1708 = vld [vmem:[%s1408 + $0x1c] sm:$0xf]
        %v1709 = vld [vmem:[%s1408 + $0x20] sm:$0x1]
        %v1710 = vld [vmem:[%s1408 + $0x24] sm:$0xf]
        %v1711 = vld [vmem:[%s1408 + $0x28] sm:$0xf]
        %v1712 = vld [vmem:[%s1408 + $0x2c] sm:$0x1]
        %v1713 = vld [vmem:[%s1408 + $0x30] sm:$0xf]
        %v1714 = vld [vmem:[%s1408 + $0x34] sm:$0xf]
        %v1715 = vld [vmem:[%s1408 + $0x38] sm:$0x1]
        %v1716 = vld [vmem:[%s1408 + $0x3c] sm:$0xf]
        %v1717 = vld [vmem:[%s1408 + $0x40] sm:$0xf]
        %v1718 = vld [vmem:[%s1408 + $0x44] sm:$0x1]
        %v1719 = vld [vmem:[%s1408 + $0x48] sm:$0xf]
        %v1720 = vld [vmem:[%s1408 + $0x4c] sm:$0xf]
        %v1721 = vld [vmem:[%s1408 + $0x50] sm:$0x1]
        %v1722 = vld [vmem:[%s1408 + $0x54] sm:$0xf]
        %v1723 = vld [vmem:[%s1408 + $0x58] sm:$0xf]
        %v1724 = vld [vmem:[%s1408 + $0x5c] sm:$0x1]
        %v1725 = vld [vmem:[%s1408 + $0x60] sm:$0xf]
        %v1726 = vld [vmem:[%s1408 + $0x64] sm:$0xf]
        %v1727 = vld [vmem:[%s1408 + $0x68] sm:$0x1]
        %v1728 = vld [vmem:[%s1408 + $0x6c] sm:$0xf]
        %v1729 = vld [vmem:[%s1408 + $0x70] sm:$0xf]
        %v1730 = vld [vmem:[%s1408 + $0x74] sm:$0x1]
        %v1731 = vld [vmem:[%s1408 + $0x78] sm:$0xf]
        %v1732 = vld [vmem:[%s1408 + $0x7c] sm:$0xf]
        %v1733 = vld [vmem:[%s1408 + $0x80] sm:$0x1]
        %v1734 = vld [vmem:[%s1408 + $0x84] sm:$0xf]
        %v1735 = vld [vmem:[%s1408 + $0x88] sm:$0xf]
        %v1736 = vld [vmem:[%s1408 + $0x8c] sm:$0x1]
        %v1737 = vld [vmem:[%s1408 + $0x90] sm:$0xf]
        %v1738 = vld [vmem:[%s1408 + $0x94] sm:$0xf]
        %v1739 = vld [vmem:[%s1408 + $0x98] sm:$0x1]
        %v1740 = vld [vmem:[%s1408 + $0x9c] sm:$0xf]
        %v1741 = vld [vmem:[%s1408 + $0xa0] sm:$0xf]
        %v1742 = vld [vmem:[%s1408 + $0xa4] sm:$0x1]
        %v1743 = vld [vmem:[%s1408 + $0xa8] sm:$0xf]
        %v1744 = vld [vmem:[%s1408 + $0xac] sm:$0xf]
        %v1745 = vld [vmem:[%s1408 + $0xb0] sm:$0x1]
        %v1746 = vld [vmem:[%s1408 + $0xb4] sm:$0xf]
        %v1747 = vld [vmem:[%s1408 + $0xb8] sm:$0xf]
        %v1748 = vld [vmem:[%s1408 + $0xbc] sm:$0x1]
        %v1749 = vunpack.c.l.bf16 %v1701
        %v1750 = vunpack.c.l.bf16 %v1702
        %v1751 = vunpack.c.l.bf16 %v1703
        %v1752 = vunpack.c.l.bf16 %v1704
        %v1753 = vunpack.c.l.bf16 %v1705
        %v1754 = vunpack.c.l.bf16 %v1706
        %v1755 = vunpack.c.l.bf16 %v1707
        %v1756 = vunpack.c.l.bf16 %v1708
        %v1757 = vunpack.c.l.bf16 %v1709
        %v1758 = vunpack.c.l.bf16 %v1710
        %v1759 = vunpack.c.l.bf16 %v1711
        %v1760 = vunpack.c.l.bf16 %v1712
        %v1761 = vunpack.c.l.bf16 %v1713
        %v1762 = vunpack.c.l.bf16 %v1714
        %v1763 = vunpack.c.l.bf16 %v1715
        %v1764 = vunpack.c.l.bf16 %v1716
        %v1765 = vunpack.c.l.bf16 %v1717
        %v1766 = vunpack.c.l.bf16 %v1718
        %v1767 = vunpack.c.l.bf16 %v1719
        %v1768 = vunpack.c.l.bf16 %v1720
        %v1769 = vunpack.c.l.bf16 %v1721
        %v1770 = vunpack.c.l.bf16 %v1722
        %v1771 = vunpack.c.l.bf16 %v1723
        %v1772 = vunpack.c.l.bf16 %v1724
        %v1773 = vunpack.c.l.bf16 %v1725
        %v1774 = vunpack.c.l.bf16 %v1726
        %v1775 = vunpack.c.l.bf16 %v1727
        %v1776 = vunpack.c.l.bf16 %v1728
        %v1777 = vunpack.c.l.bf16 %v1729
        %v1778 = vunpack.c.l.bf16 %v1730
        %v1779 = vunpack.c.l.bf16 %v1731
        %v1780 = vunpack.c.l.bf16 %v1732
        %v1781 = vunpack.c.l.bf16 %v1733
        %v1782 = vunpack.c.l.bf16 %v1734
        %v1783 = vunpack.c.l.bf16 %v1735
        %v1784 = vunpack.c.l.bf16 %v1736
        %v1785 = vunpack.c.l.bf16 %v1737
        %v1786 = vunpack.c.l.bf16 %v1738
        %v1787 = vunpack.c.l.bf16 %v1739
        %v1788 = vunpack.c.l.bf16 %v1740
        %v1789 = vunpack.c.l.bf16 %v1741
        %v1790 = vunpack.c.l.bf16 %v1742
        %v1791 = vunpack.c.l.bf16 %v1743
        %v1792 = vunpack.c.l.bf16 %v1744
        %v1793 = vunpack.c.l.bf16 %v1745
        %v1794 = vunpack.c.l.bf16 %v1746
        %v1795 = vunpack.c.l.bf16 %v1747
        %v1796 = vunpack.c.l.bf16 %v1748
        %s1797 = scalar_lea.vmem %s207, 4
        %v1798 = vld [vmem:[%s1797] sm:$0x1]
        %v1799 = vunpack.c.l.bf16 %v1798
        %1801 = vset.pattern.permute.xlu0 0
        %1802 = vperm.xlu0 %1801, %v1749
        %v1803 = vpop.permute.xlu0 %1802
        %1806 = vset.pattern.permute.xlu0 0
        %1807 = vperm.xlu0 %1806, %v1750
        %v1808 = vpop.permute.xlu0 %1807
        %1811 = vset.pattern.permute.xlu0 0
        %1812 = vperm.xlu0 %1811, %v1751
        %v1813 = vpop.permute.xlu0 %1812
        %1816 = vset.pattern.permute.xlu0 0
        %1817 = vperm.xlu0 %1816, %v1752
        %v1818 = vpop.permute.xlu0 %1817
        %1821 = vset.pattern.permute.xlu0 0
        %1822 = vperm.xlu0 %1821, %v1753
        %v1823 = vpop.permute.xlu0 %1822
        %1826 = vset.pattern.permute.xlu0 0
        %1827 = vperm.xlu0 %1826, %v1754
        %v1828 = vpop.permute.xlu0 %1827
        %1831 = vset.pattern.permute.xlu0 0
        %1832 = vperm.xlu0 %1831, %v1755
        %v1833 = vpop.permute.xlu0 %1832
        %1836 = vset.pattern.permute.xlu0 0
        %1837 = vperm.xlu0 %1836, %v1756
        %v1838 = vpop.permute.xlu0 %1837
        %1841 = vset.pattern.permute.xlu0 0
        %1842 = vperm.xlu0 %1841, %v1757
        %v1843 = vpop.permute.xlu0 %1842
        %1846 = vset.pattern.permute.xlu0 0
        %1847 = vperm.xlu0 %1846, %v1758
        %v1848 = vpop.permute.xlu0 %1847
        %1851 = vset.pattern.permute.xlu0 0
        %1852 = vperm.xlu0 %1851, %v1759
        %v1853 = vpop.permute.xlu0 %1852
        %1856 = vset.pattern.permute.xlu0 0
        %1857 = vperm.xlu0 %1856, %v1760
        %v1858 = vpop.permute.xlu0 %1857
        %1861 = vset.pattern.permute.xlu0 0
        %1862 = vperm.xlu0 %1861, %v1761
        %v1863 = vpop.permute.xlu0 %1862
        %1866 = vset.pattern.permute.xlu0 0
        %1867 = vperm.xlu0 %1866, %v1762
        %v1868 = vpop.permute.xlu0 %1867
        %1871 = vset.pattern.permute.xlu0 0
        %1872 = vperm.xlu0 %1871, %v1763
        %v1873 = vpop.permute.xlu0 %1872
        %1876 = vset.pattern.permute.xlu0 0
        %1877 = vperm.xlu0 %1876, %v1764
        %v1878 = vpop.permute.xlu0 %1877
        %1881 = vset.pattern.permute.xlu0 0
        %1882 = vperm.xlu0 %1881, %v1765
        %v1883 = vpop.permute.xlu0 %1882
        %1886 = vset.pattern.permute.xlu0 0
        %1887 = vperm.xlu0 %1886, %v1766
        %v1888 = vpop.permute.xlu0 %1887
        %1891 = vset.pattern.permute.xlu0 0
        %1892 = vperm.xlu0 %1891, %v1767
        %v1893 = vpop.permute.xlu0 %1892
        %1896 = vset.pattern.permute.xlu0 0
        %1897 = vperm.xlu0 %1896, %v1768
        %v1898 = vpop.permute.xlu0 %1897
        %1901 = vset.pattern.permute.xlu0 0
        %1902 = vperm.xlu0 %1901, %v1769
        %v1903 = vpop.permute.xlu0 %1902
        %1906 = vset.pattern.permute.xlu0 0
        %1907 = vperm.xlu0 %1906, %v1770
        %v1908 = vpop.permute.xlu0 %1907
        %1911 = vset.pattern.permute.xlu0 0
        %1912 = vperm.xlu0 %1911, %v1771
        %v1913 = vpop.permute.xlu0 %1912
        %1916 = vset.pattern.permute.xlu0 0
        %1917 = vperm.xlu0 %1916, %v1772
        %v1918 = vpop.permute.xlu0 %1917
        %1921 = vset.pattern.permute.xlu0 0
        %1922 = vperm.xlu0 %1921, %v1773
        %v1923 = vpop.permute.xlu0 %1922
        %1926 = vset.pattern.permute.xlu0 0
        %1927 = vperm.xlu0 %1926, %v1774
        %v1928 = vpop.permute.xlu0 %1927
        %1931 = vset.pattern.permute.xlu0 0
        %1932 = vperm.xlu0 %1931, %v1775
        %v1933 = vpop.permute.xlu0 %1932
        %1936 = vset.pattern.permute.xlu0 0
        %1937 = vperm.xlu0 %1936, %v1776
        %v1938 = vpop.permute.xlu0 %1937
        %1941 = vset.pattern.permute.xlu0 0
        %1942 = vperm.xlu0 %1941, %v1777
        %v1943 = vpop.permute.xlu0 %1942
        %1946 = vset.pattern.permute.xlu0 0
        %1947 = vperm.xlu0 %1946, %v1778
        %v1948 = vpop.permute.xlu0 %1947
        %1951 = vset.pattern.permute.xlu0 0
        %1952 = vperm.xlu0 %1951, %v1779
        %v1953 = vpop.permute.xlu0 %1952
        %1956 = vset.pattern.permute.xlu0 0
        %1957 = vperm.xlu0 %1956, %v1780
        %v1958 = vpop.permute.xlu0 %1957
        %1961 = vset.pattern.permute.xlu0 0
        %1962 = vperm.xlu0 %1961, %v1781
        %v1963 = vpop.permute.xlu0 %1962
        %1966 = vset.pattern.permute.xlu0 0
        %1967 = vperm.xlu0 %1966, %v1782
        %v1968 = vpop.permute.xlu0 %1967
        %1971 = vset.pattern.permute.xlu0 0
        %1972 = vperm.xlu0 %1971, %v1783
        %v1973 = vpop.permute.xlu0 %1972
        %1976 = vset.pattern.permute.xlu0 0
        %1977 = vperm.xlu0 %1976, %v1784
        %v1978 = vpop.permute.xlu0 %1977
        %1981 = vset.pattern.permute.xlu0 0
        %1982 = vperm.xlu0 %1981, %v1785
        %v1983 = vpop.permute.xlu0 %1982
        %1986 = vset.pattern.permute.xlu0 0
        %1987 = vperm.xlu0 %1986, %v1786
        %v1988 = vpop.permute.xlu0 %1987
        %1991 = vset.pattern.permute.xlu0 0
        %1992 = vperm.xlu0 %1991, %v1787
        %v1993 = vpop.permute.xlu0 %1992
        %1996 = vset.pattern.permute.xlu0 0
        %1997 = vperm.xlu0 %1996, %v1788
        %v1998 = vpop.permute.xlu0 %1997
        %2001 = vset.pattern.permute.xlu0 0
        %2002 = vperm.xlu0 %2001, %v1789
        %v2003 = vpop.permute.xlu0 %2002
        %2006 = vset.pattern.permute.xlu0 0
        %2007 = vperm.xlu0 %2006, %v1790
        %v2008 = vpop.permute.xlu0 %2007
        %2011 = vset.pattern.permute.xlu0 0
        %2012 = vperm.xlu0 %2011, %v1791
        %v2013 = vpop.permute.xlu0 %2012
        %2016 = vset.pattern.permute.xlu0 0
        %2017 = vperm.xlu0 %2016, %v1792
        %v2018 = vpop.permute.xlu0 %2017
        %2021 = vset.pattern.permute.xlu0 0
        %2022 = vperm.xlu0 %2021, %v1793
        %v2023 = vpop.permute.xlu0 %2022
        %2026 = vset.pattern.permute.xlu0 0
        %2027 = vperm.xlu0 %2026, %v1794
        %v2028 = vpop.permute.xlu0 %2027
        %2031 = vset.pattern.permute.xlu0 0
        %2032 = vperm.xlu0 %2031, %v1795
        %v2033 = vpop.permute.xlu0 %2032
        %2036 = vset.pattern.permute.xlu0 0
        %2037 = vperm.xlu0 %2036, %v1796
        %v2038 = vpop.permute.xlu0 %2037
        %v2040 = vperm.slane %v1799, 0
        %v2041 = vmul.f32 %v1803, %v2040
        %v2042 = vmul.f32 %v1808, %v2040
        %v2043 = vmul.f32 %v1813, %v2040
        %v2044 = vmul.f32 %v1818, %v2040
        %v2045 = vmul.f32 %v1823, %v2040
        %v2046 = vmul.f32 %v1828, %v2040
        %v2047 = vmul.f32 %v1833, %v2040
        %v2048 = vmul.f32 %v1838, %v2040
        %v2049 = vmul.f32 %v1843, %v2040
        %v2050 = vmul.f32 %v1848, %v2040
        %v2051 = vmul.f32 %v1853, %v2040
        %v2052 = vmul.f32 %v1858, %v2040
        %v2053 = vmul.f32 %v1863, %v2040
        %v2054 = vmul.f32 %v1868, %v2040
        %v2055 = vmul.f32 %v1873, %v2040
        %v2056 = vmul.f32 %v1878, %v2040
        %v2057 = vmul.f32 %v1883, %v2040
        %v2058 = vmul.f32 %v1888, %v2040
        %v2059 = vmul.f32 %v1893, %v2040
        %v2060 = vmul.f32 %v1898, %v2040
        %v2061 = vmul.f32 %v1903, %v2040
        %v2062 = vmul.f32 %v1908, %v2040
        %v2063 = vmul.f32 %v1913, %v2040
        %v2064 = vmul.f32 %v1918, %v2040
        %v2065 = vmul.f32 %v1923, %v2040
        %v2066 = vmul.f32 %v1928, %v2040
        %v2067 = vmul.f32 %v1933, %v2040
        %v2068 = vmul.f32 %v1938, %v2040
        %v2069 = vmul.f32 %v1943, %v2040
        %v2070 = vmul.f32 %v1948, %v2040
        %v2071 = vmul.f32 %v1953, %v2040
        %v2072 = vmul.f32 %v1958, %v2040
        %v2073 = vmul.f32 %v1963, %v2040
        %v2074 = vmul.f32 %v1968, %v2040
        %v2075 = vmul.f32 %v1973, %v2040
        %v2076 = vmul.f32 %v1978, %v2040
        %v2077 = vmul.f32 %v1983, %v2040
        %v2078 = vmul.f32 %v1988, %v2040
        %v2079 = vmul.f32 %v1993, %v2040
        %v2080 = vmul.f32 %v1998, %v2040
        %v2081 = vmul.f32 %v2003, %v2040
        %v2082 = vmul.f32 %v2008, %v2040
        %v2083 = vmul.f32 %v2013, %v2040
        %v2084 = vmul.f32 %v2018, %v2040
        %v2085 = vmul.f32 %v2023, %v2040
        %v2086 = vmul.f32 %v2028, %v2040
        %v2087 = vmul.f32 %v2033, %v2040
        %v2088 = vmul.f32 %v2038, %v2040
        %v2137 = vrot.slane %v2041, 1
        %v2138 = vrot.slane %v2042, 1
        %v2139 = vsel %vm906, %v2137, %v2138
        %v2140 = vrot.slane %v2043, 1
        %v2141 = vsel %vm906, %v2138, %v2140
        %v2142 = vrot.slane %v2044, 1
        %v2143 = vrot.slane %v2045, 1
        %v2144 = vsel %vm906, %v2142, %v2143
        %v2145 = vrot.slane %v2046, 1
        %v2146 = vsel %vm906, %v2143, %v2145
        %v2147 = vrot.slane %v2047, 1
        %v2148 = vrot.slane %v2048, 1
        %v2149 = vsel %vm906, %v2147, %v2148
        %v2150 = vrot.slane %v2049, 1
        %v2151 = vsel %vm906, %v2148, %v2150
        %v2152 = vrot.slane %v2050, 1
        %v2153 = vrot.slane %v2051, 1
        %v2154 = vsel %vm906, %v2152, %v2153
        %v2155 = vrot.slane %v2052, 1
        %v2156 = vsel %vm906, %v2153, %v2155
        %v2157 = vrot.slane %v2053, 1
        %v2158 = vrot.slane %v2054, 1
        %v2159 = vsel %vm906, %v2157, %v2158
        %v2160 = vrot.slane %v2055, 1
        %v2161 = vsel %vm906, %v2158, %v2160
        %v2162 = vrot.slane %v2056, 1
        %v2163 = vrot.slane %v2057, 1
        %v2164 = vsel %vm906, %v2162, %v2163
        %v2165 = vrot.slane %v2058, 1
        %v2166 = vsel %vm906, %v2163, %v2165
        %v2167 = vrot.slane %v2059, 1
        %v2168 = vrot.slane %v2060, 1
        %v2169 = vsel %vm906, %v2167, %v2168
        %v2170 = vrot.slane %v2061, 1
        %v2171 = vsel %vm906, %v2168, %v2170
        %v2172 = vrot.slane %v2062, 1
        %v2173 = vrot.slane %v2063, 1
        %v2174 = vsel %vm906, %v2172, %v2173
        %v2175 = vrot.slane %v2064, 1
        %v2176 = vsel %vm906, %v2173, %v2175
        %v2177 = vrot.slane %v2065, 1
        %v2178 = vrot.slane %v2066, 1
        %v2179 = vsel %vm906, %v2177, %v2178
        %v2180 = vrot.slane %v2067, 1
        %v2181 = vsel %vm906, %v2178, %v2180
        %v2182 = vrot.slane %v2068, 1
        %v2183 = vrot.slane %v2069, 1
        %v2184 = vsel %vm906, %v2182, %v2183
        %v2185 = vrot.slane %v2070, 1
        %v2186 = vsel %vm906, %v2183, %v2185
        %v2187 = vrot.slane %v2071, 1
        %v2188 = vrot.slane %v2072, 1
        %v2189 = vsel %vm906, %v2187, %v2188
        %v2190 = vrot.slane %v2073, 1
        %v2191 = vsel %vm906, %v2188, %v2190
        %v2192 = vrot.slane %v2074, 1
        %v2193 = vrot.slane %v2075, 1
        %v2194 = vsel %vm906, %v2192, %v2193
        %v2195 = vrot.slane %v2076, 1
        %v2196 = vsel %vm906, %v2193, %v2195
        %v2197 = vrot.slane %v2077, 1
        %v2198 = vrot.slane %v2078, 1
        %v2199 = vsel %vm906, %v2197, %v2198
        %v2200 = vrot.slane %v2079, 1
        %v2201 = vsel %vm906, %v2198, %v2200
        %v2202 = vrot.slane %v2080, 1
        %v2203 = vrot.slane %v2081, 1
        %v2204 = vsel %vm906, %v2202, %v2203
        %v2205 = vrot.slane %v2082, 1
        %v2206 = vsel %vm906, %v2203, %v2205
        %v2207 = vrot.slane %v2083, 1
        %v2208 = vrot.slane %v2084, 1
        %v2209 = vsel %vm906, %v2207, %v2208
        %v2210 = vrot.slane %v2085, 1
        %v2211 = vsel %vm906, %v2208, %v2210
        %v2212 = vrot.slane %v2086, 1
        %v2213 = vrot.slane %v2087, 1
        %v2214 = vsel %vm906, %v2212, %v2213
        %v2215 = vrot.slane %v2088, 1
        %v2216 = vsel %vm906, %v2213, %v2215
        %v2249 = vadd.f32 %v1669, %v2139
        %v2250 = vadd.f32 %v1670, %v2141
        %v2251 = vadd.f32 %v1671, %v2144
        %v2252 = vadd.f32 %v1672, %v2146
        %v2253 = vadd.f32 %v1673, %v2149
        %v2254 = vadd.f32 %v1674, %v2151
        %v2255 = vadd.f32 %v1675, %v2154
        %v2256 = vadd.f32 %v1676, %v2156
        %v2257 = vadd.f32 %v1677, %v2159
        %v2258 = vadd.f32 %v1678, %v2161
        %v2259 = vadd.f32 %v1679, %v2164
        %v2260 = vadd.f32 %v1680, %v2166
        %v2261 = vadd.f32 %v1681, %v2169
        %v2262 = vadd.f32 %v1682, %v2171
        %v2263 = vadd.f32 %v1683, %v2174
        %v2264 = vadd.f32 %v1684, %v2176
        %v2265 = vadd.f32 %v1685, %v2179
        %v2266 = vadd.f32 %v1686, %v2181
        %v2267 = vadd.f32 %v1687, %v2184
        %v2268 = vadd.f32 %v1688, %v2186
        %v2269 = vadd.f32 %v1689, %v2189
        %v2270 = vadd.f32 %v1690, %v2191
        %v2271 = vadd.f32 %v1691, %v2194
        %v2272 = vadd.f32 %v1692, %v2196
        %v2273 = vadd.f32 %v1693, %v2199
        %v2274 = vadd.f32 %v1694, %v2201
        %v2275 = vadd.f32 %v1695, %v2204
        %v2276 = vadd.f32 %v1696, %v2206
        %v2277 = vadd.f32 %v1697, %v2209
        %v2278 = vadd.f32 %v1698, %v2211
        %v2279 = vadd.f32 %v1699, %v2214
        %v2280 = vadd.f32 %v1700, %v2216
        %v2281 = vld [vmem:[%s1408] sm:$0xe]
        %v2282 = vld [vmem:[%s1408 + $0xc] sm:$0xe]
        %v2283 = vld [vmem:[%s1408 + $0x18] sm:$0xe]
        %v2284 = vld [vmem:[%s1408 + $0x24] sm:$0xe]
        %v2285 = vld [vmem:[%s1408 + $0x30] sm:$0xe]
        %v2286 = vld [vmem:[%s1408 + $0x3c] sm:$0xe]
        %v2287 = vld [vmem:[%s1408 + $0x48] sm:$0xe]
        %v2288 = vld [vmem:[%s1408 + $0x54] sm:$0xe]
        %v2289 = vld [vmem:[%s1408 + $0x60] sm:$0xe]
        %v2290 = vld [vmem:[%s1408 + $0x6c] sm:$0xe]
        %v2291 = vld [vmem:[%s1408 + $0x78] sm:$0xe]
        %v2292 = vld [vmem:[%s1408 + $0x84] sm:$0xe]
        %v2293 = vld [vmem:[%s1408 + $0x90] sm:$0xe]
        %v2294 = vld [vmem:[%s1408 + $0x9c] sm:$0xe]
        %v2295 = vld [vmem:[%s1408 + $0xa8] sm:$0xe]
        %v2296 = vld [vmem:[%s1408 + $0xb4] sm:$0xe]
        %v2297 = vunpack.c.l.bf16 %v2281
        %v2298 = vunpack.c.l.bf16 %v2282
        %v2299 = vunpack.c.l.bf16 %v2283
        %v2300 = vunpack.c.l.bf16 %v2284
        %v2301 = vunpack.c.l.bf16 %v2285
        %v2302 = vunpack.c.l.bf16 %v2286
        %v2303 = vunpack.c.l.bf16 %v2287
        %v2304 = vunpack.c.l.bf16 %v2288
        %v2305 = vunpack.c.l.bf16 %v2289
        %v2306 = vunpack.c.l.bf16 %v2290
        %v2307 = vunpack.c.l.bf16 %v2291
        %v2308 = vunpack.c.l.bf16 %v2292
        %v2309 = vunpack.c.l.bf16 %v2293
        %v2310 = vunpack.c.l.bf16 %v2294
        %v2311 = vunpack.c.l.bf16 %v2295
        %v2312 = vunpack.c.l.bf16 %v2296
        %s2313 = scalar_lea.vmem %s207, 5
        %v2314 = vld [vmem:[%s2313] sm:$0x1]
        %v2315 = vunpack.c.l.bf16 %v2314
        %2317 = vset.pattern.permute.xlu0 0
        %2318 = vperm.xlu0 %2317, %v2297
        %v2319 = vpop.permute.xlu0 %2318
        %2322 = vset.pattern.permute.xlu0 0
        %2323 = vperm.xlu0 %2322, %v2298
        %v2324 = vpop.permute.xlu0 %2323
        %2327 = vset.pattern.permute.xlu0 0
        %2328 = vperm.xlu0 %2327, %v2299
        %v2329 = vpop.permute.xlu0 %2328
        %2332 = vset.pattern.permute.xlu0 0
        %2333 = vperm.xlu0 %2332, %v2300
        %v2334 = vpop.permute.xlu0 %2333
        %2337 = vset.pattern.permute.xlu0 0
        %2338 = vperm.xlu0 %2337, %v2301
        %v2339 = vpop.permute.xlu0 %2338
        %2342 = vset.pattern.permute.xlu0 0
        %2343 = vperm.xlu0 %2342, %v2302
        %v2344 = vpop.permute.xlu0 %2343
        %2347 = vset.pattern.permute.xlu0 0
        %2348 = vperm.xlu0 %2347, %v2303
        %v2349 = vpop.permute.xlu0 %2348
        %2352 = vset.pattern.permute.xlu0 0
        %2353 = vperm.xlu0 %2352, %v2304
        %v2354 = vpop.permute.xlu0 %2353
        %2357 = vset.pattern.permute.xlu0 0
        %2358 = vperm.xlu0 %2357, %v2305
        %v2359 = vpop.permute.xlu0 %2358
        %2362 = vset.pattern.permute.xlu0 0
        %2363 = vperm.xlu0 %2362, %v2306
        %v2364 = vpop.permute.xlu0 %2363
        %2367 = vset.pattern.permute.xlu0 0
        %2368 = vperm.xlu0 %2367, %v2307
        %v2369 = vpop.permute.xlu0 %2368
        %2372 = vset.pattern.permute.xlu0 0
        %2373 = vperm.xlu0 %2372, %v2308
        %v2374 = vpop.permute.xlu0 %2373
        %2377 = vset.pattern.permute.xlu0 0
        %2378 = vperm.xlu0 %2377, %v2309
        %v2379 = vpop.permute.xlu0 %2378
        %2382 = vset.pattern.permute.xlu0 0
        %2383 = vperm.xlu0 %2382, %v2310
        %v2384 = vpop.permute.xlu0 %2383
        %2387 = vset.pattern.permute.xlu0 0
        %2388 = vperm.xlu0 %2387, %v2311
        %v2389 = vpop.permute.xlu0 %2388
        %2392 = vset.pattern.permute.xlu0 0
        %2393 = vperm.xlu0 %2392, %v2312
        %v2394 = vpop.permute.xlu0 %2393
        %v2396 = vperm.slane %v2315, 0
        %v2397 = vmul.f32 %v2319, %v2396
        %v2398 = vmul.f32 %v1808, %v2396
        %v2399 = vmul.f32 %v1813, %v2396
        %v2400 = vmul.f32 %v2324, %v2396
        %v2401 = vmul.f32 %v1823, %v2396
        %v2402 = vmul.f32 %v1828, %v2396
        %v2403 = vmul.f32 %v2329, %v2396
        %v2404 = vmul.f32 %v1838, %v2396
        %v2405 = vmul.f32 %v1843, %v2396
        %v2406 = vmul.f32 %v2334, %v2396
        %v2407 = vmul.f32 %v1853, %v2396
        %v2408 = vmul.f32 %v1858, %v2396
        %v2409 = vmul.f32 %v2339, %v2396
        %v2410 = vmul.f32 %v1868, %v2396
        %v2411 = vmul.f32 %v1873, %v2396
        %v2412 = vmul.f32 %v2344, %v2396
        %v2413 = vmul.f32 %v1883, %v2396
        %v2414 = vmul.f32 %v1888, %v2396
        %v2415 = vmul.f32 %v2349, %v2396
        %v2416 = vmul.f32 %v1898, %v2396
        %v2417 = vmul.f32 %v1903, %v2396
        %v2418 = vmul.f32 %v2354, %v2396
        %v2419 = vmul.f32 %v1913, %v2396
        %v2420 = vmul.f32 %v1918, %v2396
        %v2421 = vmul.f32 %v2359, %v2396
        %v2422 = vmul.f32 %v1928, %v2396
        %v2423 = vmul.f32 %v1933, %v2396
        %v2424 = vmul.f32 %v2364, %v2396
        %v2425 = vmul.f32 %v1943, %v2396
        %v2426 = vmul.f32 %v1948, %v2396
        %v2427 = vmul.f32 %v2369, %v2396
        %v2428 = vmul.f32 %v1958, %v2396
        %v2429 = vmul.f32 %v1963, %v2396
        %v2430 = vmul.f32 %v2374, %v2396
        %v2431 = vmul.f32 %v1973, %v2396
        %v2432 = vmul.f32 %v1978, %v2396
        %v2433 = vmul.f32 %v2379, %v2396
        %v2434 = vmul.f32 %v1988, %v2396
        %v2435 = vmul.f32 %v1993, %v2396
        %v2436 = vmul.f32 %v2384, %v2396
        %v2437 = vmul.f32 %v2003, %v2396
        %v2438 = vmul.f32 %v2008, %v2396
        %v2439 = vmul.f32 %v2389, %v2396
        %v2440 = vmul.f32 %v2018, %v2396
        %v2441 = vmul.f32 %v2023, %v2396
        %v2442 = vmul.f32 %v2394, %v2396
        %v2443 = vmul.f32 %v2033, %v2396
        %v2444 = vmul.f32 %v2038, %v2396
        %v2493 = vrot.slane %v2397, 2
        %v2494 = vrot.slane %v2398, 2
        %v2495 = vsel %vm1263, %v2493, %v2494
        %v2496 = vrot.slane %v2399, 2
        %v2497 = vsel %vm1263, %v2494, %v2496
        %v2498 = vrot.slane %v2400, 2
        %v2499 = vrot.slane %v2401, 2
        %v2500 = vsel %vm1263, %v2498, %v2499
        %v2501 = vrot.slane %v2402, 2
        %v2502 = vsel %vm1263, %v2499, %v2501
        %v2503 = vrot.slane %v2403, 2
        %v2504 = vrot.slane %v2404, 2
        %v2505 = vsel %vm1263, %v2503, %v2504
        %v2506 = vrot.slane %v2405, 2
        %v2507 = vsel %vm1263, %v2504, %v2506
        %v2508 = vrot.slane %v2406, 2
        %v2509 = vrot.slane %v2407, 2
        %v2510 = vsel %vm1263, %v2508, %v2509
        %v2511 = vrot.slane %v2408, 2
        %v2512 = vsel %vm1263, %v2509, %v2511
        %v2513 = vrot.slane %v2409, 2
        %v2514 = vrot.slane %v2410, 2
        %v2515 = vsel %vm1263, %v2513, %v2514
        %v2516 = vrot.slane %v2411, 2
        %v2517 = vsel %vm1263, %v2514, %v2516
        %v2518 = vrot.slane %v2412, 2
        %v2519 = vrot.slane %v2413, 2
        %v2520 = vsel %vm1263, %v2518, %v2519
        %v2521 = vrot.slane %v2414, 2
        %v2522 = vsel %vm1263, %v2519, %v2521
        %v2523 = vrot.slane %v2415, 2
        %v2524 = vrot.slane %v2416, 2
        %v2525 = vsel %vm1263, %v2523, %v2524
        %v2526 = vrot.slane %v2417, 2
        %v2527 = vsel %vm1263, %v2524, %v2526
        %v2528 = vrot.slane %v2418, 2
        %v2529 = vrot.slane %v2419, 2
        %v2530 = vsel %vm1263, %v2528, %v2529
        %v2531 = vrot.slane %v2420, 2
        %v2532 = vsel %vm1263, %v2529, %v2531
        %v2533 = vrot.slane %v2421, 2
        %v2534 = vrot.slane %v2422, 2
        %v2535 = vsel %vm1263, %v2533, %v2534
        %v2536 = vrot.slane %v2423, 2
        %v2537 = vsel %vm1263, %v2534, %v2536
        %v2538 = vrot.slane %v2424, 2
        %v2539 = vrot.slane %v2425, 2
        %v2540 = vsel %vm1263, %v2538, %v2539
        %v2541 = vrot.slane %v2426, 2
        %v2542 = vsel %vm1263, %v2539, %v2541
        %v2543 = vrot.slane %v2427, 2
        %v2544 = vrot.slane %v2428, 2
        %v2545 = vsel %vm1263, %v2543, %v2544
        %v2546 = vrot.slane %v2429, 2
        %v2547 = vsel %vm1263, %v2544, %v2546
        %v2548 = vrot.slane %v2430, 2
        %v2549 = vrot.slane %v2431, 2
        %v2550 = vsel %vm1263, %v2548, %v2549
        %v2551 = vrot.slane %v2432, 2
        %v2552 = vsel %vm1263, %v2549, %v2551
        %v2553 = vrot.slane %v2433, 2
        %v2554 = vrot.slane %v2434, 2
        %v2555 = vsel %vm1263, %v2553, %v2554
        %v2556 = vrot.slane %v2435, 2
        %v2557 = vsel %vm1263, %v2554, %v2556
        %v2558 = vrot.slane %v2436, 2
        %v2559 = vrot.slane %v2437, 2
        %v2560 = vsel %vm1263, %v2558, %v2559
        %v2561 = vrot.slane %v2438, 2
        %v2562 = vsel %vm1263, %v2559, %v2561
        %v2563 = vrot.slane %v2439, 2
        %v2564 = vrot.slane %v2440, 2
        %v2565 = vsel %vm1263, %v2563, %v2564
        %v2566 = vrot.slane %v2441, 2
        %v2567 = vsel %vm1263, %v2564, %v2566
        %v2568 = vrot.slane %v2442, 2
        %v2569 = vrot.slane %v2443, 2
        %v2570 = vsel %vm1263, %v2568, %v2569
        %v2571 = vrot.slane %v2444, 2
        %v2572 = vsel %vm1263, %v2569, %v2571
        %v2605 = vadd.f32 %v2249, %v2495
        %v2606 = vadd.f32 %v2250, %v2497
        %v2607 = vadd.f32 %v2251, %v2500
        %v2608 = vadd.f32 %v2252, %v2502
        %v2609 = vadd.f32 %v2253, %v2505
        %v2610 = vadd.f32 %v2254, %v2507
        %v2611 = vadd.f32 %v2255, %v2510
        %v2612 = vadd.f32 %v2256, %v2512
        %v2613 = vadd.f32 %v2257, %v2515
        %v2614 = vadd.f32 %v2258, %v2517
        %v2615 = vadd.f32 %v2259, %v2520
        %v2616 = vadd.f32 %v2260, %v2522
        %v2617 = vadd.f32 %v2261, %v2525
        %v2618 = vadd.f32 %v2262, %v2527
        %v2619 = vadd.f32 %v2263, %v2530
        %v2620 = vadd.f32 %v2264, %v2532
        %v2621 = vadd.f32 %v2265, %v2535
        %v2622 = vadd.f32 %v2266, %v2537
        %v2623 = vadd.f32 %v2267, %v2540
        %v2624 = vadd.f32 %v2268, %v2542
        %v2625 = vadd.f32 %v2269, %v2545
        %v2626 = vadd.f32 %v2270, %v2547
        %v2627 = vadd.f32 %v2271, %v2550
        %v2628 = vadd.f32 %v2272, %v2552
        %v2629 = vadd.f32 %v2273, %v2555
        %v2630 = vadd.f32 %v2274, %v2557
        %v2631 = vadd.f32 %v2275, %v2560
        %v2632 = vadd.f32 %v2276, %v2562
        %v2633 = vadd.f32 %v2277, %v2565
        %v2634 = vadd.f32 %v2278, %v2567
        %v2635 = vadd.f32 %v2279, %v2570
        %v2636 = vadd.f32 %v2280, %v2572
        %s2637 = scalar_lea.vmem %s204, 24
        %v2638 = vld [vmem:[%s2637] sm:$0xf]
        %v2639 = vld [vmem:[%s2637 + $0x4] sm:$0xf]
        %v2640 = vld [vmem:[%s2637 + $0xc] sm:$0xf]
        %v2641 = vld [vmem:[%s2637 + $0x10] sm:$0xf]
        %v2642 = vld [vmem:[%s2637 + $0x18] sm:$0xf]
        %v2643 = vld [vmem:[%s2637 + $0x1c] sm:$0xf]
        %v2644 = vld [vmem:[%s2637 + $0x24] sm:$0xf]
        %v2645 = vld [vmem:[%s2637 + $0x28] sm:$0xf]
        %v2646 = vld [vmem:[%s2637 + $0x30] sm:$0xf]
        %v2647 = vld [vmem:[%s2637 + $0x34] sm:$0xf]
        %v2648 = vld [vmem:[%s2637 + $0x3c] sm:$0xf]
        %v2649 = vld [vmem:[%s2637 + $0x40] sm:$0xf]
        %v2650 = vld [vmem:[%s2637 + $0x48] sm:$0xf]
        %v2651 = vld [vmem:[%s2637 + $0x4c] sm:$0xf]
        %v2652 = vld [vmem:[%s2637 + $0x54] sm:$0xf]
        %v2653 = vld [vmem:[%s2637 + $0x58] sm:$0xf]
        %v2654 = vld [vmem:[%s2637 + $0x60] sm:$0xf]
        %v2655 = vld [vmem:[%s2637 + $0x64] sm:$0xf]
        %v2656 = vld [vmem:[%s2637 + $0x6c] sm:$0xf]
        %v2657 = vld [vmem:[%s2637 + $0x70] sm:$0xf]
        %v2658 = vld [vmem:[%s2637 + $0x78] sm:$0xf]
        %v2659 = vld [vmem:[%s2637 + $0x7c] sm:$0xf]
        %v2660 = vld [vmem:[%s2637 + $0x84] sm:$0xf]
        %v2661 = vld [vmem:[%s2637 + $0x88] sm:$0xf]
        %v2662 = vld [vmem:[%s2637 + $0x90] sm:$0xf]
        %v2663 = vld [vmem:[%s2637 + $0x94] sm:$0xf]
        %v2664 = vld [vmem:[%s2637 + $0x9c] sm:$0xf]
        %v2665 = vld [vmem:[%s2637 + $0xa0] sm:$0xf]
        %v2666 = vld [vmem:[%s2637 + $0xa8] sm:$0xf]
        %v2667 = vld [vmem:[%s2637 + $0xac] sm:$0xf]
        %v2668 = vld [vmem:[%s2637 + $0xb4] sm:$0xf]
        %v2669 = vld [vmem:[%s2637 + $0xb8] sm:$0xf]
        %v2670 = vunpack.c.l.bf16 %v2638
        %v2671 = vunpack.c.l.bf16 %v2639
        %v2672 = vunpack.c.l.bf16 %v2640
        %v2673 = vunpack.c.l.bf16 %v2641
        %v2674 = vunpack.c.l.bf16 %v2642
        %v2675 = vunpack.c.l.bf16 %v2643
        %v2676 = vunpack.c.l.bf16 %v2644
        %v2677 = vunpack.c.l.bf16 %v2645
        %v2678 = vunpack.c.l.bf16 %v2646
        %v2679 = vunpack.c.l.bf16 %v2647
        %v2680 = vunpack.c.l.bf16 %v2648
        %v2681 = vunpack.c.l.bf16 %v2649
        %v2682 = vunpack.c.l.bf16 %v2650
        %v2683 = vunpack.c.l.bf16 %v2651
        %v2684 = vunpack.c.l.bf16 %v2652
        %v2685 = vunpack.c.l.bf16 %v2653
        %v2686 = vunpack.c.l.bf16 %v2654
        %v2687 = vunpack.c.l.bf16 %v2655
        %v2688 = vunpack.c.l.bf16 %v2656
        %v2689 = vunpack.c.l.bf16 %v2657
        %v2690 = vunpack.c.l.bf16 %v2658
        %v2691 = vunpack.c.l.bf16 %v2659
        %v2692 = vunpack.c.l.bf16 %v2660
        %v2693 = vunpack.c.l.bf16 %v2661
        %v2694 = vunpack.c.l.bf16 %v2662
        %v2695 = vunpack.c.l.bf16 %v2663
        %v2696 = vunpack.c.l.bf16 %v2664
        %v2697 = vunpack.c.l.bf16 %v2665
        %v2698 = vunpack.c.l.bf16 %v2666
        %v2699 = vunpack.c.l.bf16 %v2667
        %v2700 = vunpack.c.l.bf16 %v2668
        %v2701 = vunpack.c.l.bf16 %v2669
        %s2702 = scalar_lea.vmem %s207, 6
        %v2703 = vld [vmem:[%s2702] sm:$0x1]
        %v2704 = vunpack.c.l.bf16 %v2703
        %2706 = vset.pattern.permute.xlu0 0
        %2707 = vperm.xlu0 %2706, %v2670
        %v2708 = vpop.permute.xlu0 %2707
        %2711 = vset.pattern.permute.xlu0 0
        %2712 = vperm.xlu0 %2711, %v2671
        %v2713 = vpop.permute.xlu0 %2712
        %2716 = vset.pattern.permute.xlu0 0
        %2717 = vperm.xlu0 %2716, %v2672
        %v2718 = vpop.permute.xlu0 %2717
        %2721 = vset.pattern.permute.xlu0 0
        %2722 = vperm.xlu0 %2721, %v2673
        %v2723 = vpop.permute.xlu0 %2722
        %2726 = vset.pattern.permute.xlu0 0
        %2727 = vperm.xlu0 %2726, %v2674
        %v2728 = vpop.permute.xlu0 %2727
        %2731 = vset.pattern.permute.xlu0 0
        %2732 = vperm.xlu0 %2731, %v2675
        %v2733 = vpop.permute.xlu0 %2732
        %2736 = vset.pattern.permute.xlu0 0
        %2737 = vperm.xlu0 %2736, %v2676
        %v2738 = vpop.permute.xlu0 %2737
        %2741 = vset.pattern.permute.xlu0 0
        %2742 = vperm.xlu0 %2741, %v2677
        %v2743 = vpop.permute.xlu0 %2742
        %2746 = vset.pattern.permute.xlu0 0
        %2747 = vperm.xlu0 %2746, %v2678
        %v2748 = vpop.permute.xlu0 %2747
        %2751 = vset.pattern.permute.xlu0 0
        %2752 = vperm.xlu0 %2751, %v2679
        %v2753 = vpop.permute.xlu0 %2752
        %2756 = vset.pattern.permute.xlu0 0
        %2757 = vperm.xlu0 %2756, %v2680
        %v2758 = vpop.permute.xlu0 %2757
        %2761 = vset.pattern.permute.xlu0 0
        %2762 = vperm.xlu0 %2761, %v2681
        %v2763 = vpop.permute.xlu0 %2762
        %2766 = vset.pattern.permute.xlu0 0
        %2767 = vperm.xlu0 %2766, %v2682
        %v2768 = vpop.permute.xlu0 %2767
        %2771 = vset.pattern.permute.xlu0 0
        %2772 = vperm.xlu0 %2771, %v2683
        %v2773 = vpop.permute.xlu0 %2772
        %2776 = vset.pattern.permute.xlu0 0
        %2777 = vperm.xlu0 %2776, %v2684
        %v2778 = vpop.permute.xlu0 %2777
        %2781 = vset.pattern.permute.xlu0 0
        %2782 = vperm.xlu0 %2781, %v2685
        %v2783 = vpop.permute.xlu0 %2782
        %2786 = vset.pattern.permute.xlu0 0
        %2787 = vperm.xlu0 %2786, %v2686
        %v2788 = vpop.permute.xlu0 %2787
        %2791 = vset.pattern.permute.xlu0 0
        %2792 = vperm.xlu0 %2791, %v2687
        %v2793 = vpop.permute.xlu0 %2792
        %2796 = vset.pattern.permute.xlu0 0
        %2797 = vperm.xlu0 %2796, %v2688
        %v2798 = vpop.permute.xlu0 %2797
        %2801 = vset.pattern.permute.xlu0 0
        %2802 = vperm.xlu0 %2801, %v2689
        %v2803 = vpop.permute.xlu0 %2802
        %2806 = vset.pattern.permute.xlu0 0
        %2807 = vperm.xlu0 %2806, %v2690
        %v2808 = vpop.permute.xlu0 %2807
        %2811 = vset.pattern.permute.xlu0 0
        %2812 = vperm.xlu0 %2811, %v2691
        %v2813 = vpop.permute.xlu0 %2812
        %2816 = vset.pattern.permute.xlu0 0
        %2817 = vperm.xlu0 %2816, %v2692
        %v2818 = vpop.permute.xlu0 %2817
        %2821 = vset.pattern.permute.xlu0 0
        %2822 = vperm.xlu0 %2821, %v2693
        %v2823 = vpop.permute.xlu0 %2822
        %2826 = vset.pattern.permute.xlu0 0
        %2827 = vperm.xlu0 %2826, %v2694
        %v2828 = vpop.permute.xlu0 %2827
        %2831 = vset.pattern.permute.xlu0 0
        %2832 = vperm.xlu0 %2831, %v2695
        %v2833 = vpop.permute.xlu0 %2832
        %2836 = vset.pattern.permute.xlu0 0
        %2837 = vperm.xlu0 %2836, %v2696
        %v2838 = vpop.permute.xlu0 %2837
        %2841 = vset.pattern.permute.xlu0 0
        %2842 = vperm.xlu0 %2841, %v2697
        %v2843 = vpop.permute.xlu0 %2842
        %2846 = vset.pattern.permute.xlu0 0
        %2847 = vperm.xlu0 %2846, %v2698
        %v2848 = vpop.permute.xlu0 %2847
        %2851 = vset.pattern.permute.xlu0 0
        %2852 = vperm.xlu0 %2851, %v2699
        %v2853 = vpop.permute.xlu0 %2852
        %2856 = vset.pattern.permute.xlu0 0
        %2857 = vperm.xlu0 %2856, %v2700
        %v2858 = vpop.permute.xlu0 %2857
        %2861 = vset.pattern.permute.xlu0 0
        %2862 = vperm.xlu0 %2861, %v2701
        %v2863 = vpop.permute.xlu0 %2862
        %v2865 = vperm.slane %v2704, 0
        %v2866 = vmul.f32 %v2708, %v2865
        %v2867 = vmul.f32 %v2713, %v2865
        %v2868 = vmul.f32 %v2718, %v2865
        %v2869 = vmul.f32 %v2723, %v2865
        %v2870 = vmul.f32 %v2728, %v2865
        %v2871 = vmul.f32 %v2733, %v2865
        %v2872 = vmul.f32 %v2738, %v2865
        %v2873 = vmul.f32 %v2743, %v2865
        %v2874 = vmul.f32 %v2748, %v2865
        %v2875 = vmul.f32 %v2753, %v2865
        %v2876 = vmul.f32 %v2758, %v2865
        %v2877 = vmul.f32 %v2763, %v2865
        %v2878 = vmul.f32 %v2768, %v2865
        %v2879 = vmul.f32 %v2773, %v2865
        %v2880 = vmul.f32 %v2778, %v2865
        %v2881 = vmul.f32 %v2783, %v2865
        %v2882 = vmul.f32 %v2788, %v2865
        %v2883 = vmul.f32 %v2793, %v2865
        %v2884 = vmul.f32 %v2798, %v2865
        %v2885 = vmul.f32 %v2803, %v2865
        %v2886 = vmul.f32 %v2808, %v2865
        %v2887 = vmul.f32 %v2813, %v2865
        %v2888 = vmul.f32 %v2818, %v2865
        %v2889 = vmul.f32 %v2823, %v2865
        %v2890 = vmul.f32 %v2828, %v2865
        %v2891 = vmul.f32 %v2833, %v2865
        %v2892 = vmul.f32 %v2838, %v2865
        %v2893 = vmul.f32 %v2843, %v2865
        %v2894 = vmul.f32 %v2848, %v2865
        %v2895 = vmul.f32 %v2853, %v2865
        %v2896 = vmul.f32 %v2858, %v2865
        %v2897 = vmul.f32 %v2863, %v2865
        %v2898 = vadd.f32 %v2605, %v2866
        %v2899 = vadd.f32 %v2606, %v2867
        %v2900 = vadd.f32 %v2607, %v2868
        %v2901 = vadd.f32 %v2608, %v2869
        %v2902 = vadd.f32 %v2609, %v2870
        %v2903 = vadd.f32 %v2610, %v2871
        %v2904 = vadd.f32 %v2611, %v2872
        %v2905 = vadd.f32 %v2612, %v2873
        %v2906 = vadd.f32 %v2613, %v2874
        %v2907 = vadd.f32 %v2614, %v2875
        %v2908 = vadd.f32 %v2615, %v2876
        %v2909 = vadd.f32 %v2616, %v2877
        %v2910 = vadd.f32 %v2617, %v2878
        %v2911 = vadd.f32 %v2618, %v2879
        %v2912 = vadd.f32 %v2619, %v2880
        %v2913 = vadd.f32 %v2620, %v2881
        %v2914 = vadd.f32 %v2621, %v2882
        %v2915 = vadd.f32 %v2622, %v2883
        %v2916 = vadd.f32 %v2623, %v2884
        %v2917 = vadd.f32 %v2624, %v2885
        %v2918 = vadd.f32 %v2625, %v2886
        %v2919 = vadd.f32 %v2626, %v2887
        %v2920 = vadd.f32 %v2627, %v2888
        %v2921 = vadd.f32 %v2628, %v2889
        %v2922 = vadd.f32 %v2629, %v2890
        %v2923 = vadd.f32 %v2630, %v2891
        %v2924 = vadd.f32 %v2631, %v2892
        %v2925 = vadd.f32 %v2632, %v2893
        %v2926 = vadd.f32 %v2633, %v2894
        %v2927 = vadd.f32 %v2634, %v2895
        %v2928 = vadd.f32 %v2635, %v2896
        %v2929 = vadd.f32 %v2636, %v2897
        %v2930 = vld [vmem:[%s2637] sm:$0xf]
        %v2931 = vld [vmem:[%s2637 + $0x4] sm:$0xf]
        %v2932 = vld [vmem:[%s2637 + $0x8] sm:$0x1]
        %v2933 = vld [vmem:[%s2637 + $0xc] sm:$0xf]
        %v2934 = vld [vmem:[%s2637 + $0x10] sm:$0xf]
        %v2935 = vld [vmem:[%s2637 + $0x14] sm:$0x1]
        %v2936 = vld [vmem:[%s2637 + $0x18] sm:$0xf]
        %v2937 = vld [vmem:[%s2637 + $0x1c] sm:$0xf]
        %v2938 = vld [vmem:[%s2637 + $0x20] sm:$0x1]
        %v2939 = vld [vmem:[%s2637 + $0x24] sm:$0xf]
        %v2940 = vld [vmem:[%s2637 + $0x28] sm:$0xf]
        %v2941 = vld [vmem:[%s2637 + $0x2c] sm:$0x1]
        %v2942 = vld [vmem:[%s2637 + $0x30] sm:$0xf]
        %v2943 = vld [vmem:[%s2637 + $0x34] sm:$0xf]
        %v2944 = vld [vmem:[%s2637 + $0x38] sm:$0x1]
        %v2945 = vld [vmem:[%s2637 + $0x3c] sm:$0xf]
        %v2946 = vld [vmem:[%s2637 + $0x40] sm:$0xf]
        %v2947 = vld [vmem:[%s2637 + $0x44] sm:$0x1]
        %v2948 = vld [vmem:[%s2637 + $0x48] sm:$0xf]
        %v2949 = vld [vmem:[%s2637 + $0x4c] sm:$0xf]
        %v2950 = vld [vmem:[%s2637 + $0x50] sm:$0x1]
        %v2951 = vld [vmem:[%s2637 + $0x54] sm:$0xf]
        %v2952 = vld [vmem:[%s2637 + $0x58] sm:$0xf]
        %v2953 = vld [vmem:[%s2637 + $0x5c] sm:$0x1]
        %v2954 = vld [vmem:[%s2637 + $0x60] sm:$0xf]
        %v2955 = vld [vmem:[%s2637 + $0x64] sm:$0xf]
        %v2956 = vld [vmem:[%s2637 + $0x68] sm:$0x1]
        %v2957 = vld [vmem:[%s2637 + $0x6c] sm:$0xf]
        %v2958 = vld [vmem:[%s2637 + $0x70] sm:$0xf]
        %v2959 = vld [vmem:[%s2637 + $0x74] sm:$0x1]
        %v2960 = vld [vmem:[%s2637 + $0x78] sm:$0xf]
        %v2961 = vld [vmem:[%s2637 + $0x7c] sm:$0xf]
        %v2962 = vld [vmem:[%s2637 + $0x80] sm:$0x1]
        %v2963 = vld [vmem:[%s2637 + $0x84] sm:$0xf]
        %v2964 = vld [vmem:[%s2637 + $0x88] sm:$0xf]
        %v2965 = vld [vmem:[%s2637 + $0x8c] sm:$0x1]
        %v2966 = vld [vmem:[%s2637 + $0x90] sm:$0xf]
        %v2967 = vld [vmem:[%s2637 + $0x94] sm:$0xf]
        %v2968 = vld [vmem:[%s2637 + $0x98] sm:$0x1]
        %v2969 = vld [vmem:[%s2637 + $0x9c] sm:$0xf]
        %v2970 = vld [vmem:[%s2637 + $0xa0] sm:$0xf]
        %v2971 = vld [vmem:[%s2637 + $0xa4] sm:$0x1]
        %v2972 = vld [vmem:[%s2637 + $0xa8] sm:$0xf]
        %v2973 = vld [vmem:[%s2637 + $0xac] sm:$0xf]
        %v2974 = vld [vmem:[%s2637 + $0xb0] sm:$0x1]
        %v2975 = vld [vmem:[%s2637 + $0xb4] sm:$0xf]
        %v2976 = vld [vmem:[%s2637 + $0xb8] sm:$0xf]
        %v2977 = vld [vmem:[%s2637 + $0xbc] sm:$0x1]
        %v2978 = vunpack.c.l.bf16 %v2930
        %v2979 = vunpack.c.l.bf16 %v2931
        %v2980 = vunpack.c.l.bf16 %v2932
        %v2981 = vunpack.c.l.bf16 %v2933
        %v2982 = vunpack.c.l.bf16 %v2934
        %v2983 = vunpack.c.l.bf16 %v2935
        %v2984 = vunpack.c.l.bf16 %v2936
        %v2985 = vunpack.c.l.bf16 %v2937
        %v2986 = vunpack.c.l.bf16 %v2938
        %v2987 = vunpack.c.l.bf16 %v2939
        %v2988 = vunpack.c.l.bf16 %v2940
        %v2989 = vunpack.c.l.bf16 %v2941
        %v2990 = vunpack.c.l.bf16 %v2942
        %v2991 = vunpack.c.l.bf16 %v2943
        %v2992 = vunpack.c.l.bf16 %v2944
        %v2993 = vunpack.c.l.bf16 %v2945
        %v2994 = vunpack.c.l.bf16 %v2946
        %v2995 = vunpack.c.l.bf16 %v2947
        %v2996 = vunpack.c.l.bf16 %v2948
        %v2997 = vunpack.c.l.bf16 %v2949
        %v2998 = vunpack.c.l.bf16 %v2950
        %v2999 = vunpack.c.l.bf16 %v2951
        %v3000 = vunpack.c.l.bf16 %v2952
        %v3001 = vunpack.c.l.bf16 %v2953
        %v3002 = vunpack.c.l.bf16 %v2954
        %v3003 = vunpack.c.l.bf16 %v2955
        %v3004 = vunpack.c.l.bf16 %v2956
        %v3005 = vunpack.c.l.bf16 %v2957
        %v3006 = vunpack.c.l.bf16 %v2958
        %v3007 = vunpack.c.l.bf16 %v2959
        %v3008 = vunpack.c.l.bf16 %v2960
        %v3009 = vunpack.c.l.bf16 %v2961
        %v3010 = vunpack.c.l.bf16 %v2962
        %v3011 = vunpack.c.l.bf16 %v2963
        %v3012 = vunpack.c.l.bf16 %v2964
        %v3013 = vunpack.c.l.bf16 %v2965
        %v3014 = vunpack.c.l.bf16 %v2966
        %v3015 = vunpack.c.l.bf16 %v2967
        %v3016 = vunpack.c.l.bf16 %v2968
        %v3017 = vunpack.c.l.bf16 %v2969
        %v3018 = vunpack.c.l.bf16 %v2970
        %v3019 = vunpack.c.l.bf16 %v2971
        %v3020 = vunpack.c.l.bf16 %v2972
        %v3021 = vunpack.c.l.bf16 %v2973
        %v3022 = vunpack.c.l.bf16 %v2974
        %v3023 = vunpack.c.l.bf16 %v2975
        %v3024 = vunpack.c.l.bf16 %v2976
        %v3025 = vunpack.c.l.bf16 %v2977
        %s3026 = scalar_lea.vmem %s207, 7
        %v3027 = vld [vmem:[%s3026] sm:$0x1]
        %v3028 = vunpack.c.l.bf16 %v3027
        %3030 = vset.pattern.permute.xlu0 0
        %3031 = vperm.xlu0 %3030, %v2978
        %v3032 = vpop.permute.xlu0 %3031
        %3035 = vset.pattern.permute.xlu0 0
        %3036 = vperm.xlu0 %3035, %v2979
        %v3037 = vpop.permute.xlu0 %3036
        %3040 = vset.pattern.permute.xlu0 0
        %3041 = vperm.xlu0 %3040, %v2980
        %v3042 = vpop.permute.xlu0 %3041
        %3045 = vset.pattern.permute.xlu0 0
        %3046 = vperm.xlu0 %3045, %v2981
        %v3047 = vpop.permute.xlu0 %3046
        %3050 = vset.pattern.permute.xlu0 0
        %3051 = vperm.xlu0 %3050, %v2982
        %v3052 = vpop.permute.xlu0 %3051
        %3055 = vset.pattern.permute.xlu0 0
        %3056 = vperm.xlu0 %3055, %v2983
        %v3057 = vpop.permute.xlu0 %3056
        %3060 = vset.pattern.permute.xlu0 0
        %3061 = vperm.xlu0 %3060, %v2984
        %v3062 = vpop.permute.xlu0 %3061
        %3065 = vset.pattern.permute.xlu0 0
        %3066 = vperm.xlu0 %3065, %v2985
        %v3067 = vpop.permute.xlu0 %3066
        %3070 = vset.pattern.permute.xlu0 0
        %3071 = vperm.xlu0 %3070, %v2986
        %v3072 = vpop.permute.xlu0 %3071
        %3075 = vset.pattern.permute.xlu0 0
        %3076 = vperm.xlu0 %3075, %v2987
        %v3077 = vpop.permute.xlu0 %3076
        %3080 = vset.pattern.permute.xlu0 0
        %3081 = vperm.xlu0 %3080, %v2988
        %v3082 = vpop.permute.xlu0 %3081
        %3085 = vset.pattern.permute.xlu0 0
        %3086 = vperm.xlu0 %3085, %v2989
        %v3087 = vpop.permute.xlu0 %3086
        %3090 = vset.pattern.permute.xlu0 0
        %3091 = vperm.xlu0 %3090, %v2990
        %v3092 = vpop.permute.xlu0 %3091
        %3095 = vset.pattern.permute.xlu0 0
        %3096 = vperm.xlu0 %3095, %v2991
        %v3097 = vpop.permute.xlu0 %3096
        %3100 = vset.pattern.permute.xlu0 0
        %3101 = vperm.xlu0 %3100, %v2992
        %v3102 = vpop.permute.xlu0 %3101
        %3105 = vset.pattern.permute.xlu0 0
        %3106 = vperm.xlu0 %3105, %v2993
        %v3107 = vpop.permute.xlu0 %3106
        %3110 = vset.pattern.permute.xlu0 0
        %3111 = vperm.xlu0 %3110, %v2994
        %v3112 = vpop.permute.xlu0 %3111
        %3115 = vset.pattern.permute.xlu0 0
        %3116 = vperm.xlu0 %3115, %v2995
        %v3117 = vpop.permute.xlu0 %3116
        %3120 = vset.pattern.permute.xlu0 0
        %3121 = vperm.xlu0 %3120, %v2996
        %v3122 = vpop.permute.xlu0 %3121
        %3125 = vset.pattern.permute.xlu0 0
        %3126 = vperm.xlu0 %3125, %v2997
        %v3127 = vpop.permute.xlu0 %3126
        %3130 = vset.pattern.permute.xlu0 0
        %3131 = vperm.xlu0 %3130, %v2998
        %v3132 = vpop.permute.xlu0 %3131
        %3135 = vset.pattern.permute.xlu0 0
        %3136 = vperm.xlu0 %3135, %v2999
        %v3137 = vpop.permute.xlu0 %3136
        %3140 = vset.pattern.permute.xlu0 0
        %3141 = vperm.xlu0 %3140, %v3000
        %v3142 = vpop.permute.xlu0 %3141
        %3145 = vset.pattern.permute.xlu0 0
        %3146 = vperm.xlu0 %3145, %v3001
        %v3147 = vpop.permute.xlu0 %3146
        %3150 = vset.pattern.permute.xlu0 0
        %3151 = vperm.xlu0 %3150, %v3002
        %v3152 = vpop.permute.xlu0 %3151
        %3155 = vset.pattern.permute.xlu0 0
        %3156 = vperm.xlu0 %3155, %v3003
        %v3157 = vpop.permute.xlu0 %3156
        %3160 = vset.pattern.permute.xlu0 0
        %3161 = vperm.xlu0 %3160, %v3004
        %v3162 = vpop.permute.xlu0 %3161
        %3165 = vset.pattern.permute.xlu0 0
        %3166 = vperm.xlu0 %3165, %v3005
        %v3167 = vpop.permute.xlu0 %3166
        %3170 = vset.pattern.permute.xlu0 0
        %3171 = vperm.xlu0 %3170, %v3006
        %v3172 = vpop.permute.xlu0 %3171
        %3175 = vset.pattern.permute.xlu0 0
        %3176 = vperm.xlu0 %3175, %v3007
        %v3177 = vpop.permute.xlu0 %3176
        %3180 = vset.pattern.permute.xlu0 0
        %3181 = vperm.xlu0 %3180, %v3008
        %v3182 = vpop.permute.xlu0 %3181
        %3185 = vset.pattern.permute.xlu0 0
        %3186 = vperm.xlu0 %3185, %v3009
        %v3187 = vpop.permute.xlu0 %3186
        %3190 = vset.pattern.permute.xlu0 0
        %3191 = vperm.xlu0 %3190, %v3010
        %v3192 = vpop.permute.xlu0 %3191
        %3195 = vset.pattern.permute.xlu0 0
        %3196 = vperm.xlu0 %3195, %v3011
        %v3197 = vpop.permute.xlu0 %3196
        %3200 = vset.pattern.permute.xlu0 0
        %3201 = vperm.xlu0 %3200, %v3012
        %v3202 = vpop.permute.xlu0 %3201
        %3205 = vset.pattern.permute.xlu0 0
        %3206 = vperm.xlu0 %3205, %v3013
        %v3207 = vpop.permute.xlu0 %3206
        %3210 = vset.pattern.permute.xlu0 0
        %3211 = vperm.xlu0 %3210, %v3014
        %v3212 = vpop.permute.xlu0 %3211
        %3215 = vset.pattern.permute.xlu0 0
        %3216 = vperm.xlu0 %3215, %v3015
        %v3217 = vpop.permute.xlu0 %3216
        %3220 = vset.pattern.permute.xlu0 0
        %3221 = vperm.xlu0 %3220, %v3016
        %v3222 = vpop.permute.xlu0 %3221
        %3225 = vset.pattern.permute.xlu0 0
        %3226 = vperm.xlu0 %3225, %v3017
        %v3227 = vpop.permute.xlu0 %3226
        %3230 = vset.pattern.permute.xlu0 0
        %3231 = vperm.xlu0 %3230, %v3018
        %v3232 = vpop.permute.xlu0 %3231
        %3235 = vset.pattern.permute.xlu0 0
        %3236 = vperm.xlu0 %3235, %v3019
        %v3237 = vpop.permute.xlu0 %3236
        %3240 = vset.pattern.permute.xlu0 0
        %3241 = vperm.xlu0 %3240, %v3020
        %v3242 = vpop.permute.xlu0 %3241
        %3245 = vset.pattern.permute.xlu0 0
        %3246 = vperm.xlu0 %3245, %v3021
        %v3247 = vpop.permute.xlu0 %3246
        %3250 = vset.pattern.permute.xlu0 0
        %3251 = vperm.xlu0 %3250, %v3022
        %v3252 = vpop.permute.xlu0 %3251
        %3255 = vset.pattern.permute.xlu0 0
        %3256 = vperm.xlu0 %3255, %v3023
        %v3257 = vpop.permute.xlu0 %3256
        %3260 = vset.pattern.permute.xlu0 0
        %3261 = vperm.xlu0 %3260, %v3024
        %v3262 = vpop.permute.xlu0 %3261
        %3265 = vset.pattern.permute.xlu0 0
        %3266 = vperm.xlu0 %3265, %v3025
        %v3267 = vpop.permute.xlu0 %3266
        %v3269 = vperm.slane %v3028, 0
        %v3270 = vmul.f32 %v3032, %v3269
        %v3271 = vmul.f32 %v3037, %v3269
        %v3272 = vmul.f32 %v3042, %v3269
        %v3273 = vmul.f32 %v3047, %v3269
        %v3274 = vmul.f32 %v3052, %v3269
        %v3275 = vmul.f32 %v3057, %v3269
        %v3276 = vmul.f32 %v3062, %v3269
        %v3277 = vmul.f32 %v3067, %v3269
        %v3278 = vmul.f32 %v3072, %v3269
        %v3279 = vmul.f32 %v3077, %v3269
        %v3280 = vmul.f32 %v3082, %v3269
        %v3281 = vmul.f32 %v3087, %v3269
        %v3282 = vmul.f32 %v3092, %v3269
        %v3283 = vmul.f32 %v3097, %v3269
        %v3284 = vmul.f32 %v3102, %v3269
        %v3285 = vmul.f32 %v3107, %v3269
        %v3286 = vmul.f32 %v3112, %v3269
        %v3287 = vmul.f32 %v3117, %v3269
        %v3288 = vmul.f32 %v3122, %v3269
        %v3289 = vmul.f32 %v3127, %v3269
        %v3290 = vmul.f32 %v3132, %v3269
        %v3291 = vmul.f32 %v3137, %v3269
        %v3292 = vmul.f32 %v3142, %v3269
        %v3293 = vmul.f32 %v3147, %v3269
        %v3294 = vmul.f32 %v3152, %v3269
        %v3295 = vmul.f32 %v3157, %v3269
        %v3296 = vmul.f32 %v3162, %v3269
        %v3297 = vmul.f32 %v3167, %v3269
        %v3298 = vmul.f32 %v3172, %v3269
        %v3299 = vmul.f32 %v3177, %v3269
        %v3300 = vmul.f32 %v3182, %v3269
        %v3301 = vmul.f32 %v3187, %v3269
        %v3302 = vmul.f32 %v3192, %v3269
        %v3303 = vmul.f32 %v3197, %v3269
        %v3304 = vmul.f32 %v3202, %v3269
        %v3305 = vmul.f32 %v3207, %v3269
        %v3306 = vmul.f32 %v3212, %v3269
        %v3307 = vmul.f32 %v3217, %v3269
        %v3308 = vmul.f32 %v3222, %v3269
        %v3309 = vmul.f32 %v3227, %v3269
        %v3310 = vmul.f32 %v3232, %v3269
        %v3311 = vmul.f32 %v3237, %v3269
        %v3312 = vmul.f32 %v3242, %v3269
        %v3313 = vmul.f32 %v3247, %v3269
        %v3314 = vmul.f32 %v3252, %v3269
        %v3315 = vmul.f32 %v3257, %v3269
        %v3316 = vmul.f32 %v3262, %v3269
        %v3317 = vmul.f32 %v3267, %v3269
        %v3366 = vrot.slane %v3270, 1
        %v3367 = vrot.slane %v3271, 1
        %v3368 = vsel %vm906, %v3366, %v3367
        %v3369 = vrot.slane %v3272, 1
        %v3370 = vsel %vm906, %v3367, %v3369
        %v3371 = vrot.slane %v3273, 1
        %v3372 = vrot.slane %v3274, 1
        %v3373 = vsel %vm906, %v3371, %v3372
        %v3374 = vrot.slane %v3275, 1
        %v3375 = vsel %vm906, %v3372, %v3374
        %v3376 = vrot.slane %v3276, 1
        %v3377 = vrot.slane %v3277, 1
        %v3378 = vsel %vm906, %v3376, %v3377
        %v3379 = vrot.slane %v3278, 1
        %v3380 = vsel %vm906, %v3377, %v3379
        %v3381 = vrot.slane %v3279, 1
        %v3382 = vrot.slane %v3280, 1
        %v3383 = vsel %vm906, %v3381, %v3382
        %v3384 = vrot.slane %v3281, 1
        %v3385 = vsel %vm906, %v3382, %v3384
        %v3386 = vrot.slane %v3282, 1
        %v3387 = vrot.slane %v3283, 1
        %v3388 = vsel %vm906, %v3386, %v3387
        %v3389 = vrot.slane %v3284, 1
        %v3390 = vsel %vm906, %v3387, %v3389
        %v3391 = vrot.slane %v3285, 1
        %v3392 = vrot.slane %v3286, 1
        %v3393 = vsel %vm906, %v3391, %v3392
        %v3394 = vrot.slane %v3287, 1
        %v3395 = vsel %vm906, %v3392, %v3394
        %v3396 = vrot.slane %v3288, 1
        %v3397 = vrot.slane %v3289, 1
        %v3398 = vsel %vm906, %v3396, %v3397
        %v3399 = vrot.slane %v3290, 1
        %v3400 = vsel %vm906, %v3397, %v3399
        %v3401 = vrot.slane %v3291, 1
        %v3402 = vrot.slane %v3292, 1
        %v3403 = vsel %vm906, %v3401, %v3402
        %v3404 = vrot.slane %v3293, 1
        %v3405 = vsel %vm906, %v3402, %v3404
        %v3406 = vrot.slane %v3294, 1
        %v3407 = vrot.slane %v3295, 1
        %v3408 = vsel %vm906, %v3406, %v3407
        %v3409 = vrot.slane %v3296, 1
        %v3410 = vsel %vm906, %v3407, %v3409
        %v3411 = vrot.slane %v3297, 1
        %v3412 = vrot.slane %v3298, 1
        %v3413 = vsel %vm906, %v3411, %v3412
        %v3414 = vrot.slane %v3299, 1
        %v3415 = vsel %vm906, %v3412, %v3414
        %v3416 = vrot.slane %v3300, 1
        %v3417 = vrot.slane %v3301, 1
        %v3418 = vsel %vm906, %v3416, %v3417
        %v3419 = vrot.slane %v3302, 1
        %v3420 = vsel %vm906, %v3417, %v3419
        %v3421 = vrot.slane %v3303, 1
        %v3422 = vrot.slane %v3304, 1
        %v3423 = vsel %vm906, %v3421, %v3422
        %v3424 = vrot.slane %v3305, 1
        %v3425 = vsel %vm906, %v3422, %v3424
        %v3426 = vrot.slane %v3306, 1
        %v3427 = vrot.slane %v3307, 1
        %v3428 = vsel %vm906, %v3426, %v3427
        %v3429 = vrot.slane %v3308, 1
        %v3430 = vsel %vm906, %v3427, %v3429
        %v3431 = vrot.slane %v3309, 1
        %v3432 = vrot.slane %v3310, 1
        %v3433 = vsel %vm906, %v3431, %v3432
        %v3434 = vrot.slane %v3311, 1
        %v3435 = vsel %vm906, %v3432, %v3434
        %v3436 = vrot.slane %v3312, 1
        %v3437 = vrot.slane %v3313, 1
        %v3438 = vsel %vm906, %v3436, %v3437
        %v3439 = vrot.slane %v3314, 1
        %v3440 = vsel %vm906, %v3437, %v3439
        %v3441 = vrot.slane %v3315, 1
        %v3442 = vrot.slane %v3316, 1
        %v3443 = vsel %vm906, %v3441, %v3442
        %v3444 = vrot.slane %v3317, 1
        %v3445 = vsel %vm906, %v3442, %v3444
        %v3478 = vadd.f32 %v2898, %v3368
        %v3479 = vadd.f32 %v2899, %v3370
        %v3480 = vadd.f32 %v2900, %v3373
        %v3481 = vadd.f32 %v2901, %v3375
        %v3482 = vadd.f32 %v2902, %v3378
        %v3483 = vadd.f32 %v2903, %v3380
        %v3484 = vadd.f32 %v2904, %v3383
        %v3485 = vadd.f32 %v2905, %v3385
        %v3486 = vadd.f32 %v2906, %v3388
        %v3487 = vadd.f32 %v2907, %v3390
        %v3488 = vadd.f32 %v2908, %v3393
        %v3489 = vadd.f32 %v2909, %v3395
        %v3490 = vadd.f32 %v2910, %v3398
        %v3491 = vadd.f32 %v2911, %v3400
        %v3492 = vadd.f32 %v2912, %v3403
        %v3493 = vadd.f32 %v2913, %v3405
        %v3494 = vadd.f32 %v2914, %v3408
        %v3495 = vadd.f32 %v2915, %v3410
        %v3496 = vadd.f32 %v2916, %v3413
        %v3497 = vadd.f32 %v2917, %v3415
        %v3498 = vadd.f32 %v2918, %v3418
        %v3499 = vadd.f32 %v2919, %v3420
        %v3500 = vadd.f32 %v2920, %v3423
        %v3501 = vadd.f32 %v2921, %v3425
        %v3502 = vadd.f32 %v2922, %v3428
        %v3503 = vadd.f32 %v2923, %v3430
        %v3504 = vadd.f32 %v2924, %v3433
        %v3505 = vadd.f32 %v2925, %v3435
        %v3506 = vadd.f32 %v2926, %v3438
        %v3507 = vadd.f32 %v2927, %v3440
        %v3508 = vadd.f32 %v2928, %v3443
        %v3509 = vadd.f32 %v2929, %v3445
        %v3510 = vld [vmem:[%s2637] sm:$0xe]
        %v3511 = vld [vmem:[%s2637 + $0xc] sm:$0xe]
        %v3512 = vld [vmem:[%s2637 + $0x18] sm:$0xe]
        %v3513 = vld [vmem:[%s2637 + $0x24] sm:$0xe]
        %v3514 = vld [vmem:[%s2637 + $0x30] sm:$0xe]
        %v3515 = vld [vmem:[%s2637 + $0x3c] sm:$0xe]
        %v3516 = vld [vmem:[%s2637 + $0x48] sm:$0xe]
        %v3517 = vld [vmem:[%s2637 + $0x54] sm:$0xe]
        %v3518 = vld [vmem:[%s2637 + $0x60] sm:$0xe]
        %v3519 = vld [vmem:[%s2637 + $0x6c] sm:$0xe]
        %v3520 = vld [vmem:[%s2637 + $0x78] sm:$0xe]
        %v3521 = vld [vmem:[%s2637 + $0x84] sm:$0xe]
        %v3522 = vld [vmem:[%s2637 + $0x90] sm:$0xe]
        %v3523 = vld [vmem:[%s2637 + $0x9c] sm:$0xe]
        %v3524 = vld [vmem:[%s2637 + $0xa8] sm:$0xe]
        %v3525 = vld [vmem:[%s2637 + $0xb4] sm:$0xe]
        %v3526 = vunpack.c.l.bf16 %v3510
        %v3527 = vunpack.c.l.bf16 %v3511
        %v3528 = vunpack.c.l.bf16 %v3512
        %v3529 = vunpack.c.l.bf16 %v3513
        %v3530 = vunpack.c.l.bf16 %v3514
        %v3531 = vunpack.c.l.bf16 %v3515
        %v3532 = vunpack.c.l.bf16 %v3516
        %v3533 = vunpack.c.l.bf16 %v3517
        %v3534 = vunpack.c.l.bf16 %v3518
        %v3535 = vunpack.c.l.bf16 %v3519
        %v3536 = vunpack.c.l.bf16 %v3520
        %v3537 = vunpack.c.l.bf16 %v3521
        %v3538 = vunpack.c.l.bf16 %v3522
        %v3539 = vunpack.c.l.bf16 %v3523
        %v3540 = vunpack.c.l.bf16 %v3524
        %v3541 = vunpack.c.l.bf16 %v3525
        %s3542 = scalar_lea.vmem %s207, 8
        %v3543 = vld [vmem:[%s3542] sm:$0x1]
        %v3544 = vunpack.c.l.bf16 %v3543
        %3546 = vset.pattern.permute.xlu0 0
        %3547 = vperm.xlu0 %3546, %v3526
        %v3548 = vpop.permute.xlu0 %3547
        %3551 = vset.pattern.permute.xlu0 0
        %3552 = vperm.xlu0 %3551, %v3527
        %v3553 = vpop.permute.xlu0 %3552
        %3556 = vset.pattern.permute.xlu0 0
        %3557 = vperm.xlu0 %3556, %v3528
        %v3558 = vpop.permute.xlu0 %3557
        %3561 = vset.pattern.permute.xlu0 0
        %3562 = vperm.xlu0 %3561, %v3529
        %v3563 = vpop.permute.xlu0 %3562
        %3566 = vset.pattern.permute.xlu0 0
        %3567 = vperm.xlu0 %3566, %v3530
        %v3568 = vpop.permute.xlu0 %3567
        %3571 = vset.pattern.permute.xlu0 0
        %3572 = vperm.xlu0 %3571, %v3531
        %v3573 = vpop.permute.xlu0 %3572
        %3576 = vset.pattern.permute.xlu0 0
        %3577 = vperm.xlu0 %3576, %v3532
        %v3578 = vpop.permute.xlu0 %3577
        %3581 = vset.pattern.permute.xlu0 0
        %3582 = vperm.xlu0 %3581, %v3533
        %v3583 = vpop.permute.xlu0 %3582
        %3586 = vset.pattern.permute.xlu0 0
        %3587 = vperm.xlu0 %3586, %v3534
        %v3588 = vpop.permute.xlu0 %3587
        %3591 = vset.pattern.permute.xlu0 0
        %3592 = vperm.xlu0 %3591, %v3535
        %v3593 = vpop.permute.xlu0 %3592
        %3596 = vset.pattern.permute.xlu0 0
        %3597 = vperm.xlu0 %3596, %v3536
        %v3598 = vpop.permute.xlu0 %3597
        %3601 = vset.pattern.permute.xlu0 0
        %3602 = vperm.xlu0 %3601, %v3537
        %v3603 = vpop.permute.xlu0 %3602
        %3606 = vset.pattern.permute.xlu0 0
        %3607 = vperm.xlu0 %3606, %v3538
        %v3608 = vpop.permute.xlu0 %3607
        %3611 = vset.pattern.permute.xlu0 0
        %3612 = vperm.xlu0 %3611, %v3539
        %v3613 = vpop.permute.xlu0 %3612
        %3616 = vset.pattern.permute.xlu0 0
        %3617 = vperm.xlu0 %3616, %v3540
        %v3618 = vpop.permute.xlu0 %3617
        %3621 = vset.pattern.permute.xlu0 0
        %3622 = vperm.xlu0 %3621, %v3541
        %v3623 = vpop.permute.xlu0 %3622
        %v3625 = vperm.slane %v3544, 0
        %v3626 = vmul.f32 %v3548, %v3625
        %v3627 = vmul.f32 %v3037, %v3625
        %v3628 = vmul.f32 %v3042, %v3625
        %v3629 = vmul.f32 %v3553, %v3625
        %v3630 = vmul.f32 %v3052, %v3625
        %v3631 = vmul.f32 %v3057, %v3625
        %v3632 = vmul.f32 %v3558, %v3625
        %v3633 = vmul.f32 %v3067, %v3625
        %v3634 = vmul.f32 %v3072, %v3625
        %v3635 = vmul.f32 %v3563, %v3625
        %v3636 = vmul.f32 %v3082, %v3625
        %v3637 = vmul.f32 %v3087, %v3625
        %v3638 = vmul.f32 %v3568, %v3625
        %v3639 = vmul.f32 %v3097, %v3625
        %v3640 = vmul.f32 %v3102, %v3625
        %v3641 = vmul.f32 %v3573, %v3625
        %v3642 = vmul.f32 %v3112, %v3625
        %v3643 = vmul.f32 %v3117, %v3625
        %v3644 = vmul.f32 %v3578, %v3625
        %v3645 = vmul.f32 %v3127, %v3625
        %v3646 = vmul.f32 %v3132, %v3625
        %v3647 = vmul.f32 %v3583, %v3625
        %v3648 = vmul.f32 %v3142, %v3625
        %v3649 = vmul.f32 %v3147, %v3625
        %v3650 = vmul.f32 %v3588, %v3625
        %v3651 = vmul.f32 %v3157, %v3625
        %v3652 = vmul.f32 %v3162, %v3625
        %v3653 = vmul.f32 %v3593, %v3625
        %v3654 = vmul.f32 %v3172, %v3625
        %v3655 = vmul.f32 %v3177, %v3625
        %v3656 = vmul.f32 %v3598, %v3625
        %v3657 = vmul.f32 %v3187, %v3625
        %v3658 = vmul.f32 %v3192, %v3625
        %v3659 = vmul.f32 %v3603, %v3625
        %v3660 = vmul.f32 %v3202, %v3625
        %v3661 = vmul.f32 %v3207, %v3625
        %v3662 = vmul.f32 %v3608, %v3625
        %v3663 = vmul.f32 %v3217, %v3625
        %v3664 = vmul.f32 %v3222, %v3625
        %v3665 = vmul.f32 %v3613, %v3625
        %v3666 = vmul.f32 %v3232, %v3625
        %v3667 = vmul.f32 %v3237, %v3625
        %v3668 = vmul.f32 %v3618, %v3625
        %v3669 = vmul.f32 %v3247, %v3625
        %v3670 = vmul.f32 %v3252, %v3625
        %v3671 = vmul.f32 %v3623, %v3625
        %v3672 = vmul.f32 %v3262, %v3625
        %v3673 = vmul.f32 %v3267, %v3625
        %v3722 = vrot.slane %v3626, 2
        %v3723 = vrot.slane %v3627, 2
        %v3724 = vsel %vm1263, %v3722, %v3723
        %v3725 = vrot.slane %v3628, 2
        %v3726 = vsel %vm1263, %v3723, %v3725
        %v3727 = vrot.slane %v3629, 2
        %v3728 = vrot.slane %v3630, 2
        %v3729 = vsel %vm1263, %v3727, %v3728
        %v3730 = vrot.slane %v3631, 2
        %v3731 = vsel %vm1263, %v3728, %v3730
        %v3732 = vrot.slane %v3632, 2
        %v3733 = vrot.slane %v3633, 2
        %v3734 = vsel %vm1263, %v3732, %v3733
        %v3735 = vrot.slane %v3634, 2
        %v3736 = vsel %vm1263, %v3733, %v3735
        %v3737 = vrot.slane %v3635, 2
        %v3738 = vrot.slane %v3636, 2
        %v3739 = vsel %vm1263, %v3737, %v3738
        %v3740 = vrot.slane %v3637, 2
        %v3741 = vsel %vm1263, %v3738, %v3740
        %v3742 = vrot.slane %v3638, 2
        %v3743 = vrot.slane %v3639, 2
        %v3744 = vsel %vm1263, %v3742, %v3743
        %v3745 = vrot.slane %v3640, 2
        %v3746 = vsel %vm1263, %v3743, %v3745
        %v3747 = vrot.slane %v3641, 2
        %v3748 = vrot.slane %v3642, 2
        %v3749 = vsel %vm1263, %v3747, %v3748
        %v3750 = vrot.slane %v3643, 2
        %v3751 = vsel %vm1263, %v3748, %v3750
        %v3752 = vrot.slane %v3644, 2
        %v3753 = vrot.slane %v3645, 2
        %v3754 = vsel %vm1263, %v3752, %v3753
        %v3755 = vrot.slane %v3646, 2
        %v3756 = vsel %vm1263, %v3753, %v3755
        %v3757 = vrot.slane %v3647, 2
        %v3758 = vrot.slane %v3648, 2
        %v3759 = vsel %vm1263, %v3757, %v3758
        %v3760 = vrot.slane %v3649, 2
        %v3761 = vsel %vm1263, %v3758, %v3760
        %v3762 = vrot.slane %v3650, 2
        %v3763 = vrot.slane %v3651, 2
        %v3764 = vsel %vm1263, %v3762, %v3763
        %v3765 = vrot.slane %v3652, 2
        %v3766 = vsel %vm1263, %v3763, %v3765
        %v3767 = vrot.slane %v3653, 2
        %v3768 = vrot.slane %v3654, 2
        %v3769 = vsel %vm1263, %v3767, %v3768
        %v3770 = vrot.slane %v3655, 2
        %v3771 = vsel %vm1263, %v3768, %v3770
        %v3772 = vrot.slane %v3656, 2
        %v3773 = vrot.slane %v3657, 2
        %v3774 = vsel %vm1263, %v3772, %v3773
        %v3775 = vrot.slane %v3658, 2
        %v3776 = vsel %vm1263, %v3773, %v3775
        %v3777 = vrot.slane %v3659, 2
        %v3778 = vrot.slane %v3660, 2
        %v3779 = vsel %vm1263, %v3777, %v3778
        %v3780 = vrot.slane %v3661, 2
        %v3781 = vsel %vm1263, %v3778, %v3780
        %v3782 = vrot.slane %v3662, 2
        %v3783 = vrot.slane %v3663, 2
        %v3784 = vsel %vm1263, %v3782, %v3783
        %v3785 = vrot.slane %v3664, 2
        %v3786 = vsel %vm1263, %v3783, %v3785
        %v3787 = vrot.slane %v3665, 2
        %v3788 = vrot.slane %v3666, 2
        %v3789 = vsel %vm1263, %v3787, %v3788
        %v3790 = vrot.slane %v3667, 2
        %v3791 = vsel %vm1263, %v3788, %v3790
        %v3792 = vrot.slane %v3668, 2
        %v3793 = vrot.slane %v3669, 2
        %v3794 = vsel %vm1263, %v3792, %v3793
        %v3795 = vrot.slane %v3670, 2
        %v3796 = vsel %vm1263, %v3793, %v3795
        %v3797 = vrot.slane %v3671, 2
        %v3798 = vrot.slane %v3672, 2
        %v3799 = vsel %vm1263, %v3797, %v3798
        %v3800 = vrot.slane %v3673, 2
        %v3801 = vsel %vm1263, %v3798, %v3800
        %v3834 = vadd.f32 %v3478, %v3724
        %v3835 = vadd.f32 %v3479, %v3726
        %v3836 = vadd.f32 %v3480, %v3729
        %v3837 = vadd.f32 %v3481, %v3731
        %v3838 = vadd.f32 %v3482, %v3734
        %v3839 = vadd.f32 %v3483, %v3736
        %v3840 = vadd.f32 %v3484, %v3739
        %v3841 = vadd.f32 %v3485, %v3741
        %v3842 = vadd.f32 %v3486, %v3744
        %v3843 = vadd.f32 %v3487, %v3746
        %v3844 = vadd.f32 %v3488, %v3749
        %v3845 = vadd.f32 %v3489, %v3751
        %v3846 = vadd.f32 %v3490, %v3754
        %v3847 = vadd.f32 %v3491, %v3756
        %v3848 = vadd.f32 %v3492, %v3759
        %v3849 = vadd.f32 %v3493, %v3761
        %v3850 = vadd.f32 %v3494, %v3764
        %v3851 = vadd.f32 %v3495, %v3766
        %v3852 = vadd.f32 %v3496, %v3769
        %v3853 = vadd.f32 %v3497, %v3771
        %v3854 = vadd.f32 %v3498, %v3774
        %v3855 = vadd.f32 %v3499, %v3776
        %v3856 = vadd.f32 %v3500, %v3779
        %v3857 = vadd.f32 %v3501, %v3781
        %v3858 = vadd.f32 %v3502, %v3784
        %v3859 = vadd.f32 %v3503, %v3786
        %v3860 = vadd.f32 %v3504, %v3789
        %v3861 = vadd.f32 %v3505, %v3791
        %v3862 = vadd.f32 %v3506, %v3794
        %v3863 = vadd.f32 %v3507, %v3796
        %v3864 = vadd.f32 %v3508, %v3799
        %v3865 = vadd.f32 %v3509, %v3801
        %v3866 = vld [vmem:[%s210] sm:$0x1]
        %v3868 = vperm.slane %v3866, 0
        %v3870 = vadd.f32 %v3834, %v3868
        %v3871 = vadd.f32 %v3835, %v3868
        %v3872 = vadd.f32 %v3836, %v3868
        %v3873 = vadd.f32 %v3837, %v3868
        %v3874 = vadd.f32 %v3838, %v3868
        %v3875 = vadd.f32 %v3839, %v3868
        %v3876 = vadd.f32 %v3840, %v3868
        %v3877 = vadd.f32 %v3841, %v3868
        %v3878 = vadd.f32 %v3842, %v3868
        %v3879 = vadd.f32 %v3843, %v3868
        %v3880 = vadd.f32 %v3844, %v3868
        %v3881 = vadd.f32 %v3845, %v3868
        %v3882 = vadd.f32 %v3846, %v3868
        %v3883 = vadd.f32 %v3847, %v3868
        %v3884 = vadd.f32 %v3848, %v3868
        %v3885 = vadd.f32 %v3849, %v3868
        %v3886 = vadd.f32 %v3850, %v3868
        %v3887 = vadd.f32 %v3851, %v3868
        %v3888 = vadd.f32 %v3852, %v3868
        %v3889 = vadd.f32 %v3853, %v3868
        %v3890 = vadd.f32 %v3854, %v3868
        %v3891 = vadd.f32 %v3855, %v3868
        %v3892 = vadd.f32 %v3856, %v3868
        %v3893 = vadd.f32 %v3857, %v3868
        %v3894 = vadd.f32 %v3858, %v3868
        %v3895 = vadd.f32 %v3859, %v3868
        %v3896 = vadd.f32 %v3860, %v3868
        %v3897 = vadd.f32 %v3861, %v3868
        %v3898 = vadd.f32 %v3862, %v3868
        %v3899 = vadd.f32 %v3863, %v3868
        %v3900 = vadd.f32 %v3864, %v3868
        %v3901 = vadd.f32 %v3865, %v3868
        %vm3902 = vcmp.ge.f32.partialorder %v3870, 0.0
        %vm3903 = vcmp.ge.f32.partialorder %v3871, 0.0
        %vm3904 = vcmp.ge.f32.partialorder %v3872, 0.0
        %vm3905 = vcmp.ge.f32.partialorder %v3873, 0.0
        %vm3906 = vcmp.ge.f32.partialorder %v3874, 0.0
        %vm3907 = vcmp.ge.f32.partialorder %v3875, 0.0
        %vm3908 = vcmp.ge.f32.partialorder %v3876, 0.0
        %vm3909 = vcmp.ge.f32.partialorder %v3877, 0.0
        %vm3910 = vcmp.ge.f32.partialorder %v3878, 0.0
        %vm3911 = vcmp.ge.f32.partialorder %v3879, 0.0
        %vm3912 = vcmp.ge.f32.partialorder %v3880, 0.0
        %vm3913 = vcmp.ge.f32.partialorder %v3881, 0.0
        %vm3914 = vcmp.ge.f32.partialorder %v3882, 0.0
        %vm3915 = vcmp.ge.f32.partialorder %v3883, 0.0
        %vm3916 = vcmp.ge.f32.partialorder %v3884, 0.0
        %vm3917 = vcmp.ge.f32.partialorder %v3885, 0.0
        %vm3918 = vcmp.ge.f32.partialorder %v3886, 0.0
        %vm3919 = vcmp.ge.f32.partialorder %v3887, 0.0
        %vm3920 = vcmp.ge.f32.partialorder %v3888, 0.0
        %vm3921 = vcmp.ge.f32.partialorder %v3889, 0.0
        %vm3922 = vcmp.ge.f32.partialorder %v3890, 0.0
        %vm3923 = vcmp.ge.f32.partialorder %v3891, 0.0
        %vm3924 = vcmp.ge.f32.partialorder %v3892, 0.0
        %vm3925 = vcmp.ge.f32.partialorder %v3893, 0.0
        %vm3926 = vcmp.ge.f32.partialorder %v3894, 0.0
        %vm3927 = vcmp.ge.f32.partialorder %v3895, 0.0
        %vm3928 = vcmp.ge.f32.partialorder %v3896, 0.0
        %vm3929 = vcmp.ge.f32.partialorder %v3897, 0.0
        %vm3930 = vcmp.ge.f32.partialorder %v3898, 0.0
        %vm3931 = vcmp.ge.f32.partialorder %v3899, 0.0
        %vm3932 = vcmp.ge.f32.partialorder %v3900, 0.0
        %vm3933 = vcmp.ge.f32.partialorder %v3901, 0.0
        %v3934 = vmul.f32 %v3870, 0.2
        %v3935 = vmul.f32 %v3871, 0.2
        %v3936 = vmul.f32 %v3872, 0.2
        %v3937 = vmul.f32 %v3873, 0.2
        %v3938 = vmul.f32 %v3874, 0.2
        %v3939 = vmul.f32 %v3875, 0.2
        %v3940 = vmul.f32 %v3876, 0.2
        %v3941 = vmul.f32 %v3877, 0.2
        %v3942 = vmul.f32 %v3878, 0.2
        %v3943 = vmul.f32 %v3879, 0.2
        %v3944 = vmul.f32 %v3880, 0.2
        %v3945 = vmul.f32 %v3881, 0.2
        %v3946 = vmul.f32 %v3882, 0.2
        %v3947 = vmul.f32 %v3883, 0.2
        %v3948 = vmul.f32 %v3884, 0.2
        %v3949 = vmul.f32 %v3885, 0.2
        %v3950 = vmul.f32 %v3886, 0.2
        %v3951 = vmul.f32 %v3887, 0.2
        %v3952 = vmul.f32 %v3888, 0.2
        %v3953 = vmul.f32 %v3889, 0.2
        %v3954 = vmul.f32 %v3890, 0.2
        %v3955 = vmul.f32 %v3891, 0.2
        %v3956 = vmul.f32 %v3892, 0.2
        %v3957 = vmul.f32 %v3893, 0.2
        %v3958 = vmul.f32 %v3894, 0.2
        %v3959 = vmul.f32 %v3895, 0.2
        %v3960 = vmul.f32 %v3896, 0.2
        %v3961 = vmul.f32 %v3897, 0.2
        %v3962 = vmul.f32 %v3898, 0.2
        %v3963 = vmul.f32 %v3899, 0.2
        %v3964 = vmul.f32 %v3900, 0.2
        %v3965 = vmul.f32 %v3901, 0.2
        %v3966 = vsel %vm3902, %v3870, %v3934
        %v3967 = vsel %vm3903, %v3871, %v3935
        %v3968 = vsel %vm3904, %v3872, %v3936
        %v3969 = vsel %vm3905, %v3873, %v3937
        %v3970 = vsel %vm3906, %v3874, %v3938
        %v3971 = vsel %vm3907, %v3875, %v3939
        %v3972 = vsel %vm3908, %v3876, %v3940
        %v3973 = vsel %vm3909, %v3877, %v3941
        %v3974 = vsel %vm3910, %v3878, %v3942
        %v3975 = vsel %vm3911, %v3879, %v3943
        %v3976 = vsel %vm3912, %v3880, %v3944
        %v3977 = vsel %vm3913, %v3881, %v3945
        %v3978 = vsel %vm3914, %v3882, %v3946
        %v3979 = vsel %vm3915, %v3883, %v3947
        %v3980 = vsel %vm3916, %v3884, %v3948
        %v3981 = vsel %vm3917, %v3885, %v3949
        %v3982 = vsel %vm3918, %v3886, %v3950
        %v3983 = vsel %vm3919, %v3887, %v3951
        %v3984 = vsel %vm3920, %v3888, %v3952
        %v3985 = vsel %vm3921, %v3889, %v3953
        %v3986 = vsel %vm3922, %v3890, %v3954
        %v3987 = vsel %vm3923, %v3891, %v3955
        %v3988 = vsel %vm3924, %v3892, %v3956
        %v3989 = vsel %vm3925, %v3893, %v3957
        %v3990 = vsel %vm3926, %v3894, %v3958
        %v3991 = vsel %vm3927, %v3895, %v3959
        %v3992 = vsel %vm3928, %v3896, %v3960
        %v3993 = vsel %vm3929, %v3897, %v3961
        %v3994 = vsel %vm3930, %v3898, %v3962
        %v3995 = vsel %vm3931, %v3899, %v3963
        %v3996 = vsel %vm3932, %v3900, %v3964
        %v3997 = vsel %vm3933, %v3901, %v3965
        %v3998 = vpack.c.bf16 %v3966, %v3966
        %v3999 = vpack.c.bf16 %v3967, %v3967
        %v4000 = vpack.c.bf16 %v3968, %v3968
        %v4001 = vpack.c.bf16 %v3969, %v3969
        %v4002 = vpack.c.bf16 %v3970, %v3970
        %v4003 = vpack.c.bf16 %v3971, %v3971
        %v4004 = vpack.c.bf16 %v3972, %v3972
        %v4005 = vpack.c.bf16 %v3973, %v3973
        %v4006 = vpack.c.bf16 %v3974, %v3974
        %v4007 = vpack.c.bf16 %v3975, %v3975
        %v4008 = vpack.c.bf16 %v3976, %v3976
        %v4009 = vpack.c.bf16 %v3977, %v3977
        %v4010 = vpack.c.bf16 %v3978, %v3978
        %v4011 = vpack.c.bf16 %v3979, %v3979
        %v4012 = vpack.c.bf16 %v3980, %v3980
        %v4013 = vpack.c.bf16 %v3981, %v3981
        %v4014 = vpack.c.bf16 %v3982, %v3982
        %v4015 = vpack.c.bf16 %v3983, %v3983
        %v4016 = vpack.c.bf16 %v3984, %v3984
        %v4017 = vpack.c.bf16 %v3985, %v3985
        %v4018 = vpack.c.bf16 %v3986, %v3986
        %v4019 = vpack.c.bf16 %v3987, %v3987
        %v4020 = vpack.c.bf16 %v3988, %v3988
        %v4021 = vpack.c.bf16 %v3989, %v3989
        %v4022 = vpack.c.bf16 %v3990, %v3990
        %v4023 = vpack.c.bf16 %v3991, %v3991
        %v4024 = vpack.c.bf16 %v3992, %v3992
        %v4025 = vpack.c.bf16 %v3993, %v3993
        %v4026 = vpack.c.bf16 %v3994, %v3994
        %v4027 = vpack.c.bf16 %v3995, %v3995
        %v4028 = vpack.c.bf16 %v3996, %v3996
        %v4029 = vpack.c.bf16 %v3997, %v3997
        %4030 = vst [vmem:[%s199] sm:$0xf] %v3998
        %4031 = vst [vmem:[%s199 + $0x4] sm:$0xf] %v3999
        %4032 = vst [vmem:[%s199 + $0x8] sm:$0xf] %v4000
        %4033 = vst [vmem:[%s199 + $0xc] sm:$0xf] %v4001
        %4034 = vst [vmem:[%s199 + $0x10] sm:$0xf] %v4002
        %4035 = vst [vmem:[%s199 + $0x14] sm:$0xf] %v4003
        %4036 = vst [vmem:[%s199 + $0x18] sm:$0xf] %v4004
        %4037 = vst [vmem:[%s199 + $0x1c] sm:$0xf] %v4005
        %4038 = vst [vmem:[%s199 + $0x20] sm:$0xf] %v4006
        %4039 = vst [vmem:[%s199 + $0x24] sm:$0xf] %v4007
        %4040 = vst [vmem:[%s199 + $0x28] sm:$0xf] %v4008
        %4041 = vst [vmem:[%s199 + $0x2c] sm:$0xf] %v4009
        %4042 = vst [vmem:[%s199 + $0x30] sm:$0xf] %v4010
        %4043 = vst [vmem:[%s199 + $0x34] sm:$0xf] %v4011
        %4044 = vst [vmem:[%s199 + $0x38] sm:$0xf] %v4012
        %4045 = vst [vmem:[%s199 + $0x3c] sm:$0xf] %v4013
        %4046 = vst [vmem:[%s199 + $0x40] sm:$0xf] %v4014
        %4047 = vst [vmem:[%s199 + $0x44] sm:$0xf] %v4015
        %4048 = vst [vmem:[%s199 + $0x48] sm:$0xf] %v4016
        %4049 = vst [vmem:[%s199 + $0x4c] sm:$0xf] %v4017
        %4050 = vst [vmem:[%s199 + $0x50] sm:$0xf] %v4018
        %4051 = vst [vmem:[%s199 + $0x54] sm:$0xf] %v4019
        %4052 = vst [vmem:[%s199 + $0x58] sm:$0xf] %v4020
        %4053 = vst [vmem:[%s199 + $0x5c] sm:$0xf] %v4021
        %4054 = vst [vmem:[%s199 + $0x60] sm:$0xf] %v4022
        %4055 = vst [vmem:[%s199 + $0x64] sm:$0xf] %v4023
        %4056 = vst [vmem:[%s199 + $0x68] sm:$0xf] %v4024
        %4057 = vst [vmem:[%s199 + $0x6c] sm:$0xf] %v4025
        %4058 = vst [vmem:[%s199 + $0x70] sm:$0xf] %v4026
        %4059 = vst [vmem:[%s199 + $0x74] sm:$0xf] %v4027
        %4060 = vst [vmem:[%s199 + $0x78] sm:$0xf] %v4028
        %4061 = vst [vmem:[%s199 + $0x7c] sm:$0xf] %v4029
        %s4062 = sand.u32 %s117, 1
        %s4063 = scalar_lea.sflag [#allocation3], %s4062
        %s4064 = sand.u32 %s117, 1
        %s4065 = smul.addr %s4064, 128
        %s4066 = scalar_lea.vmem [#allocation2], %s4065
        // Predicated region
        $region33: #{tpu_custom_call.1} parent=31 // pred_check
          %p4067 = pneg %p127
        $region34: #{tpu_custom_call.1} parent=31 // pred_check_branch
          %4069 = sbr.rel (%p4067) target = $region36
        $region35: #{tpu_custom_call.1} parent=31 // pred_region
          %4071 = vsyncadd %s4063, 0
          %s4072 = smul.addr %s21, 32
          %s4073 = sadd.s32 %s22, %s4072
          %s4074 = smul.addr %s4073, 4
          %s4075 = scalar_lea.hbm %s3, %s4074
          %s4076 = sshll.u32 %s4066, 4
          %s4077 = int_to_ptr.vmem [resolvable:$true] %s4076
          %s4078 = sshll.u32 %s4075, 4
          %s4079 = int_to_ptr.hbm [resolvable:$true] %s4078
          %4084 = dma.vmem_to_hbm [thread:$0]  %s4077, 2048, %s4079, %s4063, 64, 64, 4
        $region36: #{tpu_custom_call.1} parent=31 // pred_fallthru
          _
      $region32: #{tpu_custom_call.1} parent=5 // pred_fallthru
        _
      %p4085 = scmp.le.s32.totalorder 2, %s12
      // Predicated region
      $region37: #{tpu_custom_call.1} parent=5 // pred_check
        %p4086 = pneg %p4085
      $region38: #{tpu_custom_call.1} parent=5 // pred_check_branch
        %4088 = sbr.rel (%p4086) target = $region40
      $region39: #{tpu_custom_call.1} parent=5 // pred_region
        %s4089 = ssub.s32 %s12, 2
        // Predicated region
        $region41: #{tpu_custom_call.1} parent=39 // pred_check
          %p4090 = pneg %p133
        $region42: #{tpu_custom_call.1} parent=39 // pred_check_branch
          %4092 = sbr.rel (%p4090) target = $region44
        $region43: #{tpu_custom_call.1} parent=39 // pred_region
          %s4093 = sand.u32 %s118, 1
          %s4094 = scalar_lea.sflag [#allocation3], %s4093
          %s4095 = sand.u32 %s118, 1
          %s4096 = smul.addr %s4095, 128
          %s4097 = scalar_lea.vmem [#allocation2], %s4096
          %4099 = dma.done %s4094, 2048
        $region44: #{tpu_custom_call.1} parent=39 // pred_fallthru
          _
      $region40: #{tpu_custom_call.1} parent=5 // pred_fallthru
        _
    $region6: #{tpu_custom_call.1} parent=1 // loop_footer
      %s16 = sadd.s32 1, %s12
    $region7: #{tpu_custom_call.1} parent=1 // loop_footer_branch
      %11 = sbr.rel target = $region3
    $region8: #{tpu_custom_call.1} parent=1 // loop_exit
      _
    %4100 = vsyncpa [#allocation3], 1
    %s4101 = scalar_lea.sflag [#allocation3], 1
    %4102 = vsyncpa %s4101, 1

</llo_original>
